<compile_context>
chip_gen: v5e
topology: v5e:2x2
jax: 0.10.0
libtpu: 0.0.40
codegen_flags: <defaults>
</compile_context>

<pallas_src>
import functools

import jax
import jax.numpy as jnp
from jax.experimental import pallas as pl
from jax.experimental.pallas import tpu as pltpu

HEAD_LANES = 128  # head output channels padded to a full 128-lane store


# ------------------------------ fused kernel ------------------------------

def _fused_detector_kernel(pts_ref, wr_ref, br_ref,
                           w1_ref, b1_ref, w2_ref, b2_ref,
                           wna_ref, wnb_ref, bn_ref,
                           wh_ref, bh_ref,
                           out_ref,
                           pad1_ref, pad2_ref,
                           *, H, W):
    HW = H * W

    # ---------------- reader: Linear(point_dim -> C0) + ReLU ----------------
    # K = point_dim (4) is far too small for the MXU; do it as point_dim
    # broadcast multiply-adds on the VPU, with the bias as the accumulator
    # init (single hoisted broadcast).
    pts = pts_ref[0]                                   # (HW, point_dim)
    wr = wr_ref[...]                                   # (point_dim, C0)
    acc_r = jnp.broadcast_to(br_ref[...], (HW, wr.shape[1])).astype(jnp.float32)
    for k in range(pts.shape[1]):
        acc_r = acc_r + pts[:, k:k + 1] * wr[k:k + 1, :]
    feat = jnp.maximum(acc_r, 0.0)                     # (HW, C0)

    def conv3x3_relu(x_hw_c, pad_ref, w_ref, b_ref):
        # 'same' 3x3 conv, stride 1, entirely in VMEM:
        #   zero the scratch, drop the feature map at a sublane-aligned column
        #   offset (8), load the padded map and slice the nine shifted
        #   windows; each tap is one MXU matmul accumulated in f32 on top of
        #   the broadcast bias.
        C = x_hw_c.shape[-1]
        Co = w_ref.shape[-1]
        pad_ref[...] = jnp.zeros_like(pad_ref)
        pad_ref[1:1 + H, 8:8 + W, :] = x_hw_c.reshape(H, W, C)
        padded = pad_ref[...]                          # (H+2, W+16, C)
        acc = jnp.broadcast_to(b_ref[...], (HW, Co)).astype(jnp.float32)
        for dh in range(3):
            for dw in range(3):
                tap = padded[dh:dh + H, 7 + dw:7 + dw + W, :].reshape(HW, C)
                acc = acc + jnp.dot(tap, w_ref[dh * 3 + dw],
                                    preferred_element_type=jnp.float32)
        return jnp.maximum(acc, 0.0)

    # ---------------- backbone: two 3x3 convs (multi-scale) -----------------
    f1 = conv3x3_relu(feat, pad1_ref, w1_ref, b1_ref)   # (HW, C1)
    f2 = conv3x3_relu(f1, pad2_ref, w2_ref, b2_ref)     # (HW, C1)

    # ---------------- neck: 1x1 conv over concat([f1, f2]) ------------------
    # concat(f1, f2) @ Wn  ==  f1 @ Wn[:C1] + f2 @ Wn[C1:]  (no concat needed)
    xn = jnp.broadcast_to(bn_ref[...], (HW, wna_ref.shape[1])).astype(jnp.float32)
    xn = xn + jnp.dot(f1, wna_ref[...], preferred_element_type=jnp.float32)
    xn = xn + jnp.dot(f2, wnb_ref[...], preferred_element_type=jnp.float32)
    xn = jnp.maximum(xn, 0.0)                           # (HW, Cn)

    # ------------- head: merged (hm | reg | zero-pad) 1x1 conv --------------
    # Output channels zero-padded to 128 -> single lane-dense store (no ReLU).
    y = jnp.dot(xn, wh_ref[...], preferred_element_type=jnp.float32)
    out_ref[0] = y + bh_ref[...]                        # (HW, 128)


def fused_detector_forward(points, params, *, H, W):
    """points: (B, H*W, point_dim). Returns (B, H*W, 128) head slab."""
    B, N, PD = points.shape
    assert N == H * W
    (wr, br, w1, b1, w2, b2, wna, wnb, bn, wh, bh) = params
    C0 = wr.shape[1]        # reader channels
    C1 = w1.shape[2]        # backbone channels
    Wp = W + 16             # padded width (interior at sublane-aligned col 8)

    kernel = functools.partial(_fused_detector_kernel, H=H, W=W)
    return pl.pallas_call(
        kernel,
        out_shape=jax.ShapeDtypeStruct((B, N, HEAD_LANES), jnp.float32),
        grid=(B,),
        in_specs=[
            pl.BlockSpec((1, N, PD), lambda b: (b, 0, 0)),
            pl.BlockSpec(wr.shape, lambda b: (0, 0)),
            pl.BlockSpec(br.shape, lambda b: (0, 0)),
            pl.BlockSpec(w1.shape, lambda b: (0, 0, 0)),
            pl.BlockSpec(b1.shape, lambda b: (0, 0)),
            pl.BlockSpec(w2.shape, lambda b: (0, 0, 0)),
            pl.BlockSpec(b2.shape, lambda b: (0, 0)),
            pl.BlockSpec(wna.shape, lambda b: (0, 0)),
            pl.BlockSpec(wnb.shape, lambda b: (0, 0)),
            pl.BlockSpec(bn.shape, lambda b: (0, 0)),
            pl.BlockSpec(wh.shape, lambda b: (0, 0)),
            pl.BlockSpec(bh.shape, lambda b: (0, 0)),
        ],
        out_specs=pl.BlockSpec((1, N, HEAD_LANES), lambda b: (b, 0, 0)),
        scratch_shapes=[
            pltpu.VMEM((H + 2, Wp, C0), jnp.float32),   # padded reader feats
            pltpu.VMEM((H + 2, Wp, C1), jnp.float32),   # padded conv1 feats
        ],
        compiler_params=pltpu.CompilerParams(
            dimension_semantics=("parallel",)),
    )(points, wr, br, w1, b1, w2, b2, wna, wnb, bn, wh, bh)


# --------------------------- Detector definition ---------------------------

class SingleStageDetectorPallas:
    """Mirrors SingleStageDetector.extract_feat / _forward semantics, with the
    whole reader -> backbone -> neck -> head pipeline fused into one kernel."""

    def __init__(self, key, *, point_dim=4, reader_c=16, backbone_c=32,
                 neck_c=32, num_classes=3, box_dim=8, H=16, W=16):
        self.H, self.W = H, W
        self.num_classes, self.box_dim = num_classes, box_dim
        ks = jax.random.split(key, 12)

        def w_init(k, shape):
            return 0.1 * jax.random.normal(k, shape, jnp.float32)

        # reader: per-point linear
        self.w_r = w_init(ks[0], (point_dim, reader_c))
        self.b_r = w_init(ks[1], (1, reader_c))
        # backbone: two 3x3 convs (HWIO)
        self.w_b1 = w_init(ks[2], (3, 3, reader_c, backbone_c))
        self.b_b1 = w_init(ks[3], (1, backbone_c))
        self.w_b2 = w_init(ks[4], (3, 3, backbone_c, backbone_c))
        self.b_b2 = w_init(ks[5], (1, backbone_c))
        # neck: 1x1 conv over concatenated multi-scale features
        self.w_n = w_init(ks[6], (1, 1, 2 * backbone_c, neck_c))
        self.b_n = w_init(ks[7], (1, neck_c))
        # head: 1x1 conv heads (heatmap logits + box regression)
        self.w_hm = w_init(ks[8], (1, 1, neck_c, num_classes))
        self.b_hm = w_init(ks[9], (1, num_classes))
        self.w_reg = w_init(ks[10], (1, 1, neck_c, box_dim))
        self.b_reg = w_init(ks[11], (1, box_dim))

        # ---- kernel-layout parameters (precomputed once) ----
        # 3x3 conv weights as (9, Cin, Cout) tap matrices.
        self._w1 = self.w_b1.reshape(9, reader_c, backbone_c)
        self._w2 = self.w_b2.reshape(9, backbone_c, backbone_c)
        # neck 1x1 conv split into the two concat halves.
        self._wna = self.w_n[0, 0, :backbone_c, :]
        self._wnb = self.w_n[0, 0, backbone_c:, :]
        # head: hm and reg merged + zero-padded to 128 output channels so the
        # kernel's only HBM store is lane-dense.
        co = num_classes + box_dim
        wh = jnp.zeros((neck_c, HEAD_LANES), jnp.float32)
        wh = wh.at[:, :num_classes].set(self.w_hm[0, 0])
        wh = wh.at[:, num_classes:co].set(self.w_reg[0, 0])
        bh = jnp.zeros((1, HEAD_LANES), jnp.float32)
        bh = bh.at[:, :num_classes].set(self.b_hm)
        bh = bh.at[:, num_classes:co].set(self.b_reg)
        self._wh, self._bh = wh, bh

    def _params(self):
        return (self.w_r, self.b_r, self._w1, self.b_b1, self._w2, self.b_b2,
                self._wna, self._wnb, self.b_n, self._wh, self._bh)

    # --- detector plumbing (mirrors the reference module) ---
    def _forward(self, example):
        points = example["points"]                     # (B, H*W, point_dim)
        B = points.shape[0]
        y = fused_detector_forward(points, self._params(), H=self.H, W=self.W)
        y = y.reshape(B, self.H, self.W, HEAD_LANES)   # free layout plumbing
        hm = y[..., :self.num_classes]
        reg = y[..., self.num_classes:self.num_classes + self.box_dim]
        return {"hm": hm, "reg": reg}

    def forward(self, example):
        # TODO(synk): training_step (head.loss) and validation_step
        # (head.predict + post_processing / NMS / .cpu()) are not translatable
        # without a concrete head definition; return raw predictions instead.
        return self._forward(example)


# ------------------------- pure-JAX reference check -------------------------

def _reference_forward(points, det):
    hp = jax.lax.Precision.HIGHEST
    B = points.shape[0]
    H, W = det.H, det.W

    def conv_same(x, w, b, relu):
        kh, kw, _, co = w.shape
        ph, pw = kh // 2, kw // 2
        xp = jnp.pad(x, ((0, 0), (ph, ph), (pw, pw), (0, 0)))
        acc = jnp.zeros(x.shape[:3] + (co,), jnp.float32)
        for dh in range(kh):
            for dw in range(kw):
                patch = xp[:, dh:dh + x.shape[1], dw:dw + x.shape[2], :]
                acc = acc + jnp.einsum("bhwc,co->bhwo", patch, w[dh, dw],
                                       precision=hp)
        acc = acc + b.reshape(1, 1, 1, co)
        return jnp.maximum(acc, 0.0) if relu else acc

    feat = jnp.maximum(
        jnp.einsum("bnc,co->bno", points, det.w_r, precision=hp) + det.b_r,
        0.0).reshape(B, H, W, -1)
    f1 = conv_same(feat, det.w_b1, det.b_b1, True)
    f2 = conv_same(f1, det.w_b2, det.b_b2, True)
    xn = conv_same(jnp.concatenate([f1, f2], axis=-1), det.w_n, det.b_n, True)
    hm = conv_same(xn, det.w_hm, det.b_hm, False)
    reg = conv_same(xn, det.w_reg, det.b_reg, False)
    return {"hm": hm, "reg": reg}


# ---------------------------------- main -----------------------------------

if __name__ == "__main__":
    key = jax.random.PRNGKey(0)
    k_pts, k_model = jax.random.split(key)

    B, H, W, POINT_DIM = 2, 16, 16, 4
    points = jax.random.normal(k_pts, (B, H * W, POINT_DIM), jnp.float32)

    det = SingleStageDetectorPallas(k_model, point_dim=POINT_DIM, H=H, W=W)
    preds = det.forward({"points": points})
    jax.tree_util.tree_map(jax.block_until_ready, preds)

    assert preds["hm"].shape == (B, H, W, 3)
    assert preds["reg"].shape == (B, H, W, 8)

    ref = _reference_forward(points, det)
    assert jnp.allclose(preds["hm"], ref["hm"], rtol=5e-2, atol=5e-2)
    assert jnp.allclose(preds["reg"], ref["reg"], rtol=5e-2, atol=5e-2)

    print("KERNEL_OK")
</pallas_src>

<mosaic_0001>
module attributes {stable_mosaic.version = 11 : i64} {
  func.func @_fused_detector_kernel(%arg0: i32, %arg1: memref<1x256x4xf32, #tpu.memory_space<vmem>>, %arg2: memref<4x16xf32, #tpu.memory_space<vmem>>, %arg3: memref<1x16xf32, #tpu.memory_space<vmem>>, %arg4: memref<9x16x32xf32, #tpu.memory_space<vmem>>, %arg5: memref<1x32xf32, #tpu.memory_space<vmem>>, %arg6: memref<9x32x32xf32, #tpu.memory_space<vmem>>, %arg7: memref<1x32xf32, #tpu.memory_space<vmem>>, %arg8: memref<32x32xf32, #tpu.memory_space<vmem>>, %arg9: memref<32x32xf32, #tpu.memory_space<vmem>>, %arg10: memref<1x32xf32, #tpu.memory_space<vmem>>, %arg11: memref<32x128xf32, #tpu.memory_space<vmem>>, %arg12: memref<1x128xf32, #tpu.memory_space<vmem>>, %arg13: memref<1x256x128xf32, #tpu.memory_space<vmem>>, %arg14: memref<18x32x16xf32, #tpu.memory_space<vmem>>, %arg15: memref<18x32x32xf32, #tpu.memory_space<vmem>>) attributes {dimension_semantics = [#tpu.dimension_semantics<parallel>], iteration_bounds = array<i64: 2>, scalar_prefetch = 0 : i64, scratch_operands = 2 : i64, tpu.core_type = #tpu.core_type<tc>, window_params = [{transform_indices = @transform_0, window_bounds = array<i64: 1, 256, 4>}, {pipeline_mode = #tpu.pipeline_mode<synchronous>, transform_indices = @transform_1, window_bounds = array<i64: 4, 16>}, {pipeline_mode = #tpu.pipeline_mode<synchronous>, transform_indices = @transform_2, window_bounds = array<i64: 1, 16>}, {pipeline_mode = #tpu.pipeline_mode<synchronous>, transform_indices = @transform_3, window_bounds = array<i64: 9, 16, 32>}, {pipeline_mode = #tpu.pipeline_mode<synchronous>, transform_indices = @transform_4, window_bounds = array<i64: 1, 32>}, {pipeline_mode = #tpu.pipeline_mode<synchronous>, transform_indices = @transform_5, window_bounds = array<i64: 9, 32, 32>}, {pipeline_mode = #tpu.pipeline_mode<synchronous>, transform_indices = @transform_6, window_bounds = array<i64: 1, 32>}, {pipeline_mode = #tpu.pipeline_mode<synchronous>, transform_indices = @transform_7, window_bounds = array<i64: 32, 32>}, {pipeline_mode = #tpu.pipeline_mode<synchronous>, transform_indices = @transform_8, window_bounds = array<i64: 32, 32>}, {pipeline_mode = #tpu.pipeline_mode<synchronous>, transform_indices = @transform_9, window_bounds = array<i64: 1, 32>}, {pipeline_mode = #tpu.pipeline_mode<synchronous>, transform_indices = @transform_10, window_bounds = array<i64: 32, 128>}, {pipeline_mode = #tpu.pipeline_mode<synchronous>, transform_indices = @transform_11, window_bounds = array<i64: 1, 128>}, {transform_indices = @transform_12, window_bounds = array<i64: 1, 256, 128>}]} {
    %c0 = arith.constant 0 : index
    %c0_0 = arith.constant 0 : index
    %c0_1 = arith.constant 0 : index
    %0 = vector.load %arg1[%c0, %c0_0, %c0_1] : memref<1x256x4xf32, #tpu.memory_space<vmem>>, vector<1x256x4xf32>
    %1 = vector.shape_cast %0 : vector<1x256x4xf32> to vector<256x4xf32>
    %c0_2 = arith.constant 0 : index
    %c0_3 = arith.constant 0 : index
    %2 = vector.load %arg2[%c0_2, %c0_3] : memref<4x16xf32, #tpu.memory_space<vmem>>, vector<4x16xf32>
    %c0_4 = arith.constant 0 : index
    %c0_5 = arith.constant 0 : index
    %3 = vector.load %arg3[%c0_4, %c0_5] : memref<1x16xf32, #tpu.memory_space<vmem>>, vector<1x16xf32>
    %4 = vector.shape_cast %3 : vector<1x16xf32> to vector<1x16xf32>
    %5 = vector.broadcast %4 : vector<1x16xf32> to vector<256x16xf32>
    %6 = vector.extract_strided_slice %1 {offsets = [0, 0], sizes = [256, 1], strides = [1, 1]} : vector<256x4xf32> to vector<256x1xf32>
    %7 = vector.extract_strided_slice %2 {offsets = [0, 0], sizes = [1, 16], strides = [1, 1]} : vector<4x16xf32> to vector<1x16xf32>
    %8 = vector.broadcast %6 : vector<256x1xf32> to vector<256x16xf32>
    %9 = vector.broadcast %7 : vector<1x16xf32> to vector<256x16xf32>
    %10 = arith.mulf %8, %9 : vector<256x16xf32>
    %11 = arith.addf %5, %10 : vector<256x16xf32>
    %12 = vector.extract_strided_slice %1 {offsets = [0, 1], sizes = [256, 1], strides = [1, 1]} : vector<256x4xf32> to vector<256x1xf32>
    %13 = vector.extract_strided_slice %2 {offsets = [1, 0], sizes = [1, 16], strides = [1, 1]} : vector<4x16xf32> to vector<1x16xf32>
    %14 = vector.broadcast %12 : vector<256x1xf32> to vector<256x16xf32>
    %15 = vector.broadcast %13 : vector<1x16xf32> to vector<256x16xf32>
    %16 = arith.mulf %14, %15 : vector<256x16xf32>
    %17 = arith.addf %11, %16 : vector<256x16xf32>
    %18 = vector.extract_strided_slice %1 {offsets = [0, 2], sizes = [256, 1], strides = [1, 1]} : vector<256x4xf32> to vector<256x1xf32>
    %19 = vector.extract_strided_slice %2 {offsets = [2, 0], sizes = [1, 16], strides = [1, 1]} : vector<4x16xf32> to vector<1x16xf32>
    %20 = vector.broadcast %18 : vector<256x1xf32> to vector<256x16xf32>
    %21 = vector.broadcast %19 : vector<1x16xf32> to vector<256x16xf32>
    %22 = arith.mulf %20, %21 : vector<256x16xf32>
    %23 = arith.addf %17, %22 : vector<256x16xf32>
    %24 = vector.extract_strided_slice %1 {offsets = [0, 3], sizes = [256, 1], strides = [1, 1]} : vector<256x4xf32> to vector<256x1xf32>
    %25 = vector.extract_strided_slice %2 {offsets = [3, 0], sizes = [1, 16], strides = [1, 1]} : vector<4x16xf32> to vector<1x16xf32>
    %26 = vector.broadcast %24 : vector<256x1xf32> to vector<256x16xf32>
    %27 = vector.broadcast %25 : vector<1x16xf32> to vector<256x16xf32>
    %28 = arith.mulf %26, %27 : vector<256x16xf32>
    %29 = arith.addf %23, %28 : vector<256x16xf32>
    %cst = arith.constant 0.000000e+00 : f32
    %30 = vector.broadcast %cst : f32 to vector<256x16xf32>
    %31 = arith.maximumf %29, %30 : vector<256x16xf32>
    %cst_6 = arith.constant 0.000000e+00 : f32
    %32 = vector.broadcast %cst_6 : f32 to vector<18x32x16xf32>
    %c0_7 = arith.constant 0 : index
    %c0_8 = arith.constant 0 : index
    %c0_9 = arith.constant 0 : index
    %33 = vector.load %arg14[%c0_7, %c0_8, %c0_9] : memref<18x32x16xf32, #tpu.memory_space<vmem>>, vector<18x32x16xf32>
    tpu.vector_store %arg14[%c0_7, %c0_8, %c0_9], %32 {strides = array<i32>} : memref<18x32x16xf32, #tpu.memory_space<vmem>>, vector<18x32x16xf32>,
    %34 = vector.shape_cast %31 : vector<256x16xf32> to vector<16x16x16xf32>
    %c1 = arith.constant 1 : index
    %c8 = arith.constant 8 : index
    %c0_10 = arith.constant 0 : index
    %35 = vector.load %arg14[%c1, %c8, %c0_10] : memref<18x32x16xf32, #tpu.memory_space<vmem>>, vector<16x16x16xf32>
    tpu.vector_store %arg14[%c1, %c8, %c0_10], %34 {strides = array<i32>} : memref<18x32x16xf32, #tpu.memory_space<vmem>>, vector<16x16x16xf32>,
    %c0_11 = arith.constant 0 : index
    %c0_12 = arith.constant 0 : index
    %c0_13 = arith.constant 0 : index
    %36 = vector.load %arg14[%c0_11, %c0_12, %c0_13] : memref<18x32x16xf32, #tpu.memory_space<vmem>>, vector<18x32x16xf32>
    %c0_14 = arith.constant 0 : index
    %c0_15 = arith.constant 0 : index
    %37 = vector.load %arg5[%c0_14, %c0_15] : memref<1x32xf32, #tpu.memory_space<vmem>>, vector<1x32xf32>
    %38 = vector.shape_cast %37 : vector<1x32xf32> to vector<1x32xf32>
    %39 = vector.broadcast %38 : vector<1x32xf32> to vector<256x32xf32>
    %40 = vector.extract_strided_slice %36 {offsets = [0, 7, 0], sizes = [16, 16, 16], strides = [1, 1, 1]} : vector<18x32x16xf32> to vector<16x16x16xf32>
    %41 = vector.shape_cast %40 : vector<16x16x16xf32> to vector<256x16xf32>
    %c0_16 = arith.constant 0 : index
    %c0_17 = arith.constant 0 : index
    %c0_18 = arith.constant 0 : index
    %42 = vector.load %arg4[%c0_16, %c0_17, %c0_18] : memref<9x16x32xf32, #tpu.memory_space<vmem>>, vector<1x16x32xf32>
    %43 = vector.shape_cast %42 : vector<1x16x32xf32> to vector<16x32xf32>
    %cst_19 = arith.constant dense<0.000000e+00> : vector<256x32xf32>
    %44 = tpu.matmul %41, %43, %cst_19 {dimension_numbers = #tpu.dot_dimension_numbers<[1], [0], [0], [1], [0, 0, 1, 1], [], []>} : vector<256x16xf32>, vector<16x32xf32>, vector<256x32xf32> -> vector<256x32xf32>
    %45 = arith.addf %39, %44 : vector<256x32xf32>
    %46 = vector.extract_strided_slice %36 {offsets = [0, 8, 0], sizes = [16, 16, 16], strides = [1, 1, 1]} : vector<18x32x16xf32> to vector<16x16x16xf32>
    %47 = vector.shape_cast %46 : vector<16x16x16xf32> to vector<256x16xf32>
    %c1_20 = arith.constant 1 : index
    %c0_21 = arith.constant 0 : index
    %c0_22 = arith.constant 0 : index
    %48 = vector.load %arg4[%c1_20, %c0_21, %c0_22] : memref<9x16x32xf32, #tpu.memory_space<vmem>>, vector<1x16x32xf32>
    %49 = vector.shape_cast %48 : vector<1x16x32xf32> to vector<16x32xf32>
    %cst_23 = arith.constant dense<0.000000e+00> : vector<256x32xf32>
    %50 = tpu.matmul %47, %49, %cst_23 {dimension_numbers = #tpu.dot_dimension_numbers<[1], [0], [0], [1], [0, 0, 1, 1], [], []>} : vector<256x16xf32>, vector<16x32xf32>, vector<256x32xf32> -> vector<256x32xf32>
    %51 = arith.addf %45, %50 : vector<256x32xf32>
    %52 = vector.extract_strided_slice %36 {offsets = [0, 9, 0], sizes = [16, 16, 16], strides = [1, 1, 1]} : vector<18x32x16xf32> to vector<16x16x16xf32>
    %53 = vector.shape_cast %52 : vector<16x16x16xf32> to vector<256x16xf32>
    %c2 = arith.constant 2 : index
    %c0_24 = arith.constant 0 : index
    %c0_25 = arith.constant 0 : index
    %54 = vector.load %arg4[%c2, %c0_24, %c0_25] : memref<9x16x32xf32, #tpu.memory_space<vmem>>, vector<1x16x32xf32>
    %55 = vector.shape_cast %54 : vector<1x16x32xf32> to vector<16x32xf32>
    %cst_26 = arith.constant dense<0.000000e+00> : vector<256x32xf32>
    %56 = tpu.matmul %53, %55, %cst_26 {dimension_numbers = #tpu.dot_dimension_numbers<[1], [0], [0], [1], [0, 0, 1, 1], [], []>} : vector<256x16xf32>, vector<16x32xf32>, vector<256x32xf32> -> vector<256x32xf32>
    %57 = arith.addf %51, %56 : vector<256x32xf32>
    %58 = vector.extract_strided_slice %36 {offsets = [1, 7, 0], sizes = [16, 16, 16], strides = [1, 1, 1]} : vector<18x32x16xf32> to vector<16x16x16xf32>
    %59 = vector.shape_cast %58 : vector<16x16x16xf32> to vector<256x16xf32>
    %c3 = arith.constant 3 : index
    %c0_27 = arith.constant 0 : index
    %c0_28 = arith.constant 0 : index
    %60 = vector.load %arg4[%c3, %c0_27, %c0_28] : memref<9x16x32xf32, #tpu.memory_space<vmem>>, vector<1x16x32xf32>
    %61 = vector.shape_cast %60 : vector<1x16x32xf32> to vector<16x32xf32>
    %cst_29 = arith.constant dense<0.000000e+00> : vector<256x32xf32>
    %62 = tpu.matmul %59, %61, %cst_29 {dimension_numbers = #tpu.dot_dimension_numbers<[1], [0], [0], [1], [0, 0, 1, 1], [], []>} : vector<256x16xf32>, vector<16x32xf32>, vector<256x32xf32> -> vector<256x32xf32>
    %63 = arith.addf %57, %62 : vector<256x32xf32>
    %64 = vector.extract_strided_slice %36 {offsets = [1, 8, 0], sizes = [16, 16, 16], strides = [1, 1, 1]} : vector<18x32x16xf32> to vector<16x16x16xf32>
    %65 = vector.shape_cast %64 : vector<16x16x16xf32> to vector<256x16xf32>
    %c4 = arith.constant 4 : index
    %c0_30 = arith.constant 0 : index
    %c0_31 = arith.constant 0 : index
    %66 = vector.load %arg4[%c4, %c0_30, %c0_31] : memref<9x16x32xf32, #tpu.memory_space<vmem>>, vector<1x16x32xf32>
    %67 = vector.shape_cast %66 : vector<1x16x32xf32> to vector<16x32xf32>
    %cst_32 = arith.constant dense<0.000000e+00> : vector<256x32xf32>
    %68 = tpu.matmul %65, %67, %cst_32 {dimension_numbers = #tpu.dot_dimension_numbers<[1], [0], [0], [1], [0, 0, 1, 1], [], []>} : vector<256x16xf32>, vector<16x32xf32>, vector<256x32xf32> -> vector<256x32xf32>
    %69 = arith.addf %63, %68 : vector<256x32xf32>
    %70 = vector.extract_strided_slice %36 {offsets = [1, 9, 0], sizes = [16, 16, 16], strides = [1, 1, 1]} : vector<18x32x16xf32> to vector<16x16x16xf32>
    %71 = vector.shape_cast %70 : vector<16x16x16xf32> to vector<256x16xf32>
    %c5 = arith.constant 5 : index
    %c0_33 = arith.constant 0 : index
    %c0_34 = arith.constant 0 : index
    %72 = vector.load %arg4[%c5, %c0_33, %c0_34] : memref<9x16x32xf32, #tpu.memory_space<vmem>>, vector<1x16x32xf32>
    %73 = vector.shape_cast %72 : vector<1x16x32xf32> to vector<16x32xf32>
    %cst_35 = arith.constant dense<0.000000e+00> : vector<256x32xf32>
    %74 = tpu.matmul %71, %73, %cst_35 {dimension_numbers = #tpu.dot_dimension_numbers<[1], [0], [0], [1], [0, 0, 1, 1], [], []>} : vector<256x16xf32>, vector<16x32xf32>, vector<256x32xf32> -> vector<256x32xf32>
    %75 = arith.addf %69, %74 : vector<256x32xf32>
    %76 = vector.extract_strided_slice %36 {offsets = [2, 7, 0], sizes = [16, 16, 16], strides = [1, 1, 1]} : vector<18x32x16xf32> to vector<16x16x16xf32>
    %77 = vector.shape_cast %76 : vector<16x16x16xf32> to vector<256x16xf32>
    %c6 = arith.constant 6 : index
    %c0_36 = arith.constant 0 : index
    %c0_37 = arith.constant 0 : index
    %78 = vector.load %arg4[%c6, %c0_36, %c0_37] : memref<9x16x32xf32, #tpu.memory_space<vmem>>, vector<1x16x32xf32>
    %79 = vector.shape_cast %78 : vector<1x16x32xf32> to vector<16x32xf32>
    %cst_38 = arith.constant dense<0.000000e+00> : vector<256x32xf32>
    %80 = tpu.matmul %77, %79, %cst_38 {dimension_numbers = #tpu.dot_dimension_numbers<[1], [0], [0], [1], [0, 0, 1, 1], [], []>} : vector<256x16xf32>, vector<16x32xf32>, vector<256x32xf32> -> vector<256x32xf32>
    %81 = arith.addf %75, %80 : vector<256x32xf32>
    %82 = vector.extract_strided_slice %36 {offsets = [2, 8, 0], sizes = [16, 16, 16], strides = [1, 1, 1]} : vector<18x32x16xf32> to vector<16x16x16xf32>
    %83 = vector.shape_cast %82 : vector<16x16x16xf32> to vector<256x16xf32>
    %c7 = arith.constant 7 : index
    %c0_39 = arith.constant 0 : index
    %c0_40 = arith.constant 0 : index
    %84 = vector.load %arg4[%c7, %c0_39, %c0_40] : memref<9x16x32xf32, #tpu.memory_space<vmem>>, vector<1x16x32xf32>
    %85 = vector.shape_cast %84 : vector<1x16x32xf32> to vector<16x32xf32>
    %cst_41 = arith.constant dense<0.000000e+00> : vector<256x32xf32>
    %86 = tpu.matmul %83, %85, %cst_41 {dimension_numbers = #tpu.dot_dimension_numbers<[1], [0], [0], [1], [0, 0, 1, 1], [], []>} : vector<256x16xf32>, vector<16x32xf32>, vector<256x32xf32> -> vector<256x32xf32>
    %87 = arith.addf %81, %86 : vector<256x32xf32>
    %88 = vector.extract_strided_slice %36 {offsets = [2, 9, 0], sizes = [16, 16, 16], strides = [1, 1, 1]} : vector<18x32x16xf32> to vector<16x16x16xf32>
    %89 = vector.shape_cast %88 : vector<16x16x16xf32> to vector<256x16xf32>
    %c8_42 = arith.constant 8 : index
    %c0_43 = arith.constant 0 : index
    %c0_44 = arith.constant 0 : index
    %90 = vector.load %arg4[%c8_42, %c0_43, %c0_44] : memref<9x16x32xf32, #tpu.memory_space<vmem>>, vector<1x16x32xf32>
    %91 = vector.shape_cast %90 : vector<1x16x32xf32> to vector<16x32xf32>
    %cst_45 = arith.constant dense<0.000000e+00> : vector<256x32xf32>
    %92 = tpu.matmul %89, %91, %cst_45 {dimension_numbers = #tpu.dot_dimension_numbers<[1], [0], [0], [1], [0, 0, 1, 1], [], []>} : vector<256x16xf32>, vector<16x32xf32>, vector<256x32xf32> -> vector<256x32xf32>
    %93 = arith.addf %87, %92 : vector<256x32xf32>
    %cst_46 = arith.constant 0.000000e+00 : f32
    %94 = vector.broadcast %cst_46 : f32 to vector<256x32xf32>
    %95 = arith.maximumf %93, %94 : vector<256x32xf32>
    %cst_47 = arith.constant 0.000000e+00 : f32
    %96 = vector.broadcast %cst_47 : f32 to vector<18x32x32xf32>
    %c0_48 = arith.constant 0 : index
    %c0_49 = arith.constant 0 : index
    %c0_50 = arith.constant 0 : index
    %97 = vector.load %arg15[%c0_48, %c0_49, %c0_50] : memref<18x32x32xf32, #tpu.memory_space<vmem>>, vector<18x32x32xf32>
    tpu.vector_store %arg15[%c0_48, %c0_49, %c0_50], %96 {strides = array<i32>} : memref<18x32x32xf32, #tpu.memory_space<vmem>>, vector<18x32x32xf32>,
    %98 = vector.shape_cast %95 : vector<256x32xf32> to vector<16x16x32xf32>
    %c1_51 = arith.constant 1 : index
    %c8_52 = arith.constant 8 : index
    %c0_53 = arith.constant 0 : index
    %99 = vector.load %arg15[%c1_51, %c8_52, %c0_53] : memref<18x32x32xf32, #tpu.memory_space<vmem>>, vector<16x16x32xf32>
    tpu.vector_store %arg15[%c1_51, %c8_52, %c0_53], %98 {strides = array<i32>} : memref<18x32x32xf32, #tpu.memory_space<vmem>>, vector<16x16x32xf32>,
    %c0_54 = arith.constant 0 : index
    %c0_55 = arith.constant 0 : index
    %c0_56 = arith.constant 0 : index
    %100 = vector.load %arg15[%c0_54, %c0_55, %c0_56] : memref<18x32x32xf32, #tpu.memory_space<vmem>>, vector<18x32x32xf32>
    %c0_57 = arith.constant 0 : index
    %c0_58 = arith.constant 0 : index
    %101 = vector.load %arg7[%c0_57, %c0_58] : memref<1x32xf32, #tpu.memory_space<vmem>>, vector<1x32xf32>
    %102 = vector.shape_cast %101 : vector<1x32xf32> to vector<1x32xf32>
    %103 = vector.broadcast %102 : vector<1x32xf32> to vector<256x32xf32>
    %104 = vector.extract_strided_slice %100 {offsets = [0, 7, 0], sizes = [16, 16, 32], strides = [1, 1, 1]} : vector<18x32x32xf32> to vector<16x16x32xf32>
    %105 = vector.shape_cast %104 : vector<16x16x32xf32> to vector<256x32xf32>
    %c0_59 = arith.constant 0 : index
    %c0_60 = arith.constant 0 : index
    %c0_61 = arith.constant 0 : index
    %106 = vector.load %arg6[%c0_59, %c0_60, %c0_61] : memref<9x32x32xf32, #tpu.memory_space<vmem>>, vector<1x32x32xf32>
    %107 = vector.shape_cast %106 : vector<1x32x32xf32> to vector<32x32xf32>
    %cst_62 = arith.constant dense<0.000000e+00> : vector<256x32xf32>
    %108 = tpu.matmul %105, %107, %cst_62 {dimension_numbers = #tpu.dot_dimension_numbers<[1], [0], [0], [1], [0, 0, 1, 1], [], []>} : vector<256x32xf32>, vector<32x32xf32>, vector<256x32xf32> -> vector<256x32xf32>
    %109 = arith.addf %103, %108 : vector<256x32xf32>
    %110 = vector.extract_strided_slice %100 {offsets = [0, 8, 0], sizes = [16, 16, 32], strides = [1, 1, 1]} : vector<18x32x32xf32> to vector<16x16x32xf32>
    %111 = vector.shape_cast %110 : vector<16x16x32xf32> to vector<256x32xf32>
    %c1_63 = arith.constant 1 : index
    %c0_64 = arith.constant 0 : index
    %c0_65 = arith.constant 0 : index
    %112 = vector.load %arg6[%c1_63, %c0_64, %c0_65] : memref<9x32x32xf32, #tpu.memory_space<vmem>>, vector<1x32x32xf32>
    %113 = vector.shape_cast %112 : vector<1x32x32xf32> to vector<32x32xf32>
    %cst_66 = arith.constant dense<0.000000e+00> : vector<256x32xf32>
    %114 = tpu.matmul %111, %113, %cst_66 {dimension_numbers = #tpu.dot_dimension_numbers<[1], [0], [0], [1], [0, 0, 1, 1], [], []>} : vector<256x32xf32>, vector<32x32xf32>, vector<256x32xf32> -> vector<256x32xf32>
    %115 = arith.addf %109, %114 : vector<256x32xf32>
    %116 = vector.extract_strided_slice %100 {offsets = [0, 9, 0], sizes = [16, 16, 32], strides = [1, 1, 1]} : vector<18x32x32xf32> to vector<16x16x32xf32>
    %117 = vector.shape_cast %116 : vector<16x16x32xf32> to vector<256x32xf32>
    %c2_67 = arith.constant 2 : index
    %c0_68 = arith.constant 0 : index
    %c0_69 = arith.constant 0 : index
    %118 = vector.load %arg6[%c2_67, %c0_68, %c0_69] : memref<9x32x32xf32, #tpu.memory_space<vmem>>, vector<1x32x32xf32>
    %119 = vector.shape_cast %118 : vector<1x32x32xf32> to vector<32x32xf32>
    %cst_70 = arith.constant dense<0.000000e+00> : vector<256x32xf32>
    %120 = tpu.matmul %117, %119, %cst_70 {dimension_numbers = #tpu.dot_dimension_numbers<[1], [0], [0], [1], [0, 0, 1, 1], [], []>} : vector<256x32xf32>, vector<32x32xf32>, vector<256x32xf32> -> vector<256x32xf32>
    %121 = arith.addf %115, %120 : vector<256x32xf32>
    %122 = vector.extract_strided_slice %100 {offsets = [1, 7, 0], sizes = [16, 16, 32], strides = [1, 1, 1]} : vector<18x32x32xf32> to vector<16x16x32xf32>
    %123 = vector.shape_cast %122 : vector<16x16x32xf32> to vector<256x32xf32>
    %c3_71 = arith.constant 3 : index
    %c0_72 = arith.constant 0 : index
    %c0_73 = arith.constant 0 : index
    %124 = vector.load %arg6[%c3_71, %c0_72, %c0_73] : memref<9x32x32xf32, #tpu.memory_space<vmem>>, vector<1x32x32xf32>
    %125 = vector.shape_cast %124 : vector<1x32x32xf32> to vector<32x32xf32>
    %cst_74 = arith.constant dense<0.000000e+00> : vector<256x32xf32>
    %126 = tpu.matmul %123, %125, %cst_74 {dimension_numbers = #tpu.dot_dimension_numbers<[1], [0], [0], [1], [0, 0, 1, 1], [], []>} : vector<256x32xf32>, vector<32x32xf32>, vector<256x32xf32> -> vector<256x32xf32>
    %127 = arith.addf %121, %126 : vector<256x32xf32>
    %128 = vector.extract_strided_slice %100 {offsets = [1, 8, 0], sizes = [16, 16, 32], strides = [1, 1, 1]} : vector<18x32x32xf32> to vector<16x16x32xf32>
    %129 = vector.shape_cast %128 : vector<16x16x32xf32> to vector<256x32xf32>
    %c4_75 = arith.constant 4 : index
    %c0_76 = arith.constant 0 : index
    %c0_77 = arith.constant 0 : index
    %130 = vector.load %arg6[%c4_75, %c0_76, %c0_77] : memref<9x32x32xf32, #tpu.memory_space<vmem>>, vector<1x32x32xf32>
    %131 = vector.shape_cast %130 : vector<1x32x32xf32> to vector<32x32xf32>
    %cst_78 = arith.constant dense<0.000000e+00> : vector<256x32xf32>
    %132 = tpu.matmul %129, %131, %cst_78 {dimension_numbers = #tpu.dot_dimension_numbers<[1], [0], [0], [1], [0, 0, 1, 1], [], []>} : vector<256x32xf32>, vector<32x32xf32>, vector<256x32xf32> -> vector<256x32xf32>
    %133 = arith.addf %127, %132 : vector<256x32xf32>
    %134 = vector.extract_strided_slice %100 {offsets = [1, 9, 0], sizes = [16, 16, 32], strides = [1, 1, 1]} : vector<18x32x32xf32> to vector<16x16x32xf32>
    %135 = vector.shape_cast %134 : vector<16x16x32xf32> to vector<256x32xf32>
    %c5_79 = arith.constant 5 : index
    %c0_80 = arith.constant 0 : index
    %c0_81 = arith.constant 0 : index
    %136 = vector.load %arg6[%c5_79, %c0_80, %c0_81] : memref<9x32x32xf32, #tpu.memory_space<vmem>>, vector<1x32x32xf32>
    %137 = vector.shape_cast %136 : vector<1x32x32xf32> to vector<32x32xf32>
    %cst_82 = arith.constant dense<0.000000e+00> : vector<256x32xf32>
    %138 = tpu.matmul %135, %137, %cst_82 {dimension_numbers = #tpu.dot_dimension_numbers<[1], [0], [0], [1], [0, 0, 1, 1], [], []>} : vector<256x32xf32>, vector<32x32xf32>, vector<256x32xf32> -> vector<256x32xf32>
    %139 = arith.addf %133, %138 : vector<256x32xf32>
    %140 = vector.extract_strided_slice %100 {offsets = [2, 7, 0], sizes = [16, 16, 32], strides = [1, 1, 1]} : vector<18x32x32xf32> to vector<16x16x32xf32>
    %141 = vector.shape_cast %140 : vector<16x16x32xf32> to vector<256x32xf32>
    %c6_83 = arith.constant 6 : index
    %c0_84 = arith.constant 0 : index
    %c0_85 = arith.constant 0 : index
    %142 = vector.load %arg6[%c6_83, %c0_84, %c0_85] : memref<9x32x32xf32, #tpu.memory_space<vmem>>, vector<1x32x32xf32>
    %143 = vector.shape_cast %142 : vector<1x32x32xf32> to vector<32x32xf32>
    %cst_86 = arith.constant dense<0.000000e+00> : vector<256x32xf32>
    %144 = tpu.matmul %141, %143, %cst_86 {dimension_numbers = #tpu.dot_dimension_numbers<[1], [0], [0], [1], [0, 0, 1, 1], [], []>} : vector<256x32xf32>, vector<32x32xf32>, vector<256x32xf32> -> vector<256x32xf32>
    %145 = arith.addf %139, %144 : vector<256x32xf32>
    %146 = vector.extract_strided_slice %100 {offsets = [2, 8, 0], sizes = [16, 16, 32], strides = [1, 1, 1]} : vector<18x32x32xf32> to vector<16x16x32xf32>
    %147 = vector.shape_cast %146 : vector<16x16x32xf32> to vector<256x32xf32>
    %c7_87 = arith.constant 7 : index
    %c0_88 = arith.constant 0 : index
    %c0_89 = arith.constant 0 : index
    %148 = vector.load %arg6[%c7_87, %c0_88, %c0_89] : memref<9x32x32xf32, #tpu.memory_space<vmem>>, vector<1x32x32xf32>
    %149 = vector.shape_cast %148 : vector<1x32x32xf32> to vector<32x32xf32>
    %cst_90 = arith.constant dense<0.000000e+00> : vector<256x32xf32>
    %150 = tpu.matmul %147, %149, %cst_90 {dimension_numbers = #tpu.dot_dimension_numbers<[1], [0], [0], [1], [0, 0, 1, 1], [], []>} : vector<256x32xf32>, vector<32x32xf32>, vector<256x32xf32> -> vector<256x32xf32>
    %151 = arith.addf %145, %150 : vector<256x32xf32>
    %152 = vector.extract_strided_slice %100 {offsets = [2, 9, 0], sizes = [16, 16, 32], strides = [1, 1, 1]} : vector<18x32x32xf32> to vector<16x16x32xf32>
    %153 = vector.shape_cast %152 : vector<16x16x32xf32> to vector<256x32xf32>
    %c8_91 = arith.constant 8 : index
    %c0_92 = arith.constant 0 : index
    %c0_93 = arith.constant 0 : index
    %154 = vector.load %arg6[%c8_91, %c0_92, %c0_93] : memref<9x32x32xf32, #tpu.memory_space<vmem>>, vector<1x32x32xf32>
    %155 = vector.shape_cast %154 : vector<1x32x32xf32> to vector<32x32xf32>
    %cst_94 = arith.constant dense<0.000000e+00> : vector<256x32xf32>
    %156 = tpu.matmul %153, %155, %cst_94 {dimension_numbers = #tpu.dot_dimension_numbers<[1], [0], [0], [1], [0, 0, 1, 1], [], []>} : vector<256x32xf32>, vector<32x32xf32>, vector<256x32xf32> -> vector<256x32xf32>
    %157 = arith.addf %151, %156 : vector<256x32xf32>
    %cst_95 = arith.constant 0.000000e+00 : f32
    %158 = vector.broadcast %cst_95 : f32 to vector<256x32xf32>
    %159 = arith.maximumf %157, %158 : vector<256x32xf32>
    %c0_96 = arith.constant 0 : index
    %c0_97 = arith.constant 0 : index
    %160 = vector.load %arg10[%c0_96, %c0_97] : memref<1x32xf32, #tpu.memory_space<vmem>>, vector<1x32xf32>
    %161 = vector.shape_cast %160 : vector<1x32xf32> to vector<1x32xf32>
    %162 = vector.broadcast %161 : vector<1x32xf32> to vector<256x32xf32>
    %c0_98 = arith.constant 0 : index
    %c0_99 = arith.constant 0 : index
    %163 = vector.load %arg8[%c0_98, %c0_99] : memref<32x32xf32, #tpu.memory_space<vmem>>, vector<32x32xf32>
    %cst_100 = arith.constant dense<0.000000e+00> : vector<256x32xf32>
    %164 = tpu.matmul %95, %163, %cst_100 {dimension_numbers = #tpu.dot_dimension_numbers<[1], [0], [0], [1], [0, 0, 1, 1], [], []>} : vector<256x32xf32>, vector<32x32xf32>, vector<256x32xf32> -> vector<256x32xf32>
    %165 = arith.addf %162, %164 : vector<256x32xf32>
    %c0_101 = arith.constant 0 : index
    %c0_102 = arith.constant 0 : index
    %166 = vector.load %arg9[%c0_101, %c0_102] : memref<32x32xf32, #tpu.memory_space<vmem>>, vector<32x32xf32>
    %cst_103 = arith.constant dense<0.000000e+00> : vector<256x32xf32>
    %167 = tpu.matmul %159, %166, %cst_103 {dimension_numbers = #tpu.dot_dimension_numbers<[1], [0], [0], [1], [0, 0, 1, 1], [], []>} : vector<256x32xf32>, vector<32x32xf32>, vector<256x32xf32> -> vector<256x32xf32>
    %168 = arith.addf %165, %167 : vector<256x32xf32>
    %cst_104 = arith.constant 0.000000e+00 : f32
    %169 = vector.broadcast %cst_104 : f32 to vector<256x32xf32>
    %170 = arith.maximumf %168, %169 : vector<256x32xf32>
    %c0_105 = arith.constant 0 : index
    %c0_106 = arith.constant 0 : index
    %171 = vector.load %arg11[%c0_105, %c0_106] : memref<32x128xf32, #tpu.memory_space<vmem>>, vector<32x128xf32>
    %cst_107 = arith.constant dense<0.000000e+00> : vector<256x128xf32>
    %172 = tpu.matmul %170, %171, %cst_107 {dimension_numbers = #tpu.dot_dimension_numbers<[1], [0], [0], [1], [0, 0, 1, 1], [], []>} : vector<256x32xf32>, vector<32x128xf32>, vector<256x128xf32> -> vector<256x128xf32>
    %c0_108 = arith.constant 0 : index
    %c0_109 = arith.constant 0 : index
    %173 = vector.load %arg12[%c0_108, %c0_109] : memref<1x128xf32, #tpu.memory_space<vmem>>, vector<1x128xf32>
    %174 = vector.broadcast %173 : vector<1x128xf32> to vector<256x128xf32>
    %175 = arith.addf %172, %174 : vector<256x128xf32>
    %c0_110 = arith.constant 0 : index
    %c0_111 = arith.constant 0 : index
    %c0_112 = arith.constant 0 : index
    %176 = vector.load %arg13[%c0_110, %c0_111, %c0_112] : memref<1x256x128xf32, #tpu.memory_space<vmem>>, vector<1x256x128xf32>
    %177 = vector.shape_cast %176 : vector<1x256x128xf32> to vector<256x128xf32>
    %178 = vector.shape_cast %175 : vector<256x128xf32> to vector<1x256x128xf32>
    tpu.vector_store %arg13[%c0_110, %c0_111, %c0_112], %178 {strides = array<i32>} : memref<1x256x128xf32, #tpu.memory_space<vmem>>, vector<1x256x128xf32>,
    return
  }
  func.func @transform_0(%arg0: i32) -> (i32, i32, i32) {
    %c0_i32 = arith.constant 0 : i32
    %c0_i32_0 = arith.constant 0 : i32
    %c0_i32_1 = arith.constant 0 : i32
    return %arg0, %c0_i32, %c0_i32_0 : i32, i32, i32
  }
  func.func @transform_1(%arg0: i32) -> (i32, i32) {
    %c0_i32 = arith.constant 0 : i32
    %c0_i32_0 = arith.constant 0 : i32
    %c0_i32_1 = arith.constant 0 : i32
    return %c0_i32, %c0_i32_0 : i32, i32
  }
  func.func @transform_2(%arg0: i32) -> (i32, i32) {
    %c0_i32 = arith.constant 0 : i32
    %c0_i32_0 = arith.constant 0 : i32
    %c0_i32_1 = arith.constant 0 : i32
    return %c0_i32, %c0_i32_0 : i32, i32
  }
  func.func @transform_3(%arg0: i32) -> (i32, i32, i32) {
    %c0_i32 = arith.constant 0 : i32
    %c0_i32_0 = arith.constant 0 : i32
    %c0_i32_1 = arith.constant 0 : i32
    %c0_i32_2 = arith.constant 0 : i32
    return %c0_i32, %c0_i32_0, %c0_i32_1 : i32, i32, i32
  }
  func.func @transform_4(%arg0: i32) -> (i32, i32) {
    %c0_i32 = arith.constant 0 : i32
    %c0_i32_0 = arith.constant 0 : i32
    %c0_i32_1 = arith.constant 0 : i32
    return %c0_i32, %c0_i32_0 : i32, i32
  }
  func.func @transform_5(%arg0: i32) -> (i32, i32, i32) {
    %c0_i32 = arith.constant 0 : i32
    %c0_i32_0 = arith.constant 0 : i32
    %c0_i32_1 = arith.constant 0 : i32
    %c0_i32_2 = arith.constant 0 : i32
    return %c0_i32, %c0_i32_0, %c0_i32_1 : i32, i32, i32
  }
  func.func @transform_6(%arg0: i32) -> (i32, i32) {
    %c0_i32 = arith.constant 0 : i32
    %c0_i32_0 = arith.constant 0 : i32
    %c0_i32_1 = arith.constant 0 : i32
    return %c0_i32, %c0_i32_0 : i32, i32
  }
  func.func @transform_7(%arg0: i32) -> (i32, i32) {
    %c0_i32 = arith.constant 0 : i32
    %c0_i32_0 = arith.constant 0 : i32
    %c0_i32_1 = arith.constant 0 : i32
    return %c0_i32, %c0_i32_0 : i32, i32
  }
  func.func @transform_8(%arg0: i32) -> (i32, i32) {
    %c0_i32 = arith.constant 0 : i32
    %c0_i32_0 = arith.constant 0 : i32
    %c0_i32_1 = arith.constant 0 : i32
    return %c0_i32, %c0_i32_0 : i32, i32
  }
  func.func @transform_9(%arg0: i32) -> (i32, i32) {
    %c0_i32 = arith.constant 0 : i32
    %c0_i32_0 = arith.constant 0 : i32
    %c0_i32_1 = arith.constant 0 : i32
    return %c0_i32, %c0_i32_0 : i32, i32
  }
  func.func @transform_10(%arg0: i32) -> (i32, i32) {
    %c0_i32 = arith.constant 0 : i32
    %c0_i32_0 = arith.constant 0 : i32
    %c0_i32_1 = arith.constant 0 : i32
    return %c0_i32, %c0_i32_0 : i32, i32
  }
  func.func @transform_11(%arg0: i32) -> (i32, i32) {
    %c0_i32 = arith.constant 0 : i32
    %c0_i32_0 = arith.constant 0 : i32
    %c0_i32_1 = arith.constant 0 : i32
    return %c0_i32, %c0_i32_0 : i32, i32
  }
  func.func @transform_12(%arg0: i32) -> (i32, i32, i32) {
    %c0_i32 = arith.constant 0 : i32
    %c0_i32_0 = arith.constant 0 : i32
    %c0_i32_1 = arith.constant 0 : i32
    return %arg0, %c0_i32, %c0_i32_0 : i32, i32, i32
  }
}

</mosaic_0001>

<llo_original>
// kernel: tpu_custom_call.1
$region0: #{tpu_custom_call.1}
  #allocation0 [shape = 'u32[]', space=smem, size = 0x4, offset = 0x4, fixed_abs, tag = 'smem constant byte address 0x4 - core index']
  #allocation1 [shape = 'u32[72,128]{1,0:T(1,128)}', space=vmem, size = 0x9000, scoped, tag = 'internal scratch']
  #allocation2 [shape = 'f32[18,32,16]{2,1,0:T(8,128)}', space=vmem, size = 0x48000, scoped, tag = 'scratch operand']
  #allocation3 [shape = 'f32[18,32,32]{2,1,0:T(8,128)}', space=vmem, size = 0x48000, scoped, tag = 'scratch operand']
  %s0 = inlined_call_operand.vmem [shape: f32[2,256,4], index: 0, kind: input, shape index: {}]
  %s1 = inlined_call_operand.vmem [shape: f32[4,16], index: 1, kind: input, shape index: {}]
  %s2 = inlined_call_operand.hbm [shape: f32[1,16], index: 2, kind: input, shape index: {}]
  %s3 = inlined_call_operand.vmem [shape: f32[9,16,32], index: 3, kind: input, shape index: {}]
  %s4 = inlined_call_operand.hbm [shape: f32[1,32], index: 4, kind: input, shape index: {}]
  %s5 = inlined_call_operand.vmem [shape: f32[9,32,32], index: 5, kind: input, shape index: {}]
  %s6 = inlined_call_operand.vmem [shape: f32[1,32], index: 6, kind: input, shape index: {}]
  %s7 = inlined_call_operand.vmem [shape: f32[32,32], index: 7, kind: input, shape index: {}]
  %s8 = inlined_call_operand.vmem [shape: f32[32,32], index: 8, kind: input, shape index: {}]
  %s9 = inlined_call_operand.hbm [shape: f32[1,32], index: 9, kind: input, shape index: {}]
  %s10 = inlined_call_operand.vmem [shape: f32[32,128], index: 10, kind: input, shape index: {}]
  %s11 = inlined_call_operand.hbm [shape: f32[1,128], index: 11, kind: input, shape index: {}]
  %s12 = inlined_call_operand.hbm [shape: f32[2,256,128], index: 12, kind: output, shape index: {}]
  %s13 = sld [smem:[#allocation0]]
  $region97: #{tpu_custom_call.1} parent=0
    _
  %s15 = ssub.s32 1, %s13
  %s16 = scalar_select 0, %s15, %s13
  $region1: #{tpu_custom_call.1} parent=0
    #allocation4 [shape = 'u8[512]{0}', space=vmem, size = 0x400, scoped, tag = 'input window, operand 2, single buffered']
    #allocation5 [shape = 's32[2]{0}', space=sflag, size = 0x8, scoped, tag = 'scoped memory for tpu_custom_call.1']
    #allocation6 [shape = 's32[2]{0}', space=sflag, size = 0x8, scoped, tag = 'scoped memory for tpu_custom_call.1']
    #allocation7 [shape = 'u8[512]{0}', space=vmem, size = 0x400, scoped, tag = 'input window, operand 4, single buffered']
    #allocation8 [shape = 's32[1]{0}', space=sflag, size = 0x4, scoped, tag = 'scoped memory for tpu_custom_call.1']
    #allocation9 [shape = 'u8[512]{0}', space=vmem, size = 0x400, scoped, tag = 'input window, operand 9, single buffered']
    #allocation10 [shape = 'u8[512]{0}', space=vmem, size = 0x400, scoped, tag = 'input window, operand 11, single buffered']
    #allocation11 [shape = 's32[1]{0}', space=sflag, size = 0x4, scoped, tag = 'scoped memory for tpu_custom_call.1']
    #allocation12 [shape = 'u8[262144]{0}', space=vmem, size = 0x40000, scoped, tag = 'output window, operand 0']
    %17 = vsyncpa [#allocation5], 0
    %18 = vsyncpa [#allocation8], 0
    %19 = vsyncpa [#allocation11], 0
    %20 = vsyncpa [#allocation6], 0
    %s21 = scalar_lea.sflag [#allocation6], 1
    %22 = vsyncpa %s21, 0
    loop: start=0, step=1, limit=4
    $region2: #{tpu_custom_call.1} parent=1 // loop_pre_header
      _
    $region3: #{tpu_custom_call.1} parent=1 // loop_header
      %s24 = sphi 0, %s28
      %p25 = scmp.ge.s32.totalorder %s24, 4
      %s34 = sphi 0, %s36
      %s37 = sphi 0, %s34
      %s38 = sphi 0, %s37
      %s54 = sphi 0, %s38
      %s58 = sphi 0, %s58
      %s60 = sphi 0, %s58
      %s61 = sphi 0, %s60
      %s75 = sphi 0, %s61
      %s79 = sphi 0, %s79
      %s81 = sphi 0, %s79
      %s82 = sphi 0, %s81
      %s96 = sphi 0, %s82
      %s100 = sphi 0, %s100
      %s102 = sphi 0, %s100
      %s103 = sphi 0, %s102
      %s117 = sphi 0, %s103
      %s121 = sphi 0, %s121
      %s123 = sphi 0, %s121
      %s124 = sphi 0, %s123
      %s138 = sphi 0, %s124
      %s142 = sphi 0, %s142
      %s144 = sphi 0, %s142
      %s145 = sphi 0, %s144
      %s159 = sphi 0, %s145
      %s163 = sphi 0, %s163
      %s165 = sphi 0, %s163
      %s166 = sphi 0, %s165
      %s180 = sphi 0, %s166
      %s184 = sphi 0, %s184
      %s186 = sphi 0, %s184
      %s187 = sphi 0, %s186
      %s201 = sphi 0, %s187
      %s205 = sphi 0, %s205
      %s207 = sphi 0, %s205
      %s208 = sphi 0, %s207
      %s222 = sphi 0, %s208
      %s226 = sphi 0, %s226
      %s228 = sphi 0, %s226
      %s229 = sphi 0, %s228
      %s243 = sphi 0, %s229
      %s247 = sphi 0, %s247
      %s249 = sphi 0, %s247
      %s250 = sphi 0, %s249
      %s264 = sphi 0, %s250
      %s268 = sphi 0, %s268
      %s270 = sphi 0, %s268
      %s271 = sphi 0, %s270
      %s285 = sphi 0, %s271
      %s291 = sphi 0, %s293
      %s294 = sphi 0, %s291
      %s295 = sphi 0, %s294
      %s311 = sphi 0, %s295
    $region4: #{tpu_custom_call.1} parent=1 // loop_header_branch
      %27 = sbr.rel (%p25) target = $region8
    $region5: #{tpu_custom_call.1} parent=1 // loop_body
      %s29 = ssub.s32 %s24, 1
      %s30 = ssub.s32 %s24, 2
      %s31 = sadd.s32 %s24, 1
      %s32 = ssub.s32 %s24, %s31
      %p33 = scmp.eq.s32.totalorder %s32, 0
      %s35 = sadd.s32 %s34, 1
      %s36 = scalar_select %p33, %s34, %s35
      %p39 = pneg %p33
      %p40 = scmp.eq.s32.totalorder %s24, 1
      %p41 = por %p39, %p40
      %p42 = scmp.ne.s32.totalorder %s34, %s37
      %p43 = scmp.eq.s32.totalorder %s24, 0
      %p44 = por %p42, %p43
      %p45 = scmp.ne.s32.totalorder %s34, %s37
      %p46 = scmp.eq.s32.totalorder %s29, 1
      %p47 = por %p45, %p46
      %p48 = scmp.ne.s32.totalorder %s37, %s38
      %p49 = scmp.eq.s32.totalorder %s29, 0
      %p50 = por %p48, %p49
      %p51 = scmp.ne.s32.totalorder %s37, %s38
      %p52 = scmp.eq.s32.totalorder %s30, 1
      %p53 = por %p51, %p52
      %p55 = scmp.ne.s32.totalorder %s38, %s54
      %p56 = scmp.eq.s32.totalorder %s30, 0
      %p57 = por %p55, %p56
      %s59 = sadd.s32 %s58, 1
      %p62 = scmp.eq.s32.totalorder %s24, 1
      %p63 = scmp.ne.s32.totalorder %s58, %s60
      %p64 = scmp.eq.s32.totalorder %s24, 0
      %p65 = por %p63, %p64
      %p66 = scmp.ne.s32.totalorder %s58, %s60
      %p67 = scmp.eq.s32.totalorder %s29, 1
      %p68 = por %p66, %p67
      %p69 = scmp.ne.s32.totalorder %s60, %s61
      %p70 = scmp.eq.s32.totalorder %s29, 0
      %p71 = por %p69, %p70
      %p72 = scmp.ne.s32.totalorder %s60, %s61
      %p73 = scmp.eq.s32.totalorder %s30, 1
      %p74 = por %p72, %p73
      %p76 = scmp.ne.s32.totalorder %s61, %s75
      %p77 = scmp.eq.s32.totalorder %s30, 0
      %p78 = por %p76, %p77
      %s80 = sadd.s32 %s79, 1
      %p83 = scmp.eq.s32.totalorder %s24, 1
      %p84 = scmp.ne.s32.totalorder %s79, %s81
      %p85 = scmp.eq.s32.totalorder %s24, 0
      %p86 = por %p84, %p85
      %p87 = scmp.ne.s32.totalorder %s79, %s81
      %p88 = scmp.eq.s32.totalorder %s29, 1
      %p89 = por %p87, %p88
      %p90 = scmp.ne.s32.totalorder %s81, %s82
      %p91 = scmp.eq.s32.totalorder %s29, 0
      %p92 = por %p90, %p91
      %p93 = scmp.ne.s32.totalorder %s81, %s82
      %p94 = scmp.eq.s32.totalorder %s30, 1
      %p95 = por %p93, %p94
      %p97 = scmp.ne.s32.totalorder %s82, %s96
      %p98 = scmp.eq.s32.totalorder %s30, 0
      %p99 = por %p97, %p98
      %s101 = sadd.s32 %s100, 1
      %p104 = scmp.eq.s32.totalorder %s24, 1
      %p105 = scmp.ne.s32.totalorder %s100, %s102
      %p106 = scmp.eq.s32.totalorder %s24, 0
      %p107 = por %p105, %p106
      %p108 = scmp.ne.s32.totalorder %s100, %s102
      %p109 = scmp.eq.s32.totalorder %s29, 1
      %p110 = por %p108, %p109
      %p111 = scmp.ne.s32.totalorder %s102, %s103
      %p112 = scmp.eq.s32.totalorder %s29, 0
      %p113 = por %p111, %p112
      %p114 = scmp.ne.s32.totalorder %s102, %s103
      %p115 = scmp.eq.s32.totalorder %s30, 1
      %p116 = por %p114, %p115
      %p118 = scmp.ne.s32.totalorder %s103, %s117
      %p119 = scmp.eq.s32.totalorder %s30, 0
      %p120 = por %p118, %p119
      %s122 = sadd.s32 %s121, 1
      %p125 = scmp.eq.s32.totalorder %s24, 1
      %p126 = scmp.ne.s32.totalorder %s121, %s123
      %p127 = scmp.eq.s32.totalorder %s24, 0
      %p128 = por %p126, %p127
      %p129 = scmp.ne.s32.totalorder %s121, %s123
      %p130 = scmp.eq.s32.totalorder %s29, 1
      %p131 = por %p129, %p130
      %p132 = scmp.ne.s32.totalorder %s123, %s124
      %p133 = scmp.eq.s32.totalorder %s29, 0
      %p134 = por %p132, %p133
      %p135 = scmp.ne.s32.totalorder %s123, %s124
      %p136 = scmp.eq.s32.totalorder %s30, 1
      %p137 = por %p135, %p136
      %p139 = scmp.ne.s32.totalorder %s124, %s138
      %p140 = scmp.eq.s32.totalorder %s30, 0
      %p141 = por %p139, %p140
      %s143 = sadd.s32 %s142, 1
      %p146 = scmp.eq.s32.totalorder %s24, 1
      %p147 = scmp.ne.s32.totalorder %s142, %s144
      %p148 = scmp.eq.s32.totalorder %s24, 0
      %p149 = por %p147, %p148
      %p150 = scmp.ne.s32.totalorder %s142, %s144
      %p151 = scmp.eq.s32.totalorder %s29, 1
      %p152 = por %p150, %p151
      %p153 = scmp.ne.s32.totalorder %s144, %s145
      %p154 = scmp.eq.s32.totalorder %s29, 0
      %p155 = por %p153, %p154
      %p156 = scmp.ne.s32.totalorder %s144, %s145
      %p157 = scmp.eq.s32.totalorder %s30, 1
      %p158 = por %p156, %p157
      %p160 = scmp.ne.s32.totalorder %s145, %s159
      %p161 = scmp.eq.s32.totalorder %s30, 0
      %p162 = por %p160, %p161
      %s164 = sadd.s32 %s163, 1
      %p167 = scmp.eq.s32.totalorder %s24, 1
      %p168 = scmp.ne.s32.totalorder %s163, %s165
      %p169 = scmp.eq.s32.totalorder %s24, 0
      %p170 = por %p168, %p169
      %p171 = scmp.ne.s32.totalorder %s163, %s165
      %p172 = scmp.eq.s32.totalorder %s29, 1
      %p173 = por %p171, %p172
      %p174 = scmp.ne.s32.totalorder %s165, %s166
      %p175 = scmp.eq.s32.totalorder %s29, 0
      %p176 = por %p174, %p175
      %p177 = scmp.ne.s32.totalorder %s165, %s166
      %p178 = scmp.eq.s32.totalorder %s30, 1
      %p179 = por %p177, %p178
      %p181 = scmp.ne.s32.totalorder %s166, %s180
      %p182 = scmp.eq.s32.totalorder %s30, 0
      %p183 = por %p181, %p182
      %s185 = sadd.s32 %s184, 1
      %p188 = scmp.eq.s32.totalorder %s24, 1
      %p189 = scmp.ne.s32.totalorder %s184, %s186
      %p190 = scmp.eq.s32.totalorder %s24, 0
      %p191 = por %p189, %p190
      %p192 = scmp.ne.s32.totalorder %s184, %s186
      %p193 = scmp.eq.s32.totalorder %s29, 1
      %p194 = por %p192, %p193
      %p195 = scmp.ne.s32.totalorder %s186, %s187
      %p196 = scmp.eq.s32.totalorder %s29, 0
      %p197 = por %p195, %p196
      %p198 = scmp.ne.s32.totalorder %s186, %s187
      %p199 = scmp.eq.s32.totalorder %s30, 1
      %p200 = por %p198, %p199
      %p202 = scmp.ne.s32.totalorder %s187, %s201
      %p203 = scmp.eq.s32.totalorder %s30, 0
      %p204 = por %p202, %p203
      %s206 = sadd.s32 %s205, 1
      %p209 = scmp.eq.s32.totalorder %s24, 1
      %p210 = scmp.ne.s32.totalorder %s205, %s207
      %p211 = scmp.eq.s32.totalorder %s24, 0
      %p212 = por %p210, %p211
      %p213 = scmp.ne.s32.totalorder %s205, %s207
      %p214 = scmp.eq.s32.totalorder %s29, 1
      %p215 = por %p213, %p214
      %p216 = scmp.ne.s32.totalorder %s207, %s208
      %p217 = scmp.eq.s32.totalorder %s29, 0
      %p218 = por %p216, %p217
      %p219 = scmp.ne.s32.totalorder %s207, %s208
      %p220 = scmp.eq.s32.totalorder %s30, 1
      %p221 = por %p219, %p220
      %p223 = scmp.ne.s32.totalorder %s208, %s222
      %p224 = scmp.eq.s32.totalorder %s30, 0
      %p225 = por %p223, %p224
      %s227 = sadd.s32 %s226, 1
      %p230 = scmp.eq.s32.totalorder %s24, 1
      %p231 = scmp.ne.s32.totalorder %s226, %s228
      %p232 = scmp.eq.s32.totalorder %s24, 0
      %p233 = por %p231, %p232
      %p234 = scmp.ne.s32.totalorder %s226, %s228
      %p235 = scmp.eq.s32.totalorder %s29, 1
      %p236 = por %p234, %p235
      %p237 = scmp.ne.s32.totalorder %s228, %s229
      %p238 = scmp.eq.s32.totalorder %s29, 0
      %p239 = por %p237, %p238
      %p240 = scmp.ne.s32.totalorder %s228, %s229
      %p241 = scmp.eq.s32.totalorder %s30, 1
      %p242 = por %p240, %p241
      %p244 = scmp.ne.s32.totalorder %s229, %s243
      %p245 = scmp.eq.s32.totalorder %s30, 0
      %p246 = por %p244, %p245
      %s248 = sadd.s32 %s247, 1
      %p251 = scmp.eq.s32.totalorder %s24, 1
      %p252 = scmp.ne.s32.totalorder %s247, %s249
      %p253 = scmp.eq.s32.totalorder %s24, 0
      %p254 = por %p252, %p253
      %p255 = scmp.ne.s32.totalorder %s247, %s249
      %p256 = scmp.eq.s32.totalorder %s29, 1
      %p257 = por %p255, %p256
      %p258 = scmp.ne.s32.totalorder %s249, %s250
      %p259 = scmp.eq.s32.totalorder %s29, 0
      %p260 = por %p258, %p259
      %p261 = scmp.ne.s32.totalorder %s249, %s250
      %p262 = scmp.eq.s32.totalorder %s30, 1
      %p263 = por %p261, %p262
      %p265 = scmp.ne.s32.totalorder %s250, %s264
      %p266 = scmp.eq.s32.totalorder %s30, 0
      %p267 = por %p265, %p266
      %s269 = sadd.s32 %s268, 1
      %p272 = scmp.eq.s32.totalorder %s24, 1
      %p273 = scmp.ne.s32.totalorder %s268, %s270
      %p274 = scmp.eq.s32.totalorder %s24, 0
      %p275 = por %p273, %p274
      %p276 = scmp.ne.s32.totalorder %s268, %s270
      %p277 = scmp.eq.s32.totalorder %s29, 1
      %p278 = por %p276, %p277
      %p279 = scmp.ne.s32.totalorder %s270, %s271
      %p280 = scmp.eq.s32.totalorder %s29, 0
      %p281 = por %p279, %p280
      %p282 = scmp.ne.s32.totalorder %s270, %s271
      %p283 = scmp.eq.s32.totalorder %s30, 1
      %p284 = por %p282, %p283
      %p286 = scmp.ne.s32.totalorder %s271, %s285
      %p287 = scmp.eq.s32.totalorder %s30, 0
      %p288 = por %p286, %p287
      %s289 = ssub.s32 %s24, %s31
      %p290 = scmp.eq.s32.totalorder %s289, 0
      %s292 = sadd.s32 %s291, 1
      %s293 = scalar_select %p290, %s291, %s292
      %p296 = pneg %p290
      %p297 = scmp.eq.s32.totalorder %s24, 1
      %p298 = por %p296, %p297
      %p299 = scmp.ne.s32.totalorder %s291, %s294
      %p300 = scmp.eq.s32.totalorder %s24, 0
      %p301 = por %p299, %p300
      %p302 = scmp.ne.s32.totalorder %s291, %s294
      %p303 = scmp.eq.s32.totalorder %s29, 1
      %p304 = por %p302, %p303
      %p305 = scmp.ne.s32.totalorder %s294, %s295
      %p306 = scmp.eq.s32.totalorder %s29, 0
      %p307 = por %p305, %p306
      %p308 = scmp.ne.s32.totalorder %s294, %s295
      %p309 = scmp.eq.s32.totalorder %s30, 1
      %p310 = por %p308, %p309
      %p312 = scmp.ne.s32.totalorder %s295, %s311
      %p313 = scmp.eq.s32.totalorder %s30, 0
      %p314 = por %p312, %p313
      %p315 = scmp.le.s32.totalorder 1, %s24
      %p316 = scmp.lt.s32.totalorder %s24, 3
      %p317 = pnand %p315, %p316
      %p318 = pneg %p317
      // Predicated region
      $region9: #{tpu_custom_call.1} parent=5 // pred_check
        _
      $region10: #{tpu_custom_call.1} parent=5 // pred_check_branch
        %320 = sbr.rel (%p317) target = $region12
      $region11: #{tpu_custom_call.1} parent=5 // pred_region
        %s321 = ssub.s32 %s24, 1
        // Predicated region
        $region13: #{tpu_custom_call.1} parent=11 // pred_check
          %p322 = pneg %p71
        $region14: #{tpu_custom_call.1} parent=11 // pred_check_branch
          %324 = sbr.rel (%p322) target = $region16
        $region15: #{tpu_custom_call.1} parent=11 // pred_region
          _
        $region16: #{tpu_custom_call.1} parent=11 // pred_fallthru
          _
        // Predicated region
        $region17: #{tpu_custom_call.1} parent=11 // pred_check
          %p325 = pneg %p92
        $region18: #{tpu_custom_call.1} parent=11 // pred_check_branch
          %327 = sbr.rel (%p325) target = $region20
        $region19: #{tpu_custom_call.1} parent=11 // pred_region
          %329 = vsyncadd [#allocation5], 0
          %s331 = sshll.u32 %s2, 4
          %s332 = int_to_ptr.hbm [resolvable:$true] %s331
          %s333 = sshll.u32 [#allocation4], 4
          %s334 = int_to_ptr.vmem [resolvable:$true] %s333
          %336 = dma.hbm_to_vmem [thread:$0]  %s332, 16, %s334, [#allocation5]
        $region20: #{tpu_custom_call.1} parent=11 // pred_fallthru
          _
        // Predicated region
        $region21: #{tpu_custom_call.1} parent=11 // pred_check
          %p337 = pneg %p113
        $region22: #{tpu_custom_call.1} parent=11 // pred_check_branch
          %339 = sbr.rel (%p337) target = $region24
        $region23: #{tpu_custom_call.1} parent=11 // pred_region
          _
        $region24: #{tpu_custom_call.1} parent=11 // pred_fallthru
          _
        // Predicated region
        $region25: #{tpu_custom_call.1} parent=11 // pred_check
          %p340 = pneg %p134
        $region26: #{tpu_custom_call.1} parent=11 // pred_check_branch
          %342 = sbr.rel (%p340) target = $region28
        $region27: #{tpu_custom_call.1} parent=11 // pred_region
          %344 = vsyncadd [#allocation8], 0
          %s346 = sshll.u32 %s4, 4
          %s347 = int_to_ptr.hbm [resolvable:$true] %s346
          %s348 = sshll.u32 [#allocation7], 4
          %s349 = int_to_ptr.vmem [resolvable:$true] %s348
          %351 = dma.hbm_to_vmem [thread:$0]  %s347, 16, %s349, [#allocation8]
        $region28: #{tpu_custom_call.1} parent=11 // pred_fallthru
          _
        // Predicated region
        $region29: #{tpu_custom_call.1} parent=11 // pred_check
          %p352 = pneg %p155
        $region30: #{tpu_custom_call.1} parent=11 // pred_check_branch
          %354 = sbr.rel (%p352) target = $region32
        $region31: #{tpu_custom_call.1} parent=11 // pred_region
          _
        $region32: #{tpu_custom_call.1} parent=11 // pred_fallthru
          _
        // Predicated region
        $region33: #{tpu_custom_call.1} parent=11 // pred_check
          %p355 = pneg %p176
        $region34: #{tpu_custom_call.1} parent=11 // pred_check_branch
          %357 = sbr.rel (%p355) target = $region36
        $region35: #{tpu_custom_call.1} parent=11 // pred_region
          _
        $region36: #{tpu_custom_call.1} parent=11 // pred_fallthru
          _
        // Predicated region
        $region37: #{tpu_custom_call.1} parent=11 // pred_check
          %p358 = pneg %p197
        $region38: #{tpu_custom_call.1} parent=11 // pred_check_branch
          %360 = sbr.rel (%p358) target = $region40
        $region39: #{tpu_custom_call.1} parent=11 // pred_region
          _
        $region40: #{tpu_custom_call.1} parent=11 // pred_fallthru
          _
        // Predicated region
        $region41: #{tpu_custom_call.1} parent=11 // pred_check
          %p361 = pneg %p218
        $region42: #{tpu_custom_call.1} parent=11 // pred_check_branch
          %363 = sbr.rel (%p361) target = $region44
        $region43: #{tpu_custom_call.1} parent=11 // pred_region
          _
        $region44: #{tpu_custom_call.1} parent=11 // pred_fallthru
          _
        // Predicated region
        $region45: #{tpu_custom_call.1} parent=11 // pred_check
          %p364 = pneg %p239
        $region46: #{tpu_custom_call.1} parent=11 // pred_check_branch
          %366 = sbr.rel (%p364) target = $region48
        $region47: #{tpu_custom_call.1} parent=11 // pred_region
          %368 = vsyncadd [#allocation8], 0
          %s370 = sshll.u32 %s9, 4
          %s371 = int_to_ptr.hbm [resolvable:$true] %s370
          %s372 = sshll.u32 [#allocation9], 4
          %s373 = int_to_ptr.vmem [resolvable:$true] %s372
          %375 = dma.hbm_to_vmem [thread:$0]  %s371, 16, %s373, [#allocation8]
        $region48: #{tpu_custom_call.1} parent=11 // pred_fallthru
          _
        // Predicated region
        $region49: #{tpu_custom_call.1} parent=11 // pred_check
          %p376 = pneg %p260
        $region50: #{tpu_custom_call.1} parent=11 // pred_check_branch
          %378 = sbr.rel (%p376) target = $region52
        $region51: #{tpu_custom_call.1} parent=11 // pred_region
          _
        $region52: #{tpu_custom_call.1} parent=11 // pred_fallthru
          _
        // Predicated region
        $region53: #{tpu_custom_call.1} parent=11 // pred_check
          %p379 = pneg %p281
        $region54: #{tpu_custom_call.1} parent=11 // pred_check_branch
          %381 = sbr.rel (%p379) target = $region56
        $region55: #{tpu_custom_call.1} parent=11 // pred_region
          %383 = vsyncadd [#allocation11], 0
          %s385 = sshll.u32 %s11, 4
          %s386 = int_to_ptr.hbm [resolvable:$true] %s385
          %s387 = sshll.u32 [#allocation10], 4
          %s388 = int_to_ptr.vmem [resolvable:$true] %s387
          %390 = dma.hbm_to_vmem [thread:$0]  %s386, 16, %s388, [#allocation11]
        $region56: #{tpu_custom_call.1} parent=11 // pred_fallthru
          _
      $region12: #{tpu_custom_call.1} parent=5 // pred_fallthru
        _
      %p391 = scmp.lt.s32.totalorder %s24, 2
      // Predicated region
      $region57: #{tpu_custom_call.1} parent=5 // pred_check
        %p392 = pneg %p391
      $region58: #{tpu_custom_call.1} parent=5 // pred_check_branch
        %394 = sbr.rel (%p392) target = $region60
      $region59: #{tpu_custom_call.1} parent=5 // pred_region
        // Predicated region
        $region61: #{tpu_custom_call.1} parent=59 // pred_check
          %p395 = pneg %p44
        $region62: #{tpu_custom_call.1} parent=59 // pred_check_branch
          %397 = sbr.rel (%p395) target = $region64
        $region63: #{tpu_custom_call.1} parent=59 // pred_region
          %p398 = scmp.lt.s32.totalorder %s24, 1
          %s399 = scalar_select %p398, %s24, 1
          %s400 = smul.addr %s399, 32
          %s401 = smul.addr %s400, 8
          %s402 = scalar_lea.vmem %s0, %s401
        $region64: #{tpu_custom_call.1} parent=59 // pred_fallthru
          _
      $region60: #{tpu_custom_call.1} parent=5 // pred_fallthru
        _
      %p403 = scmp.le.s32.totalorder 1, %s24
      %p404 = scmp.lt.s32.totalorder %s24, 3
      %p405 = pnand %p403, %p404
      %p406 = pneg %p405
      // Predicated region
      $region65: #{tpu_custom_call.1} parent=5 // pred_check
        _
      $region66: #{tpu_custom_call.1} parent=5 // pred_check_branch
        %408 = sbr.rel (%p405) target = $region68
      $region67: #{tpu_custom_call.1} parent=5 // pred_region
        %s409 = ssub.s32 %s24, 1
        // Predicated region
        $region69: #{tpu_custom_call.1} parent=67 // pred_check
          %p410 = pneg %p92
        $region70: #{tpu_custom_call.1} parent=67 // pred_check_branch
          %412 = sbr.rel (%p410) target = $region72
        $region71: #{tpu_custom_call.1} parent=67 // pred_region
          %414 = dma.done [#allocation5], 16
        $region72: #{tpu_custom_call.1} parent=67 // pred_fallthru
          _
        // Predicated region
        $region73: #{tpu_custom_call.1} parent=67 // pred_check
          %p415 = pneg %p134
        $region74: #{tpu_custom_call.1} parent=67 // pred_check_branch
          %417 = sbr.rel (%p415) target = $region76
        $region75: #{tpu_custom_call.1} parent=67 // pred_region
          %419 = dma.done [#allocation8], 16
        $region76: #{tpu_custom_call.1} parent=67 // pred_fallthru
          _
        // Predicated region
        $region77: #{tpu_custom_call.1} parent=67 // pred_check
          %p420 = pneg %p239
        $region78: #{tpu_custom_call.1} parent=67 // pred_check_branch
          %422 = sbr.rel (%p420) target = $region80
        $region79: #{tpu_custom_call.1} parent=67 // pred_region
          %424 = dma.done [#allocation8], 16
        $region80: #{tpu_custom_call.1} parent=67 // pred_fallthru
          _
        // Predicated region
        $region81: #{tpu_custom_call.1} parent=67 // pred_check
          %p425 = pneg %p281
        $region82: #{tpu_custom_call.1} parent=67 // pred_check_branch
          %427 = sbr.rel (%p425) target = $region84
        $region83: #{tpu_custom_call.1} parent=67 // pred_region
          %429 = dma.done [#allocation11], 16
        $region84: #{tpu_custom_call.1} parent=67 // pred_fallthru
          _
        %p430 = scmp.lt.s32.totalorder %s29, 1
        %s431 = scalar_select %p430, %s29, 1
        %s432 = smul.addr %s431, 32
        %s433 = smul.addr %s432, 8
        %s434 = scalar_lea.vmem %s0, %s433
        %p435 = pneg %p50
        %p436 = pneg %p47
        %p437 = pneg %p71
        %p438 = pneg %p68
        %p439 = pneg %p92
        %p440 = pneg %p89
        %p441 = pneg %p113
        %p442 = pneg %p110
        %p443 = pneg %p134
        %p444 = pneg %p131
        %p445 = pneg %p155
        %p446 = pneg %p152
        %p447 = pneg %p176
        %p448 = pneg %p173
        %p449 = pneg %p197
        %p450 = pneg %p194
        %p451 = pneg %p218
        %p452 = pneg %p215
        %p453 = pneg %p239
        %p454 = pneg %p236
        %p455 = pneg %p260
        %p456 = pneg %p257
        %p457 = pneg %p281
        %p458 = pneg %p278
        %p459 = pneg %p307
        %p460 = pneg %p304
        %s461 = sand.u32 %s294, 1
        %s462 = scalar_lea.sflag [#allocation6], %s461
        %s463 = sand.u32 %s294, 1
        %s464 = smul.addr %s463, 256
        %s465 = scalar_lea.vmem [#allocation12], %s464
        %p466 = scmp.lt.s32.totalorder %s29, 1
        %s467 = scalar_select %p466, %s29, 1
        %s468 = smul.addr %s467, 32
        %s469 = smul.addr %s468, 8
        %s470 = scalar_lea.vmem %s0, %s469
        %v471 = vld [vmem:[%s470] sm:$0xff]
        %v472 = vld [vmem:[%s470 + $0x8] sm:$0xff]
        %v473 = vld [vmem:[%s470 + $0x10] sm:$0xff]
        %v474 = vld [vmem:[%s470 + $0x18] sm:$0xff]
        %v475 = vld [vmem:[%s470 + $0x20] sm:$0xff]
        %v476 = vld [vmem:[%s470 + $0x28] sm:$0xff]
        %v477 = vld [vmem:[%s470 + $0x30] sm:$0xff]
        %v478 = vld [vmem:[%s470 + $0x38] sm:$0xff]
        %v479 = vld [vmem:[%s470 + $0x40] sm:$0xff]
        %v480 = vld [vmem:[%s470 + $0x48] sm:$0xff]
        %v481 = vld [vmem:[%s470 + $0x50] sm:$0xff]
        %v482 = vld [vmem:[%s470 + $0x58] sm:$0xff]
        %v483 = vld [vmem:[%s470 + $0x60] sm:$0xff]
        %v484 = vld [vmem:[%s470 + $0x68] sm:$0xff]
        %v485 = vld [vmem:[%s470 + $0x70] sm:$0xff]
        %v486 = vld [vmem:[%s470 + $0x78] sm:$0xff]
        %v487 = vld [vmem:[%s470 + $0x80] sm:$0xff]
        %v488 = vld [vmem:[%s470 + $0x88] sm:$0xff]
        %v489 = vld [vmem:[%s470 + $0x90] sm:$0xff]
        %v490 = vld [vmem:[%s470 + $0x98] sm:$0xff]
        %v491 = vld [vmem:[%s470 + $0xa0] sm:$0xff]
        %v492 = vld [vmem:[%s470 + $0xa8] sm:$0xff]
        %v493 = vld [vmem:[%s470 + $0xb0] sm:$0xff]
        %v494 = vld [vmem:[%s470 + $0xb8] sm:$0xff]
        %v495 = vld [vmem:[%s470 + $0xc0] sm:$0xff]
        %v496 = vld [vmem:[%s470 + $0xc8] sm:$0xff]
        %v497 = vld [vmem:[%s470 + $0xd0] sm:$0xff]
        %v498 = vld [vmem:[%s470 + $0xd8] sm:$0xff]
        %v499 = vld [vmem:[%s470 + $0xe0] sm:$0xff]
        %v500 = vld [vmem:[%s470 + $0xe8] sm:$0xff]
        %v501 = vld [vmem:[%s470 + $0xf0] sm:$0xff]
        %v502 = vld [vmem:[%s470 + $0xf8] sm:$0xff]
        %v503 = vld [vmem:[%s1] sm:$0xf]
        %v504 = vld [vmem:[#allocation4] sm:$0x1]
        %v506 = vperm.slane %v504, 0
        %509 = vset.pattern.permute.xlu0 0
        %510 = vperm.xlu0 %509, %v471
        %v511 = vpop.permute.xlu0 %510
        %514 = vset.pattern.permute.xlu0 0
        %515 = vperm.xlu0 %514, %v472
        %v516 = vpop.permute.xlu0 %515
        %519 = vset.pattern.permute.xlu0 0
        %520 = vperm.xlu0 %519, %v473
        %v521 = vpop.permute.xlu0 %520
        %524 = vset.pattern.permute.xlu0 0
        %525 = vperm.xlu0 %524, %v474
        %v526 = vpop.permute.xlu0 %525
        %529 = vset.pattern.permute.xlu0 0
        %530 = vperm.xlu0 %529, %v475
        %v531 = vpop.permute.xlu0 %530
        %534 = vset.pattern.permute.xlu0 0
        %535 = vperm.xlu0 %534, %v476
        %v536 = vpop.permute.xlu0 %535
        %539 = vset.pattern.permute.xlu0 0
        %540 = vperm.xlu0 %539, %v477
        %v541 = vpop.permute.xlu0 %540
        %544 = vset.pattern.permute.xlu0 0
        %545 = vperm.xlu0 %544, %v478
        %v546 = vpop.permute.xlu0 %545
        %549 = vset.pattern.permute.xlu0 0
        %550 = vperm.xlu0 %549, %v479
        %v551 = vpop.permute.xlu0 %550
        %554 = vset.pattern.permute.xlu0 0
        %555 = vperm.xlu0 %554, %v480
        %v556 = vpop.permute.xlu0 %555
        %559 = vset.pattern.permute.xlu0 0
        %560 = vperm.xlu0 %559, %v481
        %v561 = vpop.permute.xlu0 %560
        %564 = vset.pattern.permute.xlu0 0
        %565 = vperm.xlu0 %564, %v482
        %v566 = vpop.permute.xlu0 %565
        %569 = vset.pattern.permute.xlu0 0
        %570 = vperm.xlu0 %569, %v483
        %v571 = vpop.permute.xlu0 %570
        %574 = vset.pattern.permute.xlu0 0
        %575 = vperm.xlu0 %574, %v484
        %v576 = vpop.permute.xlu0 %575
        %579 = vset.pattern.permute.xlu0 0
        %580 = vperm.xlu0 %579, %v485
        %v581 = vpop.permute.xlu0 %580
        %584 = vset.pattern.permute.xlu0 0
        %585 = vperm.xlu0 %584, %v486
        %v586 = vpop.permute.xlu0 %585
        %589 = vset.pattern.permute.xlu0 0
        %590 = vperm.xlu0 %589, %v487
        %v591 = vpop.permute.xlu0 %590
        %594 = vset.pattern.permute.xlu0 0
        %595 = vperm.xlu0 %594, %v488
        %v596 = vpop.permute.xlu0 %595
        %599 = vset.pattern.permute.xlu0 0
        %600 = vperm.xlu0 %599, %v489
        %v601 = vpop.permute.xlu0 %600
        %604 = vset.pattern.permute.xlu0 0
        %605 = vperm.xlu0 %604, %v490
        %v606 = vpop.permute.xlu0 %605
        %609 = vset.pattern.permute.xlu0 0
        %610 = vperm.xlu0 %609, %v491
        %v611 = vpop.permute.xlu0 %610
        %614 = vset.pattern.permute.xlu0 0
        %615 = vperm.xlu0 %614, %v492
        %v616 = vpop.permute.xlu0 %615
        %619 = vset.pattern.permute.xlu0 0
        %620 = vperm.xlu0 %619, %v493
        %v621 = vpop.permute.xlu0 %620
        %624 = vset.pattern.permute.xlu0 0
        %625 = vperm.xlu0 %624, %v494
        %v626 = vpop.permute.xlu0 %625
        %629 = vset.pattern.permute.xlu0 0
        %630 = vperm.xlu0 %629, %v495
        %v631 = vpop.permute.xlu0 %630
        %634 = vset.pattern.permute.xlu0 0
        %635 = vperm.xlu0 %634, %v496
        %v636 = vpop.permute.xlu0 %635
        %639 = vset.pattern.permute.xlu0 0
        %640 = vperm.xlu0 %639, %v497
        %v641 = vpop.permute.xlu0 %640
        %644 = vset.pattern.permute.xlu0 0
        %645 = vperm.xlu0 %644, %v498
        %v646 = vpop.permute.xlu0 %645
        %649 = vset.pattern.permute.xlu0 0
        %650 = vperm.xlu0 %649, %v499
        %v651 = vpop.permute.xlu0 %650
        %654 = vset.pattern.permute.xlu0 0
        %655 = vperm.xlu0 %654, %v500
        %v656 = vpop.permute.xlu0 %655
        %659 = vset.pattern.permute.xlu0 0
        %660 = vperm.xlu0 %659, %v501
        %v661 = vpop.permute.xlu0 %660
        %664 = vset.pattern.permute.xlu0 0
        %665 = vperm.xlu0 %664, %v502
        %v666 = vpop.permute.xlu0 %665
        %v668 = vperm.slane %v503, 0
        %v669 = vmul.f32 %v511, %v668
        %v670 = vmul.f32 %v516, %v668
        %v671 = vmul.f32 %v521, %v668
        %v672 = vmul.f32 %v526, %v668
        %v673 = vmul.f32 %v531, %v668
        %v674 = vmul.f32 %v536, %v668
        %v675 = vmul.f32 %v541, %v668
        %v676 = vmul.f32 %v546, %v668
        %v677 = vmul.f32 %v551, %v668
        %v678 = vmul.f32 %v556, %v668
        %v679 = vmul.f32 %v561, %v668
        %v680 = vmul.f32 %v566, %v668
        %v681 = vmul.f32 %v571, %v668
        %v682 = vmul.f32 %v576, %v668
        %v683 = vmul.f32 %v581, %v668
        %v684 = vmul.f32 %v586, %v668
        %v685 = vmul.f32 %v591, %v668
        %v686 = vmul.f32 %v596, %v668
        %v687 = vmul.f32 %v601, %v668
        %v688 = vmul.f32 %v606, %v668
        %v689 = vmul.f32 %v611, %v668
        %v690 = vmul.f32 %v616, %v668
        %v691 = vmul.f32 %v621, %v668
        %v692 = vmul.f32 %v626, %v668
        %v693 = vmul.f32 %v631, %v668
        %v694 = vmul.f32 %v636, %v668
        %v695 = vmul.f32 %v641, %v668
        %v696 = vmul.f32 %v646, %v668
        %v697 = vmul.f32 %v651, %v668
        %v698 = vmul.f32 %v656, %v668
        %v699 = vmul.f32 %v661, %v668
        %v700 = vmul.f32 %v666, %v668
        %v701 = vadd.f32 %v506, %v669
        %v702 = vadd.f32 %v506, %v670
        %v703 = vadd.f32 %v506, %v671
        %v704 = vadd.f32 %v506, %v672
        %v705 = vadd.f32 %v506, %v673
        %v706 = vadd.f32 %v506, %v674
        %v707 = vadd.f32 %v506, %v675
        %v708 = vadd.f32 %v506, %v676
        %v709 = vadd.f32 %v506, %v677
        %v710 = vadd.f32 %v506, %v678
        %v711 = vadd.f32 %v506, %v679
        %v712 = vadd.f32 %v506, %v680
        %v713 = vadd.f32 %v506, %v681
        %v714 = vadd.f32 %v506, %v682
        %v715 = vadd.f32 %v506, %v683
        %v716 = vadd.f32 %v506, %v684
        %v717 = vadd.f32 %v506, %v685
        %v718 = vadd.f32 %v506, %v686
        %v719 = vadd.f32 %v506, %v687
        %v720 = vadd.f32 %v506, %v688
        %v721 = vadd.f32 %v506, %v689
        %v722 = vadd.f32 %v506, %v690
        %v723 = vadd.f32 %v506, %v691
        %v724 = vadd.f32 %v506, %v692
        %v725 = vadd.f32 %v506, %v693
        %v726 = vadd.f32 %v506, %v694
        %v727 = vadd.f32 %v506, %v695
        %v728 = vadd.f32 %v506, %v696
        %v729 = vadd.f32 %v506, %v697
        %v730 = vadd.f32 %v506, %v698
        %v731 = vadd.f32 %v506, %v699
        %v732 = vadd.f32 %v506, %v700
        %733 = vset.pattern.permute.xlu0 1
        %734 = vperm.xlu0 %733, %v471
        %v735 = vpop.permute.xlu0 %734
        %737 = vset.pattern.permute.xlu0 1
        %738 = vperm.xlu0 %737, %v472
        %v739 = vpop.permute.xlu0 %738
        %741 = vset.pattern.permute.xlu0 1
        %742 = vperm.xlu0 %741, %v473
        %v743 = vpop.permute.xlu0 %742
        %745 = vset.pattern.permute.xlu0 1
        %746 = vperm.xlu0 %745, %v474
        %v747 = vpop.permute.xlu0 %746
        %749 = vset.pattern.permute.xlu0 1
        %750 = vperm.xlu0 %749, %v475
        %v751 = vpop.permute.xlu0 %750
        %753 = vset.pattern.permute.xlu0 1
        %754 = vperm.xlu0 %753, %v476
        %v755 = vpop.permute.xlu0 %754
        %757 = vset.pattern.permute.xlu0 1
        %758 = vperm.xlu0 %757, %v477
        %v759 = vpop.permute.xlu0 %758
        %761 = vset.pattern.permute.xlu0 1
        %762 = vperm.xlu0 %761, %v478
        %v763 = vpop.permute.xlu0 %762
        %765 = vset.pattern.permute.xlu0 1
        %766 = vperm.xlu0 %765, %v479
        %v767 = vpop.permute.xlu0 %766
        %769 = vset.pattern.permute.xlu0 1
        %770 = vperm.xlu0 %769, %v480
        %v771 = vpop.permute.xlu0 %770
        %773 = vset.pattern.permute.xlu0 1
        %774 = vperm.xlu0 %773, %v481
        %v775 = vpop.permute.xlu0 %774
        %777 = vset.pattern.permute.xlu0 1
        %778 = vperm.xlu0 %777, %v482
        %v779 = vpop.permute.xlu0 %778
        %781 = vset.pattern.permute.xlu0 1
        %782 = vperm.xlu0 %781, %v483
        %v783 = vpop.permute.xlu0 %782
        %785 = vset.pattern.permute.xlu0 1
        %786 = vperm.xlu0 %785, %v484
        %v787 = vpop.permute.xlu0 %786
        %789 = vset.pattern.permute.xlu0 1
        %790 = vperm.xlu0 %789, %v485
        %v791 = vpop.permute.xlu0 %790
        %793 = vset.pattern.permute.xlu0 1
        %794 = vperm.xlu0 %793, %v486
        %v795 = vpop.permute.xlu0 %794
        %797 = vset.pattern.permute.xlu0 1
        %798 = vperm.xlu0 %797, %v487
        %v799 = vpop.permute.xlu0 %798
        %801 = vset.pattern.permute.xlu0 1
        %802 = vperm.xlu0 %801, %v488
        %v803 = vpop.permute.xlu0 %802
        %805 = vset.pattern.permute.xlu0 1
        %806 = vperm.xlu0 %805, %v489
        %v807 = vpop.permute.xlu0 %806
        %809 = vset.pattern.permute.xlu0 1
        %810 = vperm.xlu0 %809, %v490
        %v811 = vpop.permute.xlu0 %810
        %813 = vset.pattern.permute.xlu0 1
        %814 = vperm.xlu0 %813, %v491
        %v815 = vpop.permute.xlu0 %814
        %817 = vset.pattern.permute.xlu0 1
        %818 = vperm.xlu0 %817, %v492
        %v819 = vpop.permute.xlu0 %818
        %821 = vset.pattern.permute.xlu0 1
        %822 = vperm.xlu0 %821, %v493
        %v823 = vpop.permute.xlu0 %822
        %825 = vset.pattern.permute.xlu0 1
        %826 = vperm.xlu0 %825, %v494
        %v827 = vpop.permute.xlu0 %826
        %829 = vset.pattern.permute.xlu0 1
        %830 = vperm.xlu0 %829, %v495
        %v831 = vpop.permute.xlu0 %830
        %833 = vset.pattern.permute.xlu0 1
        %834 = vperm.xlu0 %833, %v496
        %v835 = vpop.permute.xlu0 %834
        %837 = vset.pattern.permute.xlu0 1
        %838 = vperm.xlu0 %837, %v497
        %v839 = vpop.permute.xlu0 %838
        %841 = vset.pattern.permute.xlu0 1
        %842 = vperm.xlu0 %841, %v498
        %v843 = vpop.permute.xlu0 %842
        %845 = vset.pattern.permute.xlu0 1
        %846 = vperm.xlu0 %845, %v499
        %v847 = vpop.permute.xlu0 %846
        %849 = vset.pattern.permute.xlu0 1
        %850 = vperm.xlu0 %849, %v500
        %v851 = vpop.permute.xlu0 %850
        %853 = vset.pattern.permute.xlu0 1
        %854 = vperm.xlu0 %853, %v501
        %v855 = vpop.permute.xlu0 %854
        %857 = vset.pattern.permute.xlu0 1
        %858 = vperm.xlu0 %857, %v502
        %v859 = vpop.permute.xlu0 %858
        %v861 = vperm.slane %v503, 1
        %v862 = vmul.f32 %v735, %v861
        %v863 = vmul.f32 %v739, %v861
        %v864 = vmul.f32 %v743, %v861
        %v865 = vmul.f32 %v747, %v861
        %v866 = vmul.f32 %v751, %v861
        %v867 = vmul.f32 %v755, %v861
        %v868 = vmul.f32 %v759, %v861
        %v869 = vmul.f32 %v763, %v861
        %v870 = vmul.f32 %v767, %v861
        %v871 = vmul.f32 %v771, %v861
        %v872 = vmul.f32 %v775, %v861
        %v873 = vmul.f32 %v779, %v861
        %v874 = vmul.f32 %v783, %v861
        %v875 = vmul.f32 %v787, %v861
        %v876 = vmul.f32 %v791, %v861
        %v877 = vmul.f32 %v795, %v861
        %v878 = vmul.f32 %v799, %v861
        %v879 = vmul.f32 %v803, %v861
        %v880 = vmul.f32 %v807, %v861
        %v881 = vmul.f32 %v811, %v861
        %v882 = vmul.f32 %v815, %v861
        %v883 = vmul.f32 %v819, %v861
        %v884 = vmul.f32 %v823, %v861
        %v885 = vmul.f32 %v827, %v861
        %v886 = vmul.f32 %v831, %v861
        %v887 = vmul.f32 %v835, %v861
        %v888 = vmul.f32 %v839, %v861
        %v889 = vmul.f32 %v843, %v861
        %v890 = vmul.f32 %v847, %v861
        %v891 = vmul.f32 %v851, %v861
        %v892 = vmul.f32 %v855, %v861
        %v893 = vmul.f32 %v859, %v861
        %v894 = vadd.f32 %v701, %v862
        %v895 = vadd.f32 %v702, %v863
        %v896 = vadd.f32 %v703, %v864
        %v897 = vadd.f32 %v704, %v865
        %v898 = vadd.f32 %v705, %v866
        %v899 = vadd.f32 %v706, %v867
        %v900 = vadd.f32 %v707, %v868
        %v901 = vadd.f32 %v708, %v869
        %v902 = vadd.f32 %v709, %v870
        %v903 = vadd.f32 %v710, %v871
        %v904 = vadd.f32 %v711, %v872
        %v905 = vadd.f32 %v712, %v873
        %v906 = vadd.f32 %v713, %v874
        %v907 = vadd.f32 %v714, %v875
        %v908 = vadd.f32 %v715, %v876
        %v909 = vadd.f32 %v716, %v877
        %v910 = vadd.f32 %v717, %v878
        %v911 = vadd.f32 %v718, %v879
        %v912 = vadd.f32 %v719, %v880
        %v913 = vadd.f32 %v720, %v881
        %v914 = vadd.f32 %v721, %v882
        %v915 = vadd.f32 %v722, %v883
        %v916 = vadd.f32 %v723, %v884
        %v917 = vadd.f32 %v724, %v885
        %v918 = vadd.f32 %v725, %v886
        %v919 = vadd.f32 %v726, %v887
        %v920 = vadd.f32 %v727, %v888
        %v921 = vadd.f32 %v728, %v889
        %v922 = vadd.f32 %v729, %v890
        %v923 = vadd.f32 %v730, %v891
        %v924 = vadd.f32 %v731, %v892
        %v925 = vadd.f32 %v732, %v893
        %926 = vset.pattern.permute.xlu0 2
        %927 = vperm.xlu0 %926, %v471
        %v928 = vpop.permute.xlu0 %927
        %930 = vset.pattern.permute.xlu0 2
        %931 = vperm.xlu0 %930, %v472
        %v932 = vpop.permute.xlu0 %931
        %934 = vset.pattern.permute.xlu0 2
        %935 = vperm.xlu0 %934, %v473
        %v936 = vpop.permute.xlu0 %935
        %938 = vset.pattern.permute.xlu0 2
        %939 = vperm.xlu0 %938, %v474
        %v940 = vpop.permute.xlu0 %939
        %942 = vset.pattern.permute.xlu0 2
        %943 = vperm.xlu0 %942, %v475
        %v944 = vpop.permute.xlu0 %943
        %946 = vset.pattern.permute.xlu0 2
        %947 = vperm.xlu0 %946, %v476
        %v948 = vpop.permute.xlu0 %947
        %950 = vset.pattern.permute.xlu0 2
        %951 = vperm.xlu0 %950, %v477
        %v952 = vpop.permute.xlu0 %951
        %954 = vset.pattern.permute.xlu0 2
        %955 = vperm.xlu0 %954, %v478
        %v956 = vpop.permute.xlu0 %955
        %958 = vset.pattern.permute.xlu0 2
        %959 = vperm.xlu0 %958, %v479
        %v960 = vpop.permute.xlu0 %959
        %962 = vset.pattern.permute.xlu0 2
        %963 = vperm.xlu0 %962, %v480
        %v964 = vpop.permute.xlu0 %963
        %966 = vset.pattern.permute.xlu0 2
        %967 = vperm.xlu0 %966, %v481
        %v968 = vpop.permute.xlu0 %967
        %970 = vset.pattern.permute.xlu0 2
        %971 = vperm.xlu0 %970, %v482
        %v972 = vpop.permute.xlu0 %971
        %974 = vset.pattern.permute.xlu0 2
        %975 = vperm.xlu0 %974, %v483
        %v976 = vpop.permute.xlu0 %975
        %978 = vset.pattern.permute.xlu0 2
        %979 = vperm.xlu0 %978, %v484
        %v980 = vpop.permute.xlu0 %979
        %982 = vset.pattern.permute.xlu0 2
        %983 = vperm.xlu0 %982, %v485
        %v984 = vpop.permute.xlu0 %983
        %986 = vset.pattern.permute.xlu0 2
        %987 = vperm.xlu0 %986, %v486
        %v988 = vpop.permute.xlu0 %987
        %990 = vset.pattern.permute.xlu0 2
        %991 = vperm.xlu0 %990, %v487
        %v992 = vpop.permute.xlu0 %991
        %994 = vset.pattern.permute.xlu0 2
        %995 = vperm.xlu0 %994, %v488
        %v996 = vpop.permute.xlu0 %995
        %998 = vset.pattern.permute.xlu0 2
        %999 = vperm.xlu0 %998, %v489
        %v1000 = vpop.permute.xlu0 %999
        %1002 = vset.pattern.permute.xlu0 2
        %1003 = vperm.xlu0 %1002, %v490
        %v1004 = vpop.permute.xlu0 %1003
        %1006 = vset.pattern.permute.xlu0 2
        %1007 = vperm.xlu0 %1006, %v491
        %v1008 = vpop.permute.xlu0 %1007
        %1010 = vset.pattern.permute.xlu0 2
        %1011 = vperm.xlu0 %1010, %v492
        %v1012 = vpop.permute.xlu0 %1011
        %1014 = vset.pattern.permute.xlu0 2
        %1015 = vperm.xlu0 %1014, %v493
        %v1016 = vpop.permute.xlu0 %1015
        %1018 = vset.pattern.permute.xlu0 2
        %1019 = vperm.xlu0 %1018, %v494
        %v1020 = vpop.permute.xlu0 %1019
        %1022 = vset.pattern.permute.xlu0 2
        %1023 = vperm.xlu0 %1022, %v495
        %v1024 = vpop.permute.xlu0 %1023
        %1026 = vset.pattern.permute.xlu0 2
        %1027 = vperm.xlu0 %1026, %v496
        %v1028 = vpop.permute.xlu0 %1027
        %1030 = vset.pattern.permute.xlu0 2
        %1031 = vperm.xlu0 %1030, %v497
        %v1032 = vpop.permute.xlu0 %1031
        %1034 = vset.pattern.permute.xlu0 2
        %1035 = vperm.xlu0 %1034, %v498
        %v1036 = vpop.permute.xlu0 %1035
        %1038 = vset.pattern.permute.xlu0 2
        %1039 = vperm.xlu0 %1038, %v499
        %v1040 = vpop.permute.xlu0 %1039
        %1042 = vset.pattern.permute.xlu0 2
        %1043 = vperm.xlu0 %1042, %v500
        %v1044 = vpop.permute.xlu0 %1043
        %1046 = vset.pattern.permute.xlu0 2
        %1047 = vperm.xlu0 %1046, %v501
        %v1048 = vpop.permute.xlu0 %1047
        %1050 = vset.pattern.permute.xlu0 2
        %1051 = vperm.xlu0 %1050, %v502
        %v1052 = vpop.permute.xlu0 %1051
        %v1054 = vperm.slane %v503, 2
        %v1055 = vmul.f32 %v928, %v1054
        %v1056 = vmul.f32 %v932, %v1054
        %v1057 = vmul.f32 %v936, %v1054
        %v1058 = vmul.f32 %v940, %v1054
        %v1059 = vmul.f32 %v944, %v1054
        %v1060 = vmul.f32 %v948, %v1054
        %v1061 = vmul.f32 %v952, %v1054
        %v1062 = vmul.f32 %v956, %v1054
        %v1063 = vmul.f32 %v960, %v1054
        %v1064 = vmul.f32 %v964, %v1054
        %v1065 = vmul.f32 %v968, %v1054
        %v1066 = vmul.f32 %v972, %v1054
        %v1067 = vmul.f32 %v976, %v1054
        %v1068 = vmul.f32 %v980, %v1054
        %v1069 = vmul.f32 %v984, %v1054
        %v1070 = vmul.f32 %v988, %v1054
        %v1071 = vmul.f32 %v992, %v1054
        %v1072 = vmul.f32 %v996, %v1054
        %v1073 = vmul.f32 %v1000, %v1054
        %v1074 = vmul.f32 %v1004, %v1054
        %v1075 = vmul.f32 %v1008, %v1054
        %v1076 = vmul.f32 %v1012, %v1054
        %v1077 = vmul.f32 %v1016, %v1054
        %v1078 = vmul.f32 %v1020, %v1054
        %v1079 = vmul.f32 %v1024, %v1054
        %v1080 = vmul.f32 %v1028, %v1054
        %v1081 = vmul.f32 %v1032, %v1054
        %v1082 = vmul.f32 %v1036, %v1054
        %v1083 = vmul.f32 %v1040, %v1054
        %v1084 = vmul.f32 %v1044, %v1054
        %v1085 = vmul.f32 %v1048, %v1054
        %v1086 = vmul.f32 %v1052, %v1054
        %v1087 = vadd.f32 %v894, %v1055
        %v1088 = vadd.f32 %v895, %v1056
        %v1089 = vadd.f32 %v896, %v1057
        %v1090 = vadd.f32 %v897, %v1058
        %v1091 = vadd.f32 %v898, %v1059
        %v1092 = vadd.f32 %v899, %v1060
        %v1093 = vadd.f32 %v900, %v1061
        %v1094 = vadd.f32 %v901, %v1062
        %v1095 = vadd.f32 %v902, %v1063
        %v1096 = vadd.f32 %v903, %v1064
        %v1097 = vadd.f32 %v904, %v1065
        %v1098 = vadd.f32 %v905, %v1066
        %v1099 = vadd.f32 %v906, %v1067
        %v1100 = vadd.f32 %v907, %v1068
        %v1101 = vadd.f32 %v908, %v1069
        %v1102 = vadd.f32 %v909, %v1070
        %v1103 = vadd.f32 %v910, %v1071
        %v1104 = vadd.f32 %v911, %v1072
        %v1105 = vadd.f32 %v912, %v1073
        %v1106 = vadd.f32 %v913, %v1074
        %v1107 = vadd.f32 %v914, %v1075
        %v1108 = vadd.f32 %v915, %v1076
        %v1109 = vadd.f32 %v916, %v1077
        %v1110 = vadd.f32 %v917, %v1078
        %v1111 = vadd.f32 %v918, %v1079
        %v1112 = vadd.f32 %v919, %v1080
        %v1113 = vadd.f32 %v920, %v1081
        %v1114 = vadd.f32 %v921, %v1082
        %v1115 = vadd.f32 %v922, %v1083
        %v1116 = vadd.f32 %v923, %v1084
        %v1117 = vadd.f32 %v924, %v1085
        %v1118 = vadd.f32 %v925, %v1086
        %1119 = vset.pattern.permute.xlu0 3
        %1120 = vperm.xlu0 %1119, %v471
        %v1121 = vpop.permute.xlu0 %1120
        %1123 = vset.pattern.permute.xlu0 3
        %1124 = vperm.xlu0 %1123, %v472
        %v1125 = vpop.permute.xlu0 %1124
        %1127 = vset.pattern.permute.xlu0 3
        %1128 = vperm.xlu0 %1127, %v473
        %v1129 = vpop.permute.xlu0 %1128
        %1131 = vset.pattern.permute.xlu0 3
        %1132 = vperm.xlu0 %1131, %v474
        %v1133 = vpop.permute.xlu0 %1132
        %1135 = vset.pattern.permute.xlu0 3
        %1136 = vperm.xlu0 %1135, %v475
        %v1137 = vpop.permute.xlu0 %1136
        %1139 = vset.pattern.permute.xlu0 3
        %1140 = vperm.xlu0 %1139, %v476
        %v1141 = vpop.permute.xlu0 %1140
        %1143 = vset.pattern.permute.xlu0 3
        %1144 = vperm.xlu0 %1143, %v477
        %v1145 = vpop.permute.xlu0 %1144
        %1147 = vset.pattern.permute.xlu0 3
        %1148 = vperm.xlu0 %1147, %v478
        %v1149 = vpop.permute.xlu0 %1148
        %1151 = vset.pattern.permute.xlu0 3
        %1152 = vperm.xlu0 %1151, %v479
        %v1153 = vpop.permute.xlu0 %1152
        %1155 = vset.pattern.permute.xlu0 3
        %1156 = vperm.xlu0 %1155, %v480
        %v1157 = vpop.permute.xlu0 %1156
        %1159 = vset.pattern.permute.xlu0 3
        %1160 = vperm.xlu0 %1159, %v481
        %v1161 = vpop.permute.xlu0 %1160
        %1163 = vset.pattern.permute.xlu0 3
        %1164 = vperm.xlu0 %1163, %v482
        %v1165 = vpop.permute.xlu0 %1164
        %1167 = vset.pattern.permute.xlu0 3
        %1168 = vperm.xlu0 %1167, %v483
        %v1169 = vpop.permute.xlu0 %1168
        %1171 = vset.pattern.permute.xlu0 3
        %1172 = vperm.xlu0 %1171, %v484
        %v1173 = vpop.permute.xlu0 %1172
        %1175 = vset.pattern.permute.xlu0 3
        %1176 = vperm.xlu0 %1175, %v485
        %v1177 = vpop.permute.xlu0 %1176
        %1179 = vset.pattern.permute.xlu0 3
        %1180 = vperm.xlu0 %1179, %v486
        %v1181 = vpop.permute.xlu0 %1180
        %1183 = vset.pattern.permute.xlu0 3
        %1184 = vperm.xlu0 %1183, %v487
        %v1185 = vpop.permute.xlu0 %1184
        %1187 = vset.pattern.permute.xlu0 3
        %1188 = vperm.xlu0 %1187, %v488
        %v1189 = vpop.permute.xlu0 %1188
        %1191 = vset.pattern.permute.xlu0 3
        %1192 = vperm.xlu0 %1191, %v489
        %v1193 = vpop.permute.xlu0 %1192
        %1195 = vset.pattern.permute.xlu0 3
        %1196 = vperm.xlu0 %1195, %v490
        %v1197 = vpop.permute.xlu0 %1196
        %1199 = vset.pattern.permute.xlu0 3
        %1200 = vperm.xlu0 %1199, %v491
        %v1201 = vpop.permute.xlu0 %1200
        %1203 = vset.pattern.permute.xlu0 3
        %1204 = vperm.xlu0 %1203, %v492
        %v1205 = vpop.permute.xlu0 %1204
        %1207 = vset.pattern.permute.xlu0 3
        %1208 = vperm.xlu0 %1207, %v493
        %v1209 = vpop.permute.xlu0 %1208
        %1211 = vset.pattern.permute.xlu0 3
        %1212 = vperm.xlu0 %1211, %v494
        %v1213 = vpop.permute.xlu0 %1212
        %1215 = vset.pattern.permute.xlu0 3
        %1216 = vperm.xlu0 %1215, %v495
        %v1217 = vpop.permute.xlu0 %1216
        %1219 = vset.pattern.permute.xlu0 3
        %1220 = vperm.xlu0 %1219, %v496
        %v1221 = vpop.permute.xlu0 %1220
        %1223 = vset.pattern.permute.xlu0 3
        %1224 = vperm.xlu0 %1223, %v497
        %v1225 = vpop.permute.xlu0 %1224
        %1227 = vset.pattern.permute.xlu0 3
        %1228 = vperm.xlu0 %1227, %v498
        %v1229 = vpop.permute.xlu0 %1228
        %1231 = vset.pattern.permute.xlu0 3
        %1232 = vperm.xlu0 %1231, %v499
        %v1233 = vpop.permute.xlu0 %1232
        %1235 = vset.pattern.permute.xlu0 3
        %1236 = vperm.xlu0 %1235, %v500
        %v1237 = vpop.permute.xlu0 %1236
        %1239 = vset.pattern.permute.xlu0 3
        %1240 = vperm.xlu0 %1239, %v501
        %v1241 = vpop.permute.xlu0 %1240
        %1243 = vset.pattern.permute.xlu0 3
        %1244 = vperm.xlu0 %1243, %v502
        %v1245 = vpop.permute.xlu0 %1244
        %v1247 = vperm.slane %v503, 3
        %v1248 = vmul.f32 %v1121, %v1247
        %v1249 = vmul.f32 %v1125, %v1247
        %v1250 = vmul.f32 %v1129, %v1247
        %v1251 = vmul.f32 %v1133, %v1247
        %v1252 = vmul.f32 %v1137, %v1247
        %v1253 = vmul.f32 %v1141, %v1247
        %v1254 = vmul.f32 %v1145, %v1247
        %v1255 = vmul.f32 %v1149, %v1247
        %v1256 = vmul.f32 %v1153, %v1247
        %v1257 = vmul.f32 %v1157, %v1247
        %v1258 = vmul.f32 %v1161, %v1247
        %v1259 = vmul.f32 %v1165, %v1247
        %v1260 = vmul.f32 %v1169, %v1247
        %v1261 = vmul.f32 %v1173, %v1247
        %v1262 = vmul.f32 %v1177, %v1247
        %v1263 = vmul.f32 %v1181, %v1247
        %v1264 = vmul.f32 %v1185, %v1247
        %v1265 = vmul.f32 %v1189, %v1247
        %v1266 = vmul.f32 %v1193, %v1247
        %v1267 = vmul.f32 %v1197, %v1247
        %v1268 = vmul.f32 %v1201, %v1247
        %v1269 = vmul.f32 %v1205, %v1247
        %v1270 = vmul.f32 %v1209, %v1247
        %v1271 = vmul.f32 %v1213, %v1247
        %v1272 = vmul.f32 %v1217, %v1247
        %v1273 = vmul.f32 %v1221, %v1247
        %v1274 = vmul.f32 %v1225, %v1247
        %v1275 = vmul.f32 %v1229, %v1247
        %v1276 = vmul.f32 %v1233, %v1247
        %v1277 = vmul.f32 %v1237, %v1247
        %v1278 = vmul.f32 %v1241, %v1247
        %v1279 = vmul.f32 %v1245, %v1247
        %v1280 = vadd.f32 %v1087, %v1248
        %v1281 = vadd.f32 %v1088, %v1249
        %v1282 = vadd.f32 %v1089, %v1250
        %v1283 = vadd.f32 %v1090, %v1251
        %v1284 = vadd.f32 %v1091, %v1252
        %v1285 = vadd.f32 %v1092, %v1253
        %v1286 = vadd.f32 %v1093, %v1254
        %v1287 = vadd.f32 %v1094, %v1255
        %v1288 = vadd.f32 %v1095, %v1256
        %v1289 = vadd.f32 %v1096, %v1257
        %v1290 = vadd.f32 %v1097, %v1258
        %v1291 = vadd.f32 %v1098, %v1259
        %v1292 = vadd.f32 %v1099, %v1260
        %v1293 = vadd.f32 %v1100, %v1261
        %v1294 = vadd.f32 %v1101, %v1262
        %v1295 = vadd.f32 %v1102, %v1263
        %v1296 = vadd.f32 %v1103, %v1264
        %v1297 = vadd.f32 %v1104, %v1265
        %v1298 = vadd.f32 %v1105, %v1266
        %v1299 = vadd.f32 %v1106, %v1267
        %v1300 = vadd.f32 %v1107, %v1268
        %v1301 = vadd.f32 %v1108, %v1269
        %v1302 = vadd.f32 %v1109, %v1270
        %v1303 = vadd.f32 %v1110, %v1271
        %v1304 = vadd.f32 %v1111, %v1272
        %v1305 = vadd.f32 %v1112, %v1273
        %v1306 = vadd.f32 %v1113, %v1274
        %v1307 = vadd.f32 %v1114, %v1275
        %v1308 = vadd.f32 %v1115, %v1276
        %v1309 = vadd.f32 %v1116, %v1277
        %v1310 = vadd.f32 %v1117, %v1278
        %v1311 = vadd.f32 %v1118, %v1279
        %v1312 = vmax.f32 %v1280, 0.0
        %v1313 = vmax.f32 %v1281, 0.0
        %v1314 = vmax.f32 %v1282, 0.0
        %v1315 = vmax.f32 %v1283, 0.0
        %v1316 = vmax.f32 %v1284, 0.0
        %v1317 = vmax.f32 %v1285, 0.0
        %v1318 = vmax.f32 %v1286, 0.0
        %v1319 = vmax.f32 %v1287, 0.0
        %v1320 = vmax.f32 %v1288, 0.0
        %v1321 = vmax.f32 %v1289, 0.0
        %v1322 = vmax.f32 %v1290, 0.0
        %v1323 = vmax.f32 %v1291, 0.0
        %v1324 = vmax.f32 %v1292, 0.0
        %v1325 = vmax.f32 %v1293, 0.0
        %v1326 = vmax.f32 %v1294, 0.0
        %v1327 = vmax.f32 %v1295, 0.0
        %v1328 = vmax.f32 %v1296, 0.0
        %v1329 = vmax.f32 %v1297, 0.0
        %v1330 = vmax.f32 %v1298, 0.0
        %v1331 = vmax.f32 %v1299, 0.0
        %v1332 = vmax.f32 %v1300, 0.0
        %v1333 = vmax.f32 %v1301, 0.0
        %v1334 = vmax.f32 %v1302, 0.0
        %v1335 = vmax.f32 %v1303, 0.0
        %v1336 = vmax.f32 %v1304, 0.0
        %v1337 = vmax.f32 %v1305, 0.0
        %v1338 = vmax.f32 %v1306, 0.0
        %v1339 = vmax.f32 %v1307, 0.0
        %v1340 = vmax.f32 %v1308, 0.0
        %v1341 = vmax.f32 %v1309, 0.0
        %v1342 = vmax.f32 %v1310, 0.0
        %v1343 = vmax.f32 %v1311, 0.0
        %vm1344 = vcmask 130048
        %1345 = vst.msk [vmem:[#allocation2] sm:$0xff] %vm1344, 0.0
        %1346 = vst.msk [vmem:[#allocation2 + $0x8] sm:$0xff] %vm1344, 0.0
        %1347 = vst.msk [vmem:[#allocation2 + $0x10] sm:$0xff] %vm1344, 0.0
        %1348 = vst.msk [vmem:[#allocation2 + $0x18] sm:$0xff] %vm1344, 0.0
        %1349 = vst.msk [vmem:[#allocation2 + $0x20] sm:$0xff] %vm1344, 0.0
        %1350 = vst.msk [vmem:[#allocation2 + $0x28] sm:$0xff] %vm1344, 0.0
        %1351 = vst.msk [vmem:[#allocation2 + $0x30] sm:$0xff] %vm1344, 0.0
        %1352 = vst.msk [vmem:[#allocation2 + $0x38] sm:$0xff] %vm1344, 0.0
        %1353 = vst.msk [vmem:[#allocation2 + $0x40] sm:$0xff] %vm1344, 0.0
        %1354 = vst.msk [vmem:[#allocation2 + $0x48] sm:$0xff] %vm1344, 0.0
        %1355 = vst.msk [vmem:[#allocation2 + $0x50] sm:$0xff] %vm1344, 0.0
        %1356 = vst.msk [vmem:[#allocation2 + $0x58] sm:$0xff] %vm1344, 0.0
        %1357 = vst.msk [vmem:[#allocation2 + $0x60] sm:$0xff] %vm1344, 0.0
        %1358 = vst.msk [vmem:[#allocation2 + $0x68] sm:$0xff] %vm1344, 0.0
        %1359 = vst.msk [vmem:[#allocation2 + $0x70] sm:$0xff] %vm1344, 0.0
        %1360 = vst.msk [vmem:[#allocation2 + $0x78] sm:$0xff] %vm1344, 0.0
        %1361 = vst.msk [vmem:[#allocation2 + $0x80] sm:$0xff] %vm1344, 0.0
        %1362 = vst.msk [vmem:[#allocation2 + $0x88] sm:$0xff] %vm1344, 0.0
        %1363 = vst.msk [vmem:[#allocation2 + $0x90] sm:$0xff] %vm1344, 0.0
        %1364 = vst.msk [vmem:[#allocation2 + $0x98] sm:$0xff] %vm1344, 0.0
        %1365 = vst.msk [vmem:[#allocation2 + $0xa0] sm:$0xff] %vm1344, 0.0
        %1366 = vst.msk [vmem:[#allocation2 + $0xa8] sm:$0xff] %vm1344, 0.0
        %1367 = vst.msk [vmem:[#allocation2 + $0xb0] sm:$0xff] %vm1344, 0.0
        %1368 = vst.msk [vmem:[#allocation2 + $0xb8] sm:$0xff] %vm1344, 0.0
        %1369 = vst.msk [vmem:[#allocation2 + $0xc0] sm:$0xff] %vm1344, 0.0
        %1370 = vst.msk [vmem:[#allocation2 + $0xc8] sm:$0xff] %vm1344, 0.0
        %1371 = vst.msk [vmem:[#allocation2 + $0xd0] sm:$0xff] %vm1344, 0.0
        %1372 = vst.msk [vmem:[#allocation2 + $0xd8] sm:$0xff] %vm1344, 0.0
        %1373 = vst.msk [vmem:[#allocation2 + $0xe0] sm:$0xff] %vm1344, 0.0
        %1374 = vst.msk [vmem:[#allocation2 + $0xe8] sm:$0xff] %vm1344, 0.0
        %1375 = vst.msk [vmem:[#allocation2 + $0xf0] sm:$0xff] %vm1344, 0.0
        %1376 = vst.msk [vmem:[#allocation2 + $0xf8] sm:$0xff] %vm1344, 0.0
        %1377 = vst.msk [vmem:[#allocation2 + $0x100] sm:$0xff] %vm1344, 0.0
        %1378 = vst.msk [vmem:[#allocation2 + $0x108] sm:$0xff] %vm1344, 0.0
        %1379 = vst.msk [vmem:[#allocation2 + $0x110] sm:$0xff] %vm1344, 0.0
        %1380 = vst.msk [vmem:[#allocation2 + $0x118] sm:$0xff] %vm1344, 0.0
        %1381 = vst.msk [vmem:[#allocation2 + $0x120] sm:$0xff] %vm1344, 0.0
        %1382 = vst.msk [vmem:[#allocation2 + $0x128] sm:$0xff] %vm1344, 0.0
        %1383 = vst.msk [vmem:[#allocation2 + $0x130] sm:$0xff] %vm1344, 0.0
        %1384 = vst.msk [vmem:[#allocation2 + $0x138] sm:$0xff] %vm1344, 0.0
        %1385 = vst.msk [vmem:[#allocation2 + $0x140] sm:$0xff] %vm1344, 0.0
        %1386 = vst.msk [vmem:[#allocation2 + $0x148] sm:$0xff] %vm1344, 0.0
        %1387 = vst.msk [vmem:[#allocation2 + $0x150] sm:$0xff] %vm1344, 0.0
        %1388 = vst.msk [vmem:[#allocation2 + $0x158] sm:$0xff] %vm1344, 0.0
        %1389 = vst.msk [vmem:[#allocation2 + $0x160] sm:$0xff] %vm1344, 0.0
        %1390 = vst.msk [vmem:[#allocation2 + $0x168] sm:$0xff] %vm1344, 0.0
        %1391 = vst.msk [vmem:[#allocation2 + $0x170] sm:$0xff] %vm1344, 0.0
        %1392 = vst.msk [vmem:[#allocation2 + $0x178] sm:$0xff] %vm1344, 0.0
        %1393 = vst.msk [vmem:[#allocation2 + $0x180] sm:$0xff] %vm1344, 0.0
        %1394 = vst.msk [vmem:[#allocation2 + $0x188] sm:$0xff] %vm1344, 0.0
        %1395 = vst.msk [vmem:[#allocation2 + $0x190] sm:$0xff] %vm1344, 0.0
        %1396 = vst.msk [vmem:[#allocation2 + $0x198] sm:$0xff] %vm1344, 0.0
        %1397 = vst.msk [vmem:[#allocation2 + $0x1a0] sm:$0xff] %vm1344, 0.0
        %1398 = vst.msk [vmem:[#allocation2 + $0x1a8] sm:$0xff] %vm1344, 0.0
        %1399 = vst.msk [vmem:[#allocation2 + $0x1b0] sm:$0xff] %vm1344, 0.0
        %1400 = vst.msk [vmem:[#allocation2 + $0x1b8] sm:$0xff] %vm1344, 0.0
        %1401 = vst.msk [vmem:[#allocation2 + $0x1c0] sm:$0xff] %vm1344, 0.0
        %1402 = vst.msk [vmem:[#allocation2 + $0x1c8] sm:$0xff] %vm1344, 0.0
        %1403 = vst.msk [vmem:[#allocation2 + $0x1d0] sm:$0xff] %vm1344, 0.0
        %1404 = vst.msk [vmem:[#allocation2 + $0x1d8] sm:$0xff] %vm1344, 0.0
        %1405 = vst.msk [vmem:[#allocation2 + $0x1e0] sm:$0xff] %vm1344, 0.0
        %1406 = vst.msk [vmem:[#allocation2 + $0x1e8] sm:$0xff] %vm1344, 0.0
        %1407 = vst.msk [vmem:[#allocation2 + $0x1f0] sm:$0xff] %vm1344, 0.0
        %1408 = vst.msk [vmem:[#allocation2 + $0x1f8] sm:$0xff] %vm1344, 0.0
        %1409 = vst.msk [vmem:[#allocation2 + $0x200] sm:$0xff] %vm1344, 0.0
        %1410 = vst.msk [vmem:[#allocation2 + $0x208] sm:$0xff] %vm1344, 0.0
        %1411 = vst.msk [vmem:[#allocation2 + $0x210] sm:$0xff] %vm1344, 0.0
        %1412 = vst.msk [vmem:[#allocation2 + $0x218] sm:$0xff] %vm1344, 0.0
        %1413 = vst.msk [vmem:[#allocation2 + $0x220] sm:$0xff] %vm1344, 0.0
        %1414 = vst.msk [vmem:[#allocation2 + $0x228] sm:$0xff] %vm1344, 0.0
        %1415 = vst.msk [vmem:[#allocation2 + $0x230] sm:$0xff] %vm1344, 0.0
        %1416 = vst.msk [vmem:[#allocation2 + $0x238] sm:$0xff] %vm1344, 0.0
        %s1417 = scalar_lea.vmem [#allocation2], 32
        %1418 = vst.msk [vmem:[%s1417 + $0x8] sm:$0xff] %vm1344, %v1312
        %1419 = vst.msk [vmem:[%s1417 + $0x10] sm:$0xff] %vm1344, %v1313
        %1420 = vst.msk [vmem:[%s1417 + $0x28] sm:$0xff] %vm1344, %v1314
        %1421 = vst.msk [vmem:[%s1417 + $0x30] sm:$0xff] %vm1344, %v1315
        %1422 = vst.msk [vmem:[%s1417 + $0x48] sm:$0xff] %vm1344, %v1316
        %1423 = vst.msk [vmem:[%s1417 + $0x50] sm:$0xff] %vm1344, %v1317
        %1424 = vst.msk [vmem:[%s1417 + $0x68] sm:$0xff] %vm1344, %v1318
        %1425 = vst.msk [vmem:[%s1417 + $0x70] sm:$0xff] %vm1344, %v1319
        %1426 = vst.msk [vmem:[%s1417 + $0x88] sm:$0xff] %vm1344, %v1320
        %1427 = vst.msk [vmem:[%s1417 + $0x90] sm:$0xff] %vm1344, %v1321
        %1428 = vst.msk [vmem:[%s1417 + $0xa8] sm:$0xff] %vm1344, %v1322
        %1429 = vst.msk [vmem:[%s1417 + $0xb0] sm:$0xff] %vm1344, %v1323
        %1430 = vst.msk [vmem:[%s1417 + $0xc8] sm:$0xff] %vm1344, %v1324
        %1431 = vst.msk [vmem:[%s1417 + $0xd0] sm:$0xff] %vm1344, %v1325
        %1432 = vst.msk [vmem:[%s1417 + $0xe8] sm:$0xff] %vm1344, %v1326
        %1433 = vst.msk [vmem:[%s1417 + $0xf0] sm:$0xff] %vm1344, %v1327
        %1434 = vst.msk [vmem:[%s1417 + $0x108] sm:$0xff] %vm1344, %v1328
        %1435 = vst.msk [vmem:[%s1417 + $0x110] sm:$0xff] %vm1344, %v1329
        %1436 = vst.msk [vmem:[%s1417 + $0x128] sm:$0xff] %vm1344, %v1330
        %1437 = vst.msk [vmem:[%s1417 + $0x130] sm:$0xff] %vm1344, %v1331
        %1438 = vst.msk [vmem:[%s1417 + $0x148] sm:$0xff] %vm1344, %v1332
        %1439 = vst.msk [vmem:[%s1417 + $0x150] sm:$0xff] %vm1344, %v1333
        %1440 = vst.msk [vmem:[%s1417 + $0x168] sm:$0xff] %vm1344, %v1334
        %1441 = vst.msk [vmem:[%s1417 + $0x170] sm:$0xff] %vm1344, %v1335
        %1442 = vst.msk [vmem:[%s1417 + $0x188] sm:$0xff] %vm1344, %v1336
        %1443 = vst.msk [vmem:[%s1417 + $0x190] sm:$0xff] %vm1344, %v1337
        %1444 = vst.msk [vmem:[%s1417 + $0x1a8] sm:$0xff] %vm1344, %v1338
        %1445 = vst.msk [vmem:[%s1417 + $0x1b0] sm:$0xff] %vm1344, %v1339
        %1446 = vst.msk [vmem:[%s1417 + $0x1c8] sm:$0xff] %vm1344, %v1340
        %1447 = vst.msk [vmem:[%s1417 + $0x1d0] sm:$0xff] %vm1344, %v1341
        %1448 = vst.msk [vmem:[%s1417 + $0x1e8] sm:$0xff] %vm1344, %v1342
        %1449 = vst.msk [vmem:[%s1417 + $0x1f0] sm:$0xff] %vm1344, %v1343
        %v1450 = vld [vmem:[#allocation2] sm:$0xff]
        %v1451 = vld [vmem:[#allocation2 + $0x8] sm:$0xff]
        %v1452 = vld [vmem:[#allocation2 + $0x10] sm:$0xff]
        %v1453 = vld [vmem:[#allocation2 + $0x18] sm:$0xff]
        %v1454 = vld [vmem:[#allocation2 + $0x20] sm:$0xff]
        %v1455 = vld [vmem:[#allocation2 + $0x28] sm:$0xff]
        %v1456 = vld [vmem:[#allocation2 + $0x30] sm:$0xff]
        %v1457 = vld [vmem:[#allocation2 + $0x38] sm:$0xff]
        %v1458 = vld [vmem:[#allocation2 + $0x40] sm:$0xff]
        %v1459 = vld [vmem:[#allocation2 + $0x48] sm:$0xff]
        %v1460 = vld [vmem:[#allocation2 + $0x50] sm:$0xff]
        %v1461 = vld [vmem:[#allocation2 + $0x58] sm:$0xff]
        %v1462 = vld [vmem:[#allocation2 + $0x60] sm:$0xff]
        %v1463 = vld [vmem:[#allocation2 + $0x68] sm:$0xff]
        %v1464 = vld [vmem:[#allocation2 + $0x70] sm:$0xff]
        %v1465 = vld [vmem:[#allocation2 + $0x78] sm:$0xff]
        %v1466 = vld [vmem:[#allocation2 + $0x80] sm:$0xff]
        %v1467 = vld [vmem:[#allocation2 + $0x88] sm:$0xff]
        %v1468 = vld [vmem:[#allocation2 + $0x90] sm:$0xff]
        %v1469 = vld [vmem:[#allocation2 + $0x98] sm:$0xff]
        %v1470 = vld [vmem:[#allocation2 + $0xa0] sm:$0xff]
        %v1471 = vld [vmem:[#allocation2 + $0xa8] sm:$0xff]
        %v1472 = vld [vmem:[#allocation2 + $0xb0] sm:$0xff]
        %v1473 = vld [vmem:[#allocation2 + $0xb8] sm:$0xff]
        %v1474 = vld [vmem:[#allocation2 + $0xc0] sm:$0xff]
        %v1475 = vld [vmem:[#allocation2 + $0xc8] sm:$0xff]
        %v1476 = vld [vmem:[#allocation2 + $0xd0] sm:$0xff]
        %v1477 = vld [vmem:[#allocation2 + $0xd8] sm:$0xff]
        %v1478 = vld [vmem:[#allocation2 + $0xe0] sm:$0xff]
        %v1479 = vld [vmem:[#allocation2 + $0xe8] sm:$0xff]
        %v1480 = vld [vmem:[#allocation2 + $0xf0] sm:$0xff]
        %v1481 = vld [vmem:[#allocation2 + $0xf8] sm:$0xff]
        %v1482 = vld [vmem:[#allocation2 + $0x100] sm:$0xff]
        %v1483 = vld [vmem:[#allocation2 + $0x108] sm:$0xff]
        %v1484 = vld [vmem:[#allocation2 + $0x110] sm:$0xff]
        %v1485 = vld [vmem:[#allocation2 + $0x118] sm:$0xff]
        %v1486 = vld [vmem:[#allocation2 + $0x120] sm:$0xff]
        %v1487 = vld [vmem:[#allocation2 + $0x128] sm:$0xff]
        %v1488 = vld [vmem:[#allocation2 + $0x130] sm:$0xff]
        %v1489 = vld [vmem:[#allocation2 + $0x138] sm:$0xff]
        %v1490 = vld [vmem:[#allocation2 + $0x140] sm:$0xff]
        %v1491 = vld [vmem:[#allocation2 + $0x148] sm:$0xff]
        %v1492 = vld [vmem:[#allocation2 + $0x150] sm:$0xff]
        %v1493 = vld [vmem:[#allocation2 + $0x158] sm:$0xff]
        %v1494 = vld [vmem:[#allocation2 + $0x160] sm:$0xff]
        %v1495 = vld [vmem:[#allocation2 + $0x168] sm:$0xff]
        %v1496 = vld [vmem:[#allocation2 + $0x170] sm:$0xff]
        %v1497 = vld [vmem:[#allocation2 + $0x178] sm:$0xff]
        %v1498 = vld [vmem:[#allocation2 + $0x180] sm:$0xff]
        %v1499 = vld [vmem:[#allocation2 + $0x188] sm:$0xff]
        %v1500 = vld [vmem:[#allocation2 + $0x190] sm:$0xff]
        %v1501 = vld [vmem:[#allocation2 + $0x198] sm:$0xff]
        %v1502 = vld [vmem:[#allocation2 + $0x1a0] sm:$0xff]
        %v1503 = vld [vmem:[#allocation2 + $0x1a8] sm:$0xff]
        %v1504 = vld [vmem:[#allocation2 + $0x1b0] sm:$0xff]
        %v1505 = vld [vmem:[#allocation2 + $0x1b8] sm:$0xff]
        %v1506 = vld [vmem:[#allocation2 + $0x1c0] sm:$0xff]
        %v1507 = vld [vmem:[#allocation2 + $0x1c8] sm:$0xff]
        %v1508 = vld [vmem:[#allocation2 + $0x1d0] sm:$0xff]
        %v1509 = vld [vmem:[#allocation2 + $0x1d8] sm:$0xff]
        %v1510 = vld [vmem:[#allocation2 + $0x1e0] sm:$0xff]
        %v1511 = vld [vmem:[#allocation2 + $0x1e8] sm:$0xff]
        %v1512 = vld [vmem:[#allocation2 + $0x1f0] sm:$0xff]
        %v1513 = vld [vmem:[#allocation2 + $0x1f8] sm:$0xff]
        %v1514 = vld [vmem:[#allocation2 + $0x200] sm:$0xff]
        %v1515 = vld [vmem:[#allocation2 + $0x208] sm:$0xff]
        %v1516 = vld [vmem:[#allocation2 + $0x210] sm:$0xff]
        %v1517 = vld [vmem:[#allocation2 + $0x218] sm:$0xff]
        %v1518 = vld [vmem:[#allocation2 + $0x220] sm:$0xff]
        %v1519 = vld [vmem:[#allocation2 + $0x228] sm:$0xff]
        %v1520 = vld [vmem:[#allocation2 + $0x230] sm:$0xff]
        %v1521 = vld [vmem:[#allocation2 + $0x238] sm:$0xff]
        %v1522 = vld [vmem:[#allocation7] sm:$0x1]
        %v1524 = vperm.slane %v1522, 0
        %vm1574 = vcmask 1040384
        %v1575 = vrot.slane %v1450, 7
        %v1576 = vrot.slane %v1451, 7
        %v1577 = vsel %vm1574, %v1575, %v1576
        %v1578 = vrot.slane %v1452, 7
        %v1579 = vsel %vm1574, %v1576, %v1578
        %v1580 = vrot.slane %v1454, 7
        %v1581 = vrot.slane %v1455, 7
        %v1582 = vsel %vm1574, %v1580, %v1581
        %v1583 = vrot.slane %v1456, 7
        %v1584 = vsel %vm1574, %v1581, %v1583
        %v1585 = vrot.slane %v1458, 7
        %v1586 = vrot.slane %v1459, 7
        %v1587 = vsel %vm1574, %v1585, %v1586
        %v1588 = vrot.slane %v1460, 7
        %v1589 = vsel %vm1574, %v1586, %v1588
        %v1590 = vrot.slane %v1462, 7
        %v1591 = vrot.slane %v1463, 7
        %v1592 = vsel %vm1574, %v1590, %v1591
        %v1593 = vrot.slane %v1464, 7
        %v1594 = vsel %vm1574, %v1591, %v1593
        %v1595 = vrot.slane %v1466, 7
        %v1596 = vrot.slane %v1467, 7
        %v1597 = vsel %vm1574, %v1595, %v1596
        %v1598 = vrot.slane %v1468, 7
        %v1599 = vsel %vm1574, %v1596, %v1598
        %v1600 = vrot.slane %v1470, 7
        %v1601 = vrot.slane %v1471, 7
        %v1602 = vsel %vm1574, %v1600, %v1601
        %v1603 = vrot.slane %v1472, 7
        %v1604 = vsel %vm1574, %v1601, %v1603
        %v1605 = vrot.slane %v1474, 7
        %v1606 = vrot.slane %v1475, 7
        %v1607 = vsel %vm1574, %v1605, %v1606
        %v1608 = vrot.slane %v1476, 7
        %v1609 = vsel %vm1574, %v1606, %v1608
        %v1610 = vrot.slane %v1478, 7
        %v1611 = vrot.slane %v1479, 7
        %v1612 = vsel %vm1574, %v1610, %v1611
        %v1613 = vrot.slane %v1480, 7
        %v1614 = vsel %vm1574, %v1611, %v1613
        %v1615 = vrot.slane %v1482, 7
        %v1616 = vrot.slane %v1483, 7
        %v1617 = vsel %vm1574, %v1615, %v1616
        %v1618 = vrot.slane %v1484, 7
        %v1619 = vsel %vm1574, %v1616, %v1618
        %v1620 = vrot.slane %v1486, 7
        %v1621 = vrot.slane %v1487, 7
        %v1622 = vsel %vm1574, %v1620, %v1621
        %v1623 = vrot.slane %v1488, 7
        %v1624 = vsel %vm1574, %v1621, %v1623
        %v1625 = vrot.slane %v1490, 7
        %v1626 = vrot.slane %v1491, 7
        %v1627 = vsel %vm1574, %v1625, %v1626
        %v1628 = vrot.slane %v1492, 7
        %v1629 = vsel %vm1574, %v1626, %v1628
        %v1630 = vrot.slane %v1494, 7
        %v1631 = vrot.slane %v1495, 7
        %v1632 = vsel %vm1574, %v1630, %v1631
        %v1633 = vrot.slane %v1496, 7
        %v1634 = vsel %vm1574, %v1631, %v1633
        %v1635 = vrot.slane %v1498, 7
        %v1636 = vrot.slane %v1499, 7
        %v1637 = vsel %vm1574, %v1635, %v1636
        %v1638 = vrot.slane %v1500, 7
        %v1639 = vsel %vm1574, %v1636, %v1638
        %v1640 = vrot.slane %v1502, 7
        %v1641 = vrot.slane %v1503, 7
        %v1642 = vsel %vm1574, %v1640, %v1641
        %v1643 = vrot.slane %v1504, 7
        %v1644 = vsel %vm1574, %v1641, %v1643
        %v1645 = vrot.slane %v1506, 7
        %v1646 = vrot.slane %v1507, 7
        %v1647 = vsel %vm1574, %v1645, %v1646
        %v1648 = vrot.slane %v1508, 7
        %v1649 = vsel %vm1574, %v1646, %v1648
        %v1650 = vrot.slane %v1510, 7
        %v1651 = vrot.slane %v1511, 7
        %v1652 = vsel %vm1574, %v1650, %v1651
        %v1653 = vrot.slane %v1512, 7
        %v1654 = vsel %vm1574, %v1651, %v1653
        %v1655 = vld [vmem:[%s3] sm:$0xff]
        %v1656 = vld [vmem:[%s3 + $0x8] sm:$0xff]
        %v1657 = vsel %vm1344, %v1577, 0
        %v1659 = vsel %vm1344, %v1579, 0
        %v1661 = vsel %vm1344, %v1582, 0
        %v1663 = vsel %vm1344, %v1584, 0
        %v1665 = vsel %vm1344, %v1587, 0
        %v1667 = vsel %vm1344, %v1589, 0
        %v1669 = vsel %vm1344, %v1592, 0
        %v1671 = vsel %vm1344, %v1594, 0
        %v1673 = vsel %vm1344, %v1597, 0
        %v1675 = vsel %vm1344, %v1599, 0
        %v1677 = vsel %vm1344, %v1602, 0
        %v1679 = vsel %vm1344, %v1604, 0
        %v1681 = vsel %vm1344, %v1607, 0
        %v1683 = vsel %vm1344, %v1609, 0
        %v1685 = vsel %vm1344, %v1612, 0
        %v1687 = vsel %vm1344, %v1614, 0
        %v1689 = vsel %vm1344, %v1617, 0
        %v1691 = vsel %vm1344, %v1619, 0
        %v1693 = vsel %vm1344, %v1622, 0
        %v1695 = vsel %vm1344, %v1624, 0
        %v1697 = vsel %vm1344, %v1627, 0
        %v1699 = vsel %vm1344, %v1629, 0
        %v1701 = vsel %vm1344, %v1632, 0
        %v1703 = vsel %vm1344, %v1634, 0
        %v1705 = vsel %vm1344, %v1637, 0
        %v1707 = vsel %vm1344, %v1639, 0
        %v1709 = vsel %vm1344, %v1642, 0
        %v1711 = vsel %vm1344, %v1644, 0
        %v1713 = vsel %vm1344, %v1647, 0
        %v1715 = vsel %vm1344, %v1649, 0
        %v1717 = vsel %vm1344, %v1652, 0
        %v1719 = vsel %vm1344, %v1654, 0
        %1721 = vmatpush.msra.mxu0 0.0
        %1722 = vmatpush.msra.mxu0 0.0
        %1723 = vmatpush.msra.mxu0 0.0
        %1724 = vmatpush.msra.mxu0 0.0
        %1725 = vmatpush.msra.mxu0 0.0
        %1726 = vmatpush.msra.mxu0 0.0
        %1727 = vmatpush.msra.mxu0 0.0
        %1728 = vmatpush.msra.mxu0 0.0
        %1729 = vmatpush.msra.mxu0 0.0
        %1730 = vmatpush.msra.mxu0 0.0
        %1731 = vmatpush.msra.mxu0 0.0
        %1732 = vmatpush.msra.mxu0 0.0
        %1733 = vmatpush.msra.mxu0 0.0
        %1734 = vmatpush.msra.mxu0 0.0
        %1735 = vmatpush.msra.mxu0 %v1656
        %1736 = vmatpush.msra.mxu0 %v1655
        %1737 = vmatmul.f32.gmra.mxu0 %v1657
        %v1738 = vpop.f32.mrf.mxu0
        %v1739 = vadd.f32 0.0, %v1738
        %1740 = vmatmul.f32.gmra.mxu0 %v1659
        %v1741 = vpop.f32.mrf.mxu0
        %v1742 = vadd.f32 0.0, %v1741
        %1743 = vmatmul.f32.gmra.mxu0 %v1661
        %v1744 = vpop.f32.mrf.mxu0
        %v1745 = vadd.f32 0.0, %v1744
        %1746 = vmatmul.f32.gmra.mxu0 %v1663
        %v1747 = vpop.f32.mrf.mxu0
        %v1748 = vadd.f32 0.0, %v1747
        %1749 = vmatmul.f32.gmra.mxu0 %v1665
        %v1750 = vpop.f32.mrf.mxu0
        %v1751 = vadd.f32 0.0, %v1750
        %1752 = vmatmul.f32.gmra.mxu0 %v1667
        %v1753 = vpop.f32.mrf.mxu0
        %v1754 = vadd.f32 0.0, %v1753
        %1755 = vmatmul.f32.gmra.mxu0 %v1669
        %v1756 = vpop.f32.mrf.mxu0
        %v1757 = vadd.f32 0.0, %v1756
        %1758 = vmatmul.f32.gmra.mxu0 %v1671
        %v1759 = vpop.f32.mrf.mxu0
        %v1760 = vadd.f32 0.0, %v1759
        %1761 = vmatmul.f32.gmra.mxu0 %v1673
        %v1762 = vpop.f32.mrf.mxu0
        %v1763 = vadd.f32 0.0, %v1762
        %1764 = vmatmul.f32.gmra.mxu0 %v1675
        %v1765 = vpop.f32.mrf.mxu0
        %v1766 = vadd.f32 0.0, %v1765
        %1767 = vmatmul.f32.gmra.mxu0 %v1677
        %v1768 = vpop.f32.mrf.mxu0
        %v1769 = vadd.f32 0.0, %v1768
        %1770 = vmatmul.f32.gmra.mxu0 %v1679
        %v1771 = vpop.f32.mrf.mxu0
        %v1772 = vadd.f32 0.0, %v1771
        %1773 = vmatmul.f32.gmra.mxu0 %v1681
        %v1774 = vpop.f32.mrf.mxu0
        %v1775 = vadd.f32 0.0, %v1774
        %1776 = vmatmul.f32.gmra.mxu0 %v1683
        %v1777 = vpop.f32.mrf.mxu0
        %v1778 = vadd.f32 0.0, %v1777
        %1779 = vmatmul.f32.gmra.mxu0 %v1685
        %v1780 = vpop.f32.mrf.mxu0
        %v1781 = vadd.f32 0.0, %v1780
        %1782 = vmatmul.f32.gmra.mxu0 %v1687
        %v1783 = vpop.f32.mrf.mxu0
        %v1784 = vadd.f32 0.0, %v1783
        %1785 = vmatmul.f32.gmra.mxu0 %v1689
        %v1786 = vpop.f32.mrf.mxu0
        %v1787 = vadd.f32 0.0, %v1786
        %1788 = vmatmul.f32.gmra.mxu0 %v1691
        %v1789 = vpop.f32.mrf.mxu0
        %v1790 = vadd.f32 0.0, %v1789
        %1791 = vmatmul.f32.gmra.mxu0 %v1693
        %v1792 = vpop.f32.mrf.mxu0
        %v1793 = vadd.f32 0.0, %v1792
        %1794 = vmatmul.f32.gmra.mxu0 %v1695
        %v1795 = vpop.f32.mrf.mxu0
        %v1796 = vadd.f32 0.0, %v1795
        %1797 = vmatmul.f32.gmra.mxu0 %v1697
        %v1798 = vpop.f32.mrf.mxu0
        %v1799 = vadd.f32 0.0, %v1798
        %1800 = vmatmul.f32.gmra.mxu0 %v1699
        %v1801 = vpop.f32.mrf.mxu0
        %v1802 = vadd.f32 0.0, %v1801
        %1803 = vmatmul.f32.gmra.mxu0 %v1701
        %v1804 = vpop.f32.mrf.mxu0
        %v1805 = vadd.f32 0.0, %v1804
        %1806 = vmatmul.f32.gmra.mxu0 %v1703
        %v1807 = vpop.f32.mrf.mxu0
        %v1808 = vadd.f32 0.0, %v1807
        %1809 = vmatmul.f32.gmra.mxu0 %v1705
        %v1810 = vpop.f32.mrf.mxu0
        %v1811 = vadd.f32 0.0, %v1810
        %1812 = vmatmul.f32.gmra.mxu0 %v1707
        %v1813 = vpop.f32.mrf.mxu0
        %v1814 = vadd.f32 0.0, %v1813
        %1815 = vmatmul.f32.gmra.mxu0 %v1709
        %v1816 = vpop.f32.mrf.mxu0
        %v1817 = vadd.f32 0.0, %v1816
        %1818 = vmatmul.f32.gmra.mxu0 %v1711
        %v1819 = vpop.f32.mrf.mxu0
        %v1820 = vadd.f32 0.0, %v1819
        %1821 = vmatmul.f32.gmra.mxu0 %v1713
        %v1822 = vpop.f32.mrf.mxu0
        %v1823 = vadd.f32 0.0, %v1822
        %1824 = vmatmul.f32.gmra.mxu0 %v1715
        %v1825 = vpop.f32.mrf.mxu0
        %v1826 = vadd.f32 0.0, %v1825
        %1827 = vmatmul.f32.gmra.mxu0 %v1717
        %v1828 = vpop.f32.mrf.mxu0
        %v1829 = vadd.f32 0.0, %v1828
        %1830 = vmatmul.f32.gmra.mxu0 %v1719
        %v1831 = vpop.f32.mrf.mxu0
        %v1832 = vadd.f32 0.0, %v1831
        %1833 = vdwg.mxu0
        %v1834 = vadd.f32 %v1524, %v1739
        %v1835 = vadd.f32 %v1524, %v1742
        %v1836 = vadd.f32 %v1524, %v1745
        %v1837 = vadd.f32 %v1524, %v1748
        %v1838 = vadd.f32 %v1524, %v1751
        %v1839 = vadd.f32 %v1524, %v1754
        %v1840 = vadd.f32 %v1524, %v1757
        %v1841 = vadd.f32 %v1524, %v1760
        %v1842 = vadd.f32 %v1524, %v1763
        %v1843 = vadd.f32 %v1524, %v1766
        %v1844 = vadd.f32 %v1524, %v1769
        %v1845 = vadd.f32 %v1524, %v1772
        %v1846 = vadd.f32 %v1524, %v1775
        %v1847 = vadd.f32 %v1524, %v1778
        %v1848 = vadd.f32 %v1524, %v1781
        %v1849 = vadd.f32 %v1524, %v1784
        %v1850 = vadd.f32 %v1524, %v1787
        %v1851 = vadd.f32 %v1524, %v1790
        %v1852 = vadd.f32 %v1524, %v1793
        %v1853 = vadd.f32 %v1524, %v1796
        %v1854 = vadd.f32 %v1524, %v1799
        %v1855 = vadd.f32 %v1524, %v1802
        %v1856 = vadd.f32 %v1524, %v1805
        %v1857 = vadd.f32 %v1524, %v1808
        %v1858 = vadd.f32 %v1524, %v1811
        %v1859 = vadd.f32 %v1524, %v1814
        %v1860 = vadd.f32 %v1524, %v1817
        %v1861 = vadd.f32 %v1524, %v1820
        %v1862 = vadd.f32 %v1524, %v1823
        %v1863 = vadd.f32 %v1524, %v1826
        %v1864 = vadd.f32 %v1524, %v1829
        %v1865 = vadd.f32 %v1524, %v1832
        %s1866 = scalar_lea.vmem %s3, 16
        %v1867 = vld [vmem:[%s1866] sm:$0xff]
        %v1868 = vld [vmem:[%s1866 + $0x8] sm:$0xff]
        %v1869 = vsel %vm1344, %v1451, 0
        %v1871 = vsel %vm1344, %v1452, 0
        %v1873 = vsel %vm1344, %v1455, 0
        %v1875 = vsel %vm1344, %v1456, 0
        %v1877 = vsel %vm1344, %v1459, 0
        %v1879 = vsel %vm1344, %v1460, 0
        %v1881 = vsel %vm1344, %v1463, 0
        %v1883 = vsel %vm1344, %v1464, 0
        %v1885 = vsel %vm1344, %v1467, 0
        %v1887 = vsel %vm1344, %v1468, 0
        %v1889 = vsel %vm1344, %v1471, 0
        %v1891 = vsel %vm1344, %v1472, 0
        %v1893 = vsel %vm1344, %v1475, 0
        %v1895 = vsel %vm1344, %v1476, 0
        %v1897 = vsel %vm1344, %v1479, 0
        %v1899 = vsel %vm1344, %v1480, 0
        %v1901 = vsel %vm1344, %v1483, 0
        %v1903 = vsel %vm1344, %v1484, 0
        %v1905 = vsel %vm1344, %v1487, 0
        %v1907 = vsel %vm1344, %v1488, 0
        %v1909 = vsel %vm1344, %v1491, 0
        %v1911 = vsel %vm1344, %v1492, 0
        %v1913 = vsel %vm1344, %v1495, 0
        %v1915 = vsel %vm1344, %v1496, 0
        %v1917 = vsel %vm1344, %v1499, 0
        %v1919 = vsel %vm1344, %v1500, 0
        %v1921 = vsel %vm1344, %v1503, 0
        %v1923 = vsel %vm1344, %v1504, 0
        %v1925 = vsel %vm1344, %v1507, 0
        %v1927 = vsel %vm1344, %v1508, 0
        %v1929 = vsel %vm1344, %v1511, 0
        %v1931 = vsel %vm1344, %v1512, 0
        %1933 = vmatpush.msra.mxu0 0.0
        %1934 = vmatpush.msra.mxu0 0.0
        %1935 = vmatpush.msra.mxu0 0.0
        %1936 = vmatpush.msra.mxu0 0.0
        %1937 = vmatpush.msra.mxu0 0.0
        %1938 = vmatpush.msra.mxu0 0.0
        %1939 = vmatpush.msra.mxu0 0.0
        %1940 = vmatpush.msra.mxu0 0.0
        %1941 = vmatpush.msra.mxu0 0.0
        %1942 = vmatpush.msra.mxu0 0.0
        %1943 = vmatpush.msra.mxu0 0.0
        %1944 = vmatpush.msra.mxu0 0.0
        %1945 = vmatpush.msra.mxu0 0.0
        %1946 = vmatpush.msra.mxu0 0.0
        %1947 = vmatpush.msra.mxu0 %v1868
        %1948 = vmatpush.msra.mxu0 %v1867
        %1949 = vmatmul.f32.gmra.mxu0 %v1869
        %v1950 = vpop.f32.mrf.mxu0
        %v1951 = vadd.f32 0.0, %v1950
        %1952 = vmatmul.f32.gmra.mxu0 %v1871
        %v1953 = vpop.f32.mrf.mxu0
        %v1954 = vadd.f32 0.0, %v1953
        %1955 = vmatmul.f32.gmra.mxu0 %v1873
        %v1956 = vpop.f32.mrf.mxu0
        %v1957 = vadd.f32 0.0, %v1956
        %1958 = vmatmul.f32.gmra.mxu0 %v1875
        %v1959 = vpop.f32.mrf.mxu0
        %v1960 = vadd.f32 0.0, %v1959
        %1961 = vmatmul.f32.gmra.mxu0 %v1877
        %v1962 = vpop.f32.mrf.mxu0
        %v1963 = vadd.f32 0.0, %v1962
        %1964 = vmatmul.f32.gmra.mxu0 %v1879
        %v1965 = vpop.f32.mrf.mxu0
        %v1966 = vadd.f32 0.0, %v1965
        %1967 = vmatmul.f32.gmra.mxu0 %v1881
        %v1968 = vpop.f32.mrf.mxu0
        %v1969 = vadd.f32 0.0, %v1968
        %1970 = vmatmul.f32.gmra.mxu0 %v1883
        %v1971 = vpop.f32.mrf.mxu0
        %v1972 = vadd.f32 0.0, %v1971
        %1973 = vmatmul.f32.gmra.mxu0 %v1885
        %v1974 = vpop.f32.mrf.mxu0
        %v1975 = vadd.f32 0.0, %v1974
        %1976 = vmatmul.f32.gmra.mxu0 %v1887
        %v1977 = vpop.f32.mrf.mxu0
        %v1978 = vadd.f32 0.0, %v1977
        %1979 = vmatmul.f32.gmra.mxu0 %v1889
        %v1980 = vpop.f32.mrf.mxu0
        %v1981 = vadd.f32 0.0, %v1980
        %1982 = vmatmul.f32.gmra.mxu0 %v1891
        %v1983 = vpop.f32.mrf.mxu0
        %v1984 = vadd.f32 0.0, %v1983
        %1985 = vmatmul.f32.gmra.mxu0 %v1893
        %v1986 = vpop.f32.mrf.mxu0
        %v1987 = vadd.f32 0.0, %v1986
        %1988 = vmatmul.f32.gmra.mxu0 %v1895
        %v1989 = vpop.f32.mrf.mxu0
        %v1990 = vadd.f32 0.0, %v1989
        %1991 = vmatmul.f32.gmra.mxu0 %v1897
        %v1992 = vpop.f32.mrf.mxu0
        %v1993 = vadd.f32 0.0, %v1992
        %1994 = vmatmul.f32.gmra.mxu0 %v1899
        %v1995 = vpop.f32.mrf.mxu0
        %v1996 = vadd.f32 0.0, %v1995
        %1997 = vmatmul.f32.gmra.mxu0 %v1901
        %v1998 = vpop.f32.mrf.mxu0
        %v1999 = vadd.f32 0.0, %v1998
        %2000 = vmatmul.f32.gmra.mxu0 %v1903
        %v2001 = vpop.f32.mrf.mxu0
        %v2002 = vadd.f32 0.0, %v2001
        %2003 = vmatmul.f32.gmra.mxu0 %v1905
        %v2004 = vpop.f32.mrf.mxu0
        %v2005 = vadd.f32 0.0, %v2004
        %2006 = vmatmul.f32.gmra.mxu0 %v1907
        %v2007 = vpop.f32.mrf.mxu0
        %v2008 = vadd.f32 0.0, %v2007
        %2009 = vmatmul.f32.gmra.mxu0 %v1909
        %v2010 = vpop.f32.mrf.mxu0
        %v2011 = vadd.f32 0.0, %v2010
        %2012 = vmatmul.f32.gmra.mxu0 %v1911
        %v2013 = vpop.f32.mrf.mxu0
        %v2014 = vadd.f32 0.0, %v2013
        %2015 = vmatmul.f32.gmra.mxu0 %v1913
        %v2016 = vpop.f32.mrf.mxu0
        %v2017 = vadd.f32 0.0, %v2016
        %2018 = vmatmul.f32.gmra.mxu0 %v1915
        %v2019 = vpop.f32.mrf.mxu0
        %v2020 = vadd.f32 0.0, %v2019
        %2021 = vmatmul.f32.gmra.mxu0 %v1917
        %v2022 = vpop.f32.mrf.mxu0
        %v2023 = vadd.f32 0.0, %v2022
        %2024 = vmatmul.f32.gmra.mxu0 %v1919
        %v2025 = vpop.f32.mrf.mxu0
        %v2026 = vadd.f32 0.0, %v2025
        %2027 = vmatmul.f32.gmra.mxu0 %v1921
        %v2028 = vpop.f32.mrf.mxu0
        %v2029 = vadd.f32 0.0, %v2028
        %2030 = vmatmul.f32.gmra.mxu0 %v1923
        %v2031 = vpop.f32.mrf.mxu0
        %v2032 = vadd.f32 0.0, %v2031
        %2033 = vmatmul.f32.gmra.mxu0 %v1925
        %v2034 = vpop.f32.mrf.mxu0
        %v2035 = vadd.f32 0.0, %v2034
        %2036 = vmatmul.f32.gmra.mxu0 %v1927
        %v2037 = vpop.f32.mrf.mxu0
        %v2038 = vadd.f32 0.0, %v2037
        %2039 = vmatmul.f32.gmra.mxu0 %v1929
        %v2040 = vpop.f32.mrf.mxu0
        %v2041 = vadd.f32 0.0, %v2040
        %2042 = vmatmul.f32.gmra.mxu0 %v1931
        %v2043 = vpop.f32.mrf.mxu0
        %v2044 = vadd.f32 0.0, %v2043
        %2045 = vdwg.mxu0
        %v2046 = vadd.f32 %v1834, %v1951
        %v2047 = vadd.f32 %v1835, %v1954
        %v2048 = vadd.f32 %v1836, %v1957
        %v2049 = vadd.f32 %v1837, %v1960
        %v2050 = vadd.f32 %v1838, %v1963
        %v2051 = vadd.f32 %v1839, %v1966
        %v2052 = vadd.f32 %v1840, %v1969
        %v2053 = vadd.f32 %v1841, %v1972
        %v2054 = vadd.f32 %v1842, %v1975
        %v2055 = vadd.f32 %v1843, %v1978
        %v2056 = vadd.f32 %v1844, %v1981
        %v2057 = vadd.f32 %v1845, %v1984
        %v2058 = vadd.f32 %v1846, %v1987
        %v2059 = vadd.f32 %v1847, %v1990
        %v2060 = vadd.f32 %v1848, %v1993
        %v2061 = vadd.f32 %v1849, %v1996
        %v2062 = vadd.f32 %v1850, %v1999
        %v2063 = vadd.f32 %v1851, %v2002
        %v2064 = vadd.f32 %v1852, %v2005
        %v2065 = vadd.f32 %v1853, %v2008
        %v2066 = vadd.f32 %v1854, %v2011
        %v2067 = vadd.f32 %v1855, %v2014
        %v2068 = vadd.f32 %v1856, %v2017
        %v2069 = vadd.f32 %v1857, %v2020
        %v2070 = vadd.f32 %v1858, %v2023
        %v2071 = vadd.f32 %v1859, %v2026
        %v2072 = vadd.f32 %v1860, %v2029
        %v2073 = vadd.f32 %v1861, %v2032
        %v2074 = vadd.f32 %v1862, %v2035
        %v2075 = vadd.f32 %v1863, %v2038
        %v2076 = vadd.f32 %v1864, %v2041
        %v2077 = vadd.f32 %v1865, %v2044
        %vm2094 = vcmask 1046528
        %v2095 = vrot.slane %v1451, 1
        %v2096 = vrot.slane %v1452, 1
        %v2097 = vsel %vm2094, %v2095, %v2096
        %v2098 = vrot.slane %v1453, 1
        %v2099 = vsel %vm2094, %v2096, %v2098
        %v2100 = vrot.slane %v1455, 1
        %v2101 = vrot.slane %v1456, 1
        %v2102 = vsel %vm2094, %v2100, %v2101
        %v2103 = vrot.slane %v1457, 1
        %v2104 = vsel %vm2094, %v2101, %v2103
        %v2105 = vrot.slane %v1459, 1
        %v2106 = vrot.slane %v1460, 1
        %v2107 = vsel %vm2094, %v2105, %v2106
        %v2108 = vrot.slane %v1461, 1
        %v2109 = vsel %vm2094, %v2106, %v2108
        %v2110 = vrot.slane %v1463, 1
        %v2111 = vrot.slane %v1464, 1
        %v2112 = vsel %vm2094, %v2110, %v2111
        %v2113 = vrot.slane %v1465, 1
        %v2114 = vsel %vm2094, %v2111, %v2113
        %v2115 = vrot.slane %v1467, 1
        %v2116 = vrot.slane %v1468, 1
        %v2117 = vsel %vm2094, %v2115, %v2116
        %v2118 = vrot.slane %v1469, 1
        %v2119 = vsel %vm2094, %v2116, %v2118
        %v2120 = vrot.slane %v1471, 1
        %v2121 = vrot.slane %v1472, 1
        %v2122 = vsel %vm2094, %v2120, %v2121
        %v2123 = vrot.slane %v1473, 1
        %v2124 = vsel %vm2094, %v2121, %v2123
        %v2125 = vrot.slane %v1475, 1
        %v2126 = vrot.slane %v1476, 1
        %v2127 = vsel %vm2094, %v2125, %v2126
        %v2128 = vrot.slane %v1477, 1
        %v2129 = vsel %vm2094, %v2126, %v2128
        %v2130 = vrot.slane %v1479, 1
        %v2131 = vrot.slane %v1480, 1
        %v2132 = vsel %vm2094, %v2130, %v2131
        %v2133 = vrot.slane %v1481, 1
        %v2134 = vsel %vm2094, %v2131, %v2133
        %v2135 = vrot.slane %v1483, 1
        %v2136 = vrot.slane %v1484, 1
        %v2137 = vsel %vm2094, %v2135, %v2136
        %v2138 = vrot.slane %v1485, 1
        %v2139 = vsel %vm2094, %v2136, %v2138
        %v2140 = vrot.slane %v1487, 1
        %v2141 = vrot.slane %v1488, 1
        %v2142 = vsel %vm2094, %v2140, %v2141
        %v2143 = vrot.slane %v1489, 1
        %v2144 = vsel %vm2094, %v2141, %v2143
        %v2145 = vrot.slane %v1491, 1
        %v2146 = vrot.slane %v1492, 1
        %v2147 = vsel %vm2094, %v2145, %v2146
        %v2148 = vrot.slane %v1493, 1
        %v2149 = vsel %vm2094, %v2146, %v2148
        %v2150 = vrot.slane %v1495, 1
        %v2151 = vrot.slane %v1496, 1
        %v2152 = vsel %vm2094, %v2150, %v2151
        %v2153 = vrot.slane %v1497, 1
        %v2154 = vsel %vm2094, %v2151, %v2153
        %v2155 = vrot.slane %v1499, 1
        %v2156 = vrot.slane %v1500, 1
        %v2157 = vsel %vm2094, %v2155, %v2156
        %v2158 = vrot.slane %v1501, 1
        %v2159 = vsel %vm2094, %v2156, %v2158
        %v2160 = vrot.slane %v1503, 1
        %v2161 = vrot.slane %v1504, 1
        %v2162 = vsel %vm2094, %v2160, %v2161
        %v2163 = vrot.slane %v1505, 1
        %v2164 = vsel %vm2094, %v2161, %v2163
        %v2165 = vrot.slane %v1507, 1
        %v2166 = vrot.slane %v1508, 1
        %v2167 = vsel %vm2094, %v2165, %v2166
        %v2168 = vrot.slane %v1509, 1
        %v2169 = vsel %vm2094, %v2166, %v2168
        %v2170 = vrot.slane %v1511, 1
        %v2171 = vrot.slane %v1512, 1
        %v2172 = vsel %vm2094, %v2170, %v2171
        %v2173 = vrot.slane %v1513, 1
        %v2174 = vsel %vm2094, %v2171, %v2173
        %s2175 = scalar_lea.vmem %s3, 32
        %v2176 = vld [vmem:[%s2175] sm:$0xff]
        %v2177 = vld [vmem:[%s2175 + $0x8] sm:$0xff]
        %v2178 = vsel %vm1344, %v2097, 0
        %v2180 = vsel %vm1344, %v2099, 0
        %v2182 = vsel %vm1344, %v2102, 0
        %v2184 = vsel %vm1344, %v2104, 0
        %v2186 = vsel %vm1344, %v2107, 0
        %v2188 = vsel %vm1344, %v2109, 0
        %v2190 = vsel %vm1344, %v2112, 0
        %v2192 = vsel %vm1344, %v2114, 0
        %v2194 = vsel %vm1344, %v2117, 0
        %v2196 = vsel %vm1344, %v2119, 0
        %v2198 = vsel %vm1344, %v2122, 0
        %v2200 = vsel %vm1344, %v2124, 0
        %v2202 = vsel %vm1344, %v2127, 0
        %v2204 = vsel %vm1344, %v2129, 0
        %v2206 = vsel %vm1344, %v2132, 0
        %v2208 = vsel %vm1344, %v2134, 0
        %v2210 = vsel %vm1344, %v2137, 0
        %v2212 = vsel %vm1344, %v2139, 0
        %v2214 = vsel %vm1344, %v2142, 0
        %v2216 = vsel %vm1344, %v2144, 0
        %v2218 = vsel %vm1344, %v2147, 0
        %v2220 = vsel %vm1344, %v2149, 0
        %v2222 = vsel %vm1344, %v2152, 0
        %v2224 = vsel %vm1344, %v2154, 0
        %v2226 = vsel %vm1344, %v2157, 0
        %v2228 = vsel %vm1344, %v2159, 0
        %v2230 = vsel %vm1344, %v2162, 0
        %v2232 = vsel %vm1344, %v2164, 0
        %v2234 = vsel %vm1344, %v2167, 0
        %v2236 = vsel %vm1344, %v2169, 0
        %v2238 = vsel %vm1344, %v2172, 0
        %v2240 = vsel %vm1344, %v2174, 0
        %2242 = vmatpush.msra.mxu0 0.0
        %2243 = vmatpush.msra.mxu0 0.0
        %2244 = vmatpush.msra.mxu0 0.0
        %2245 = vmatpush.msra.mxu0 0.0
        %2246 = vmatpush.msra.mxu0 0.0
        %2247 = vmatpush.msra.mxu0 0.0
        %2248 = vmatpush.msra.mxu0 0.0
        %2249 = vmatpush.msra.mxu0 0.0
        %2250 = vmatpush.msra.mxu0 0.0
        %2251 = vmatpush.msra.mxu0 0.0
        %2252 = vmatpush.msra.mxu0 0.0
        %2253 = vmatpush.msra.mxu0 0.0
        %2254 = vmatpush.msra.mxu0 0.0
        %2255 = vmatpush.msra.mxu0 0.0
        %2256 = vmatpush.msra.mxu0 %v2177
        %2257 = vmatpush.msra.mxu0 %v2176
        %2258 = vmatmul.f32.gmra.mxu0 %v2178
        %v2259 = vpop.f32.mrf.mxu0
        %v2260 = vadd.f32 0.0, %v2259
        %2261 = vmatmul.f32.gmra.mxu0 %v2180
        %v2262 = vpop.f32.mrf.mxu0
        %v2263 = vadd.f32 0.0, %v2262
        %2264 = vmatmul.f32.gmra.mxu0 %v2182
        %v2265 = vpop.f32.mrf.mxu0
        %v2266 = vadd.f32 0.0, %v2265
        %2267 = vmatmul.f32.gmra.mxu0 %v2184
        %v2268 = vpop.f32.mrf.mxu0
        %v2269 = vadd.f32 0.0, %v2268
        %2270 = vmatmul.f32.gmra.mxu0 %v2186
        %v2271 = vpop.f32.mrf.mxu0
        %v2272 = vadd.f32 0.0, %v2271
        %2273 = vmatmul.f32.gmra.mxu0 %v2188
        %v2274 = vpop.f32.mrf.mxu0
        %v2275 = vadd.f32 0.0, %v2274
        %2276 = vmatmul.f32.gmra.mxu0 %v2190
        %v2277 = vpop.f32.mrf.mxu0
        %v2278 = vadd.f32 0.0, %v2277
        %2279 = vmatmul.f32.gmra.mxu0 %v2192
        %v2280 = vpop.f32.mrf.mxu0
        %v2281 = vadd.f32 0.0, %v2280
        %2282 = vmatmul.f32.gmra.mxu0 %v2194
        %v2283 = vpop.f32.mrf.mxu0
        %v2284 = vadd.f32 0.0, %v2283
        %2285 = vmatmul.f32.gmra.mxu0 %v2196
        %v2286 = vpop.f32.mrf.mxu0
        %v2287 = vadd.f32 0.0, %v2286
        %2288 = vmatmul.f32.gmra.mxu0 %v2198
        %v2289 = vpop.f32.mrf.mxu0
        %v2290 = vadd.f32 0.0, %v2289
        %2291 = vmatmul.f32.gmra.mxu0 %v2200
        %v2292 = vpop.f32.mrf.mxu0
        %v2293 = vadd.f32 0.0, %v2292
        %2294 = vmatmul.f32.gmra.mxu0 %v2202
        %v2295 = vpop.f32.mrf.mxu0
        %v2296 = vadd.f32 0.0, %v2295
        %2297 = vmatmul.f32.gmra.mxu0 %v2204
        %v2298 = vpop.f32.mrf.mxu0
        %v2299 = vadd.f32 0.0, %v2298
        %2300 = vmatmul.f32.gmra.mxu0 %v2206
        %v2301 = vpop.f32.mrf.mxu0
        %v2302 = vadd.f32 0.0, %v2301
        %2303 = vmatmul.f32.gmra.mxu0 %v2208
        %v2304 = vpop.f32.mrf.mxu0
        %v2305 = vadd.f32 0.0, %v2304
        %2306 = vmatmul.f32.gmra.mxu0 %v2210
        %v2307 = vpop.f32.mrf.mxu0
        %v2308 = vadd.f32 0.0, %v2307
        %2309 = vmatmul.f32.gmra.mxu0 %v2212
        %v2310 = vpop.f32.mrf.mxu0
        %v2311 = vadd.f32 0.0, %v2310
        %2312 = vmatmul.f32.gmra.mxu0 %v2214
        %v2313 = vpop.f32.mrf.mxu0
        %v2314 = vadd.f32 0.0, %v2313
        %2315 = vmatmul.f32.gmra.mxu0 %v2216
        %v2316 = vpop.f32.mrf.mxu0
        %v2317 = vadd.f32 0.0, %v2316
        %2318 = vmatmul.f32.gmra.mxu0 %v2218
        %v2319 = vpop.f32.mrf.mxu0
        %v2320 = vadd.f32 0.0, %v2319
        %2321 = vmatmul.f32.gmra.mxu0 %v2220
        %v2322 = vpop.f32.mrf.mxu0
        %v2323 = vadd.f32 0.0, %v2322
        %2324 = vmatmul.f32.gmra.mxu0 %v2222
        %v2325 = vpop.f32.mrf.mxu0
        %v2326 = vadd.f32 0.0, %v2325
        %2327 = vmatmul.f32.gmra.mxu0 %v2224
        %v2328 = vpop.f32.mrf.mxu0
        %v2329 = vadd.f32 0.0, %v2328
        %2330 = vmatmul.f32.gmra.mxu0 %v2226
        %v2331 = vpop.f32.mrf.mxu0
        %v2332 = vadd.f32 0.0, %v2331
        %2333 = vmatmul.f32.gmra.mxu0 %v2228
        %v2334 = vpop.f32.mrf.mxu0
        %v2335 = vadd.f32 0.0, %v2334
        %2336 = vmatmul.f32.gmra.mxu0 %v2230
        %v2337 = vpop.f32.mrf.mxu0
        %v2338 = vadd.f32 0.0, %v2337
        %2339 = vmatmul.f32.gmra.mxu0 %v2232
        %v2340 = vpop.f32.mrf.mxu0
        %v2341 = vadd.f32 0.0, %v2340
        %2342 = vmatmul.f32.gmra.mxu0 %v2234
        %v2343 = vpop.f32.mrf.mxu0
        %v2344 = vadd.f32 0.0, %v2343
        %2345 = vmatmul.f32.gmra.mxu0 %v2236
        %v2346 = vpop.f32.mrf.mxu0
        %v2347 = vadd.f32 0.0, %v2346
        %2348 = vmatmul.f32.gmra.mxu0 %v2238
        %v2349 = vpop.f32.mrf.mxu0
        %v2350 = vadd.f32 0.0, %v2349
        %2351 = vmatmul.f32.gmra.mxu0 %v2240
        %v2352 = vpop.f32.mrf.mxu0
        %v2353 = vadd.f32 0.0, %v2352
        %2354 = vdwg.mxu0
        %v2355 = vadd.f32 %v2046, %v2260
        %v2356 = vadd.f32 %v2047, %v2263
        %v2357 = vadd.f32 %v2048, %v2266
        %v2358 = vadd.f32 %v2049, %v2269
        %v2359 = vadd.f32 %v2050, %v2272
        %v2360 = vadd.f32 %v2051, %v2275
        %v2361 = vadd.f32 %v2052, %v2278
        %v2362 = vadd.f32 %v2053, %v2281
        %v2363 = vadd.f32 %v2054, %v2284
        %v2364 = vadd.f32 %v2055, %v2287
        %v2365 = vadd.f32 %v2056, %v2290
        %v2366 = vadd.f32 %v2057, %v2293
        %v2367 = vadd.f32 %v2058, %v2296
        %v2368 = vadd.f32 %v2059, %v2299
        %v2369 = vadd.f32 %v2060, %v2302
        %v2370 = vadd.f32 %v2061, %v2305
        %v2371 = vadd.f32 %v2062, %v2308
        %v2372 = vadd.f32 %v2063, %v2311
        %v2373 = vadd.f32 %v2064, %v2314
        %v2374 = vadd.f32 %v2065, %v2317
        %v2375 = vadd.f32 %v2066, %v2320
        %v2376 = vadd.f32 %v2067, %v2323
        %v2377 = vadd.f32 %v2068, %v2326
        %v2378 = vadd.f32 %v2069, %v2329
        %v2379 = vadd.f32 %v2070, %v2332
        %v2380 = vadd.f32 %v2071, %v2335
        %v2381 = vadd.f32 %v2072, %v2338
        %v2382 = vadd.f32 %v2073, %v2341
        %v2383 = vadd.f32 %v2074, %v2344
        %v2384 = vadd.f32 %v2075, %v2347
        %v2385 = vadd.f32 %v2076, %v2350
        %v2386 = vadd.f32 %v2077, %v2353
        %v2390 = vrot.slane %v1514, 7
        %v2391 = vrot.slane %v1515, 7
        %v2392 = vsel %vm1574, %v2390, %v2391
        %v2393 = vrot.slane %v1516, 7
        %v2394 = vsel %vm1574, %v2391, %v2393
        %s2395 = scalar_lea.vmem %s3, 48
        %v2396 = vld [vmem:[%s2395] sm:$0xff]
        %v2397 = vld [vmem:[%s2395 + $0x8] sm:$0xff]
        %v2398 = vsel %vm1344, %v2392, 0
        %v2400 = vsel %vm1344, %v2394, 0
        %2402 = vmatpush.msra.mxu0 0.0
        %2403 = vmatpush.msra.mxu0 0.0
        %2404 = vmatpush.msra.mxu0 0.0
        %2405 = vmatpush.msra.mxu0 0.0
        %2406 = vmatpush.msra.mxu0 0.0
        %2407 = vmatpush.msra.mxu0 0.0
        %2408 = vmatpush.msra.mxu0 0.0
        %2409 = vmatpush.msra.mxu0 0.0
        %2410 = vmatpush.msra.mxu0 0.0
        %2411 = vmatpush.msra.mxu0 0.0
        %2412 = vmatpush.msra.mxu0 0.0
        %2413 = vmatpush.msra.mxu0 0.0
        %2414 = vmatpush.msra.mxu0 0.0
        %2415 = vmatpush.msra.mxu0 0.0
        %2416 = vmatpush.msra.mxu0 %v2397
        %2417 = vmatpush.msra.mxu0 %v2396
        %2418 = vmatmul.f32.gmra.mxu0 %v1661
        %v2419 = vpop.f32.mrf.mxu0
        %v2420 = vadd.f32 0.0, %v2419
        %2421 = vmatmul.f32.gmra.mxu0 %v1663
        %v2422 = vpop.f32.mrf.mxu0
        %v2423 = vadd.f32 0.0, %v2422
        %2424 = vmatmul.f32.gmra.mxu0 %v1665
        %v2425 = vpop.f32.mrf.mxu0
        %v2426 = vadd.f32 0.0, %v2425
        %2427 = vmatmul.f32.gmra.mxu0 %v1667
        %v2428 = vpop.f32.mrf.mxu0
        %v2429 = vadd.f32 0.0, %v2428
        %2430 = vmatmul.f32.gmra.mxu0 %v1669
        %v2431 = vpop.f32.mrf.mxu0
        %v2432 = vadd.f32 0.0, %v2431
        %2433 = vmatmul.f32.gmra.mxu0 %v1671
        %v2434 = vpop.f32.mrf.mxu0
        %v2435 = vadd.f32 0.0, %v2434
        %2436 = vmatmul.f32.gmra.mxu0 %v1673
        %v2437 = vpop.f32.mrf.mxu0
        %v2438 = vadd.f32 0.0, %v2437
        %2439 = vmatmul.f32.gmra.mxu0 %v1675
        %v2440 = vpop.f32.mrf.mxu0
        %v2441 = vadd.f32 0.0, %v2440
        %2442 = vmatmul.f32.gmra.mxu0 %v1677
        %v2443 = vpop.f32.mrf.mxu0
        %v2444 = vadd.f32 0.0, %v2443
        %2445 = vmatmul.f32.gmra.mxu0 %v1679
        %v2446 = vpop.f32.mrf.mxu0
        %v2447 = vadd.f32 0.0, %v2446
        %2448 = vmatmul.f32.gmra.mxu0 %v1681
        %v2449 = vpop.f32.mrf.mxu0
        %v2450 = vadd.f32 0.0, %v2449
        %2451 = vmatmul.f32.gmra.mxu0 %v1683
        %v2452 = vpop.f32.mrf.mxu0
        %v2453 = vadd.f32 0.0, %v2452
        %2454 = vmatmul.f32.gmra.mxu0 %v1685
        %v2455 = vpop.f32.mrf.mxu0
        %v2456 = vadd.f32 0.0, %v2455
        %2457 = vmatmul.f32.gmra.mxu0 %v1687
        %v2458 = vpop.f32.mrf.mxu0
        %v2459 = vadd.f32 0.0, %v2458
        %2460 = vmatmul.f32.gmra.mxu0 %v1689
        %v2461 = vpop.f32.mrf.mxu0
        %v2462 = vadd.f32 0.0, %v2461
        %2463 = vmatmul.f32.gmra.mxu0 %v1691
        %v2464 = vpop.f32.mrf.mxu0
        %v2465 = vadd.f32 0.0, %v2464
        %2466 = vmatmul.f32.gmra.mxu0 %v1693
        %v2467 = vpop.f32.mrf.mxu0
        %v2468 = vadd.f32 0.0, %v2467
        %2469 = vmatmul.f32.gmra.mxu0 %v1695
        %v2470 = vpop.f32.mrf.mxu0
        %v2471 = vadd.f32 0.0, %v2470
        %2472 = vmatmul.f32.gmra.mxu0 %v1697
        %v2473 = vpop.f32.mrf.mxu0
        %v2474 = vadd.f32 0.0, %v2473
        %2475 = vmatmul.f32.gmra.mxu0 %v1699
        %v2476 = vpop.f32.mrf.mxu0
        %v2477 = vadd.f32 0.0, %v2476
        %2478 = vmatmul.f32.gmra.mxu0 %v1701
        %v2479 = vpop.f32.mrf.mxu0
        %v2480 = vadd.f32 0.0, %v2479
        %2481 = vmatmul.f32.gmra.mxu0 %v1703
        %v2482 = vpop.f32.mrf.mxu0
        %v2483 = vadd.f32 0.0, %v2482
        %2484 = vmatmul.f32.gmra.mxu0 %v1705
        %v2485 = vpop.f32.mrf.mxu0
        %v2486 = vadd.f32 0.0, %v2485
        %2487 = vmatmul.f32.gmra.mxu0 %v1707
        %v2488 = vpop.f32.mrf.mxu0
        %v2489 = vadd.f32 0.0, %v2488
        %2490 = vmatmul.f32.gmra.mxu0 %v1709
        %v2491 = vpop.f32.mrf.mxu0
        %v2492 = vadd.f32 0.0, %v2491
        %2493 = vmatmul.f32.gmra.mxu0 %v1711
        %v2494 = vpop.f32.mrf.mxu0
        %v2495 = vadd.f32 0.0, %v2494
        %2496 = vmatmul.f32.gmra.mxu0 %v1713
        %v2497 = vpop.f32.mrf.mxu0
        %v2498 = vadd.f32 0.0, %v2497
        %2499 = vmatmul.f32.gmra.mxu0 %v1715
        %v2500 = vpop.f32.mrf.mxu0
        %v2501 = vadd.f32 0.0, %v2500
        %2502 = vmatmul.f32.gmra.mxu0 %v1717
        %v2503 = vpop.f32.mrf.mxu0
        %v2504 = vadd.f32 0.0, %v2503
        %2505 = vmatmul.f32.gmra.mxu0 %v1719
        %v2506 = vpop.f32.mrf.mxu0
        %v2507 = vadd.f32 0.0, %v2506
        %2508 = vmatmul.f32.gmra.mxu0 %v2398
        %v2509 = vpop.f32.mrf.mxu0
        %v2510 = vadd.f32 0.0, %v2509
        %2511 = vmatmul.f32.gmra.mxu0 %v2400
        %v2512 = vpop.f32.mrf.mxu0
        %v2513 = vadd.f32 0.0, %v2512
        %2514 = vdwg.mxu0
        %v2515 = vadd.f32 %v2355, %v2420
        %v2516 = vadd.f32 %v2356, %v2423
        %v2517 = vadd.f32 %v2357, %v2426
        %v2518 = vadd.f32 %v2358, %v2429
        %v2519 = vadd.f32 %v2359, %v2432
        %v2520 = vadd.f32 %v2360, %v2435
        %v2521 = vadd.f32 %v2361, %v2438
        %v2522 = vadd.f32 %v2362, %v2441
        %v2523 = vadd.f32 %v2363, %v2444
        %v2524 = vadd.f32 %v2364, %v2447
        %v2525 = vadd.f32 %v2365, %v2450
        %v2526 = vadd.f32 %v2366, %v2453
        %v2527 = vadd.f32 %v2367, %v2456
        %v2528 = vadd.f32 %v2368, %v2459
        %v2529 = vadd.f32 %v2369, %v2462
        %v2530 = vadd.f32 %v2370, %v2465
        %v2531 = vadd.f32 %v2371, %v2468
        %v2532 = vadd.f32 %v2372, %v2471
        %v2533 = vadd.f32 %v2373, %v2474
        %v2534 = vadd.f32 %v2374, %v2477
        %v2535 = vadd.f32 %v2375, %v2480
        %v2536 = vadd.f32 %v2376, %v2483
        %v2537 = vadd.f32 %v2377, %v2486
        %v2538 = vadd.f32 %v2378, %v2489
        %v2539 = vadd.f32 %v2379, %v2492
        %v2540 = vadd.f32 %v2380, %v2495
        %v2541 = vadd.f32 %v2381, %v2498
        %v2542 = vadd.f32 %v2382, %v2501
        %v2543 = vadd.f32 %v2383, %v2504
        %v2544 = vadd.f32 %v2384, %v2507
        %v2545 = vadd.f32 %v2385, %v2510
        %v2546 = vadd.f32 %v2386, %v2513
        %s2547 = scalar_lea.vmem %s3, 64
        %v2548 = vld [vmem:[%s2547] sm:$0xff]
        %v2549 = vld [vmem:[%s2547 + $0x8] sm:$0xff]
        %v2550 = vsel %vm1344, %v1515, 0
        %v2552 = vsel %vm1344, %v1516, 0
        %2554 = vmatpush.msra.mxu0 0.0
        %2555 = vmatpush.msra.mxu0 0.0
        %2556 = vmatpush.msra.mxu0 0.0
        %2557 = vmatpush.msra.mxu0 0.0
        %2558 = vmatpush.msra.mxu0 0.0
        %2559 = vmatpush.msra.mxu0 0.0
        %2560 = vmatpush.msra.mxu0 0.0
        %2561 = vmatpush.msra.mxu0 0.0
        %2562 = vmatpush.msra.mxu0 0.0
        %2563 = vmatpush.msra.mxu0 0.0
        %2564 = vmatpush.msra.mxu0 0.0
        %2565 = vmatpush.msra.mxu0 0.0
        %2566 = vmatpush.msra.mxu0 0.0
        %2567 = vmatpush.msra.mxu0 0.0
        %2568 = vmatpush.msra.mxu0 %v2549
        %2569 = vmatpush.msra.mxu0 %v2548
        %2570 = vmatmul.f32.gmra.mxu0 %v1873
        %v2571 = vpop.f32.mrf.mxu0
        %v2572 = vadd.f32 0.0, %v2571
        %2573 = vmatmul.f32.gmra.mxu0 %v1875
        %v2574 = vpop.f32.mrf.mxu0
        %v2575 = vadd.f32 0.0, %v2574
        %2576 = vmatmul.f32.gmra.mxu0 %v1877
        %v2577 = vpop.f32.mrf.mxu0
        %v2578 = vadd.f32 0.0, %v2577
        %2579 = vmatmul.f32.gmra.mxu0 %v1879
        %v2580 = vpop.f32.mrf.mxu0
        %v2581 = vadd.f32 0.0, %v2580
        %2582 = vmatmul.f32.gmra.mxu0 %v1881
        %v2583 = vpop.f32.mrf.mxu0
        %v2584 = vadd.f32 0.0, %v2583
        %2585 = vmatmul.f32.gmra.mxu0 %v1883
        %v2586 = vpop.f32.mrf.mxu0
        %v2587 = vadd.f32 0.0, %v2586
        %2588 = vmatmul.f32.gmra.mxu0 %v1885
        %v2589 = vpop.f32.mrf.mxu0
        %v2590 = vadd.f32 0.0, %v2589
        %2591 = vmatmul.f32.gmra.mxu0 %v1887
        %v2592 = vpop.f32.mrf.mxu0
        %v2593 = vadd.f32 0.0, %v2592
        %2594 = vmatmul.f32.gmra.mxu0 %v1889
        %v2595 = vpop.f32.mrf.mxu0
        %v2596 = vadd.f32 0.0, %v2595
        %2597 = vmatmul.f32.gmra.mxu0 %v1891
        %v2598 = vpop.f32.mrf.mxu0
        %v2599 = vadd.f32 0.0, %v2598
        %2600 = vmatmul.f32.gmra.mxu0 %v1893
        %v2601 = vpop.f32.mrf.mxu0
        %v2602 = vadd.f32 0.0, %v2601
        %2603 = vmatmul.f32.gmra.mxu0 %v1895
        %v2604 = vpop.f32.mrf.mxu0
        %v2605 = vadd.f32 0.0, %v2604
        %2606 = vmatmul.f32.gmra.mxu0 %v1897
        %v2607 = vpop.f32.mrf.mxu0
        %v2608 = vadd.f32 0.0, %v2607
        %2609 = vmatmul.f32.gmra.mxu0 %v1899
        %v2610 = vpop.f32.mrf.mxu0
        %v2611 = vadd.f32 0.0, %v2610
        %2612 = vmatmul.f32.gmra.mxu0 %v1901
        %v2613 = vpop.f32.mrf.mxu0
        %v2614 = vadd.f32 0.0, %v2613
        %2615 = vmatmul.f32.gmra.mxu0 %v1903
        %v2616 = vpop.f32.mrf.mxu0
        %v2617 = vadd.f32 0.0, %v2616
        %2618 = vmatmul.f32.gmra.mxu0 %v1905
        %v2619 = vpop.f32.mrf.mxu0
        %v2620 = vadd.f32 0.0, %v2619
        %2621 = vmatmul.f32.gmra.mxu0 %v1907
        %v2622 = vpop.f32.mrf.mxu0
        %v2623 = vadd.f32 0.0, %v2622
        %2624 = vmatmul.f32.gmra.mxu0 %v1909
        %v2625 = vpop.f32.mrf.mxu0
        %v2626 = vadd.f32 0.0, %v2625
        %2627 = vmatmul.f32.gmra.mxu0 %v1911
        %v2628 = vpop.f32.mrf.mxu0
        %v2629 = vadd.f32 0.0, %v2628
        %2630 = vmatmul.f32.gmra.mxu0 %v1913
        %v2631 = vpop.f32.mrf.mxu0
        %v2632 = vadd.f32 0.0, %v2631
        %2633 = vmatmul.f32.gmra.mxu0 %v1915
        %v2634 = vpop.f32.mrf.mxu0
        %v2635 = vadd.f32 0.0, %v2634
        %2636 = vmatmul.f32.gmra.mxu0 %v1917
        %v2637 = vpop.f32.mrf.mxu0
        %v2638 = vadd.f32 0.0, %v2637
        %2639 = vmatmul.f32.gmra.mxu0 %v1919
        %v2640 = vpop.f32.mrf.mxu0
        %v2641 = vadd.f32 0.0, %v2640
        %2642 = vmatmul.f32.gmra.mxu0 %v1921
        %v2643 = vpop.f32.mrf.mxu0
        %v2644 = vadd.f32 0.0, %v2643
        %2645 = vmatmul.f32.gmra.mxu0 %v1923
        %v2646 = vpop.f32.mrf.mxu0
        %v2647 = vadd.f32 0.0, %v2646
        %2648 = vmatmul.f32.gmra.mxu0 %v1925
        %v2649 = vpop.f32.mrf.mxu0
        %v2650 = vadd.f32 0.0, %v2649
        %2651 = vmatmul.f32.gmra.mxu0 %v1927
        %v2652 = vpop.f32.mrf.mxu0
        %v2653 = vadd.f32 0.0, %v2652
        %2654 = vmatmul.f32.gmra.mxu0 %v1929
        %v2655 = vpop.f32.mrf.mxu0
        %v2656 = vadd.f32 0.0, %v2655
        %2657 = vmatmul.f32.gmra.mxu0 %v1931
        %v2658 = vpop.f32.mrf.mxu0
        %v2659 = vadd.f32 0.0, %v2658
        %2660 = vmatmul.f32.gmra.mxu0 %v2550
        %v2661 = vpop.f32.mrf.mxu0
        %v2662 = vadd.f32 0.0, %v2661
        %2663 = vmatmul.f32.gmra.mxu0 %v2552
        %v2664 = vpop.f32.mrf.mxu0
        %v2665 = vadd.f32 0.0, %v2664
        %2666 = vdwg.mxu0
        %v2667 = vadd.f32 %v2515, %v2572
        %v2668 = vadd.f32 %v2516, %v2575
        %v2669 = vadd.f32 %v2517, %v2578
        %v2670 = vadd.f32 %v2518, %v2581
        %v2671 = vadd.f32 %v2519, %v2584
        %v2672 = vadd.f32 %v2520, %v2587
        %v2673 = vadd.f32 %v2521, %v2590
        %v2674 = vadd.f32 %v2522, %v2593
        %v2675 = vadd.f32 %v2523, %v2596
        %v2676 = vadd.f32 %v2524, %v2599
        %v2677 = vadd.f32 %v2525, %v2602
        %v2678 = vadd.f32 %v2526, %v2605
        %v2679 = vadd.f32 %v2527, %v2608
        %v2680 = vadd.f32 %v2528, %v2611
        %v2681 = vadd.f32 %v2529, %v2614
        %v2682 = vadd.f32 %v2530, %v2617
        %v2683 = vadd.f32 %v2531, %v2620
        %v2684 = vadd.f32 %v2532, %v2623
        %v2685 = vadd.f32 %v2533, %v2626
        %v2686 = vadd.f32 %v2534, %v2629
        %v2687 = vadd.f32 %v2535, %v2632
        %v2688 = vadd.f32 %v2536, %v2635
        %v2689 = vadd.f32 %v2537, %v2638
        %v2690 = vadd.f32 %v2538, %v2641
        %v2691 = vadd.f32 %v2539, %v2644
        %v2692 = vadd.f32 %v2540, %v2647
        %v2693 = vadd.f32 %v2541, %v2650
        %v2694 = vadd.f32 %v2542, %v2653
        %v2695 = vadd.f32 %v2543, %v2656
        %v2696 = vadd.f32 %v2544, %v2659
        %v2697 = vadd.f32 %v2545, %v2662
        %v2698 = vadd.f32 %v2546, %v2665
        %v2700 = vrot.slane %v1515, 1
        %v2701 = vrot.slane %v1516, 1
        %v2702 = vsel %vm2094, %v2700, %v2701
        %v2703 = vrot.slane %v1517, 1
        %v2704 = vsel %vm2094, %v2701, %v2703
        %s2705 = scalar_lea.vmem %s3, 80
        %v2706 = vld [vmem:[%s2705] sm:$0xff]
        %v2707 = vld [vmem:[%s2705 + $0x8] sm:$0xff]
        %v2708 = vsel %vm1344, %v2702, 0
        %v2710 = vsel %vm1344, %v2704, 0
        %2712 = vmatpush.msra.mxu0 0.0
        %2713 = vmatpush.msra.mxu0 0.0
        %2714 = vmatpush.msra.mxu0 0.0
        %2715 = vmatpush.msra.mxu0 0.0
        %2716 = vmatpush.msra.mxu0 0.0
        %2717 = vmatpush.msra.mxu0 0.0
        %2718 = vmatpush.msra.mxu0 0.0
        %2719 = vmatpush.msra.mxu0 0.0
        %2720 = vmatpush.msra.mxu0 0.0
        %2721 = vmatpush.msra.mxu0 0.0
        %2722 = vmatpush.msra.mxu0 0.0
        %2723 = vmatpush.msra.mxu0 0.0
        %2724 = vmatpush.msra.mxu0 0.0
        %2725 = vmatpush.msra.mxu0 0.0
        %2726 = vmatpush.msra.mxu0 %v2707
        %2727 = vmatpush.msra.mxu0 %v2706
        %2728 = vmatmul.f32.gmra.mxu0 %v2182
        %v2729 = vpop.f32.mrf.mxu0
        %v2730 = vadd.f32 0.0, %v2729
        %2731 = vmatmul.f32.gmra.mxu0 %v2184
        %v2732 = vpop.f32.mrf.mxu0
        %v2733 = vadd.f32 0.0, %v2732
        %2734 = vmatmul.f32.gmra.mxu0 %v2186
        %v2735 = vpop.f32.mrf.mxu0
        %v2736 = vadd.f32 0.0, %v2735
        %2737 = vmatmul.f32.gmra.mxu0 %v2188
        %v2738 = vpop.f32.mrf.mxu0
        %v2739 = vadd.f32 0.0, %v2738
        %2740 = vmatmul.f32.gmra.mxu0 %v2190
        %v2741 = vpop.f32.mrf.mxu0
        %v2742 = vadd.f32 0.0, %v2741
        %2743 = vmatmul.f32.gmra.mxu0 %v2192
        %v2744 = vpop.f32.mrf.mxu0
        %v2745 = vadd.f32 0.0, %v2744
        %2746 = vmatmul.f32.gmra.mxu0 %v2194
        %v2747 = vpop.f32.mrf.mxu0
        %v2748 = vadd.f32 0.0, %v2747
        %2749 = vmatmul.f32.gmra.mxu0 %v2196
        %v2750 = vpop.f32.mrf.mxu0
        %v2751 = vadd.f32 0.0, %v2750
        %2752 = vmatmul.f32.gmra.mxu0 %v2198
        %v2753 = vpop.f32.mrf.mxu0
        %v2754 = vadd.f32 0.0, %v2753
        %2755 = vmatmul.f32.gmra.mxu0 %v2200
        %v2756 = vpop.f32.mrf.mxu0
        %v2757 = vadd.f32 0.0, %v2756
        %2758 = vmatmul.f32.gmra.mxu0 %v2202
        %v2759 = vpop.f32.mrf.mxu0
        %v2760 = vadd.f32 0.0, %v2759
        %2761 = vmatmul.f32.gmra.mxu0 %v2204
        %v2762 = vpop.f32.mrf.mxu0
        %v2763 = vadd.f32 0.0, %v2762
        %2764 = vmatmul.f32.gmra.mxu0 %v2206
        %v2765 = vpop.f32.mrf.mxu0
        %v2766 = vadd.f32 0.0, %v2765
        %2767 = vmatmul.f32.gmra.mxu0 %v2208
        %v2768 = vpop.f32.mrf.mxu0
        %v2769 = vadd.f32 0.0, %v2768
        %2770 = vmatmul.f32.gmra.mxu0 %v2210
        %v2771 = vpop.f32.mrf.mxu0
        %v2772 = vadd.f32 0.0, %v2771
        %2773 = vmatmul.f32.gmra.mxu0 %v2212
        %v2774 = vpop.f32.mrf.mxu0
        %v2775 = vadd.f32 0.0, %v2774
        %2776 = vmatmul.f32.gmra.mxu0 %v2214
        %v2777 = vpop.f32.mrf.mxu0
        %v2778 = vadd.f32 0.0, %v2777
        %2779 = vmatmul.f32.gmra.mxu0 %v2216
        %v2780 = vpop.f32.mrf.mxu0
        %v2781 = vadd.f32 0.0, %v2780
        %2782 = vmatmul.f32.gmra.mxu0 %v2218
        %v2783 = vpop.f32.mrf.mxu0
        %v2784 = vadd.f32 0.0, %v2783
        %2785 = vmatmul.f32.gmra.mxu0 %v2220
        %v2786 = vpop.f32.mrf.mxu0
        %v2787 = vadd.f32 0.0, %v2786
        %2788 = vmatmul.f32.gmra.mxu0 %v2222
        %v2789 = vpop.f32.mrf.mxu0
        %v2790 = vadd.f32 0.0, %v2789
        %2791 = vmatmul.f32.gmra.mxu0 %v2224
        %v2792 = vpop.f32.mrf.mxu0
        %v2793 = vadd.f32 0.0, %v2792
        %2794 = vmatmul.f32.gmra.mxu0 %v2226
        %v2795 = vpop.f32.mrf.mxu0
        %v2796 = vadd.f32 0.0, %v2795
        %2797 = vmatmul.f32.gmra.mxu0 %v2228
        %v2798 = vpop.f32.mrf.mxu0
        %v2799 = vadd.f32 0.0, %v2798
        %2800 = vmatmul.f32.gmra.mxu0 %v2230
        %v2801 = vpop.f32.mrf.mxu0
        %v2802 = vadd.f32 0.0, %v2801
        %2803 = vmatmul.f32.gmra.mxu0 %v2232
        %v2804 = vpop.f32.mrf.mxu0
        %v2805 = vadd.f32 0.0, %v2804
        %2806 = vmatmul.f32.gmra.mxu0 %v2234
        %v2807 = vpop.f32.mrf.mxu0
        %v2808 = vadd.f32 0.0, %v2807
        %2809 = vmatmul.f32.gmra.mxu0 %v2236
        %v2810 = vpop.f32.mrf.mxu0
        %v2811 = vadd.f32 0.0, %v2810
        %2812 = vmatmul.f32.gmra.mxu0 %v2238
        %v2813 = vpop.f32.mrf.mxu0
        %v2814 = vadd.f32 0.0, %v2813
        %2815 = vmatmul.f32.gmra.mxu0 %v2240
        %v2816 = vpop.f32.mrf.mxu0
        %v2817 = vadd.f32 0.0, %v2816
        %2818 = vmatmul.f32.gmra.mxu0 %v2708
        %v2819 = vpop.f32.mrf.mxu0
        %v2820 = vadd.f32 0.0, %v2819
        %2821 = vmatmul.f32.gmra.mxu0 %v2710
        %v2822 = vpop.f32.mrf.mxu0
        %v2823 = vadd.f32 0.0, %v2822
        %2824 = vdwg.mxu0
        %v2825 = vadd.f32 %v2667, %v2730
        %v2826 = vadd.f32 %v2668, %v2733
        %v2827 = vadd.f32 %v2669, %v2736
        %v2828 = vadd.f32 %v2670, %v2739
        %v2829 = vadd.f32 %v2671, %v2742
        %v2830 = vadd.f32 %v2672, %v2745
        %v2831 = vadd.f32 %v2673, %v2748
        %v2832 = vadd.f32 %v2674, %v2751
        %v2833 = vadd.f32 %v2675, %v2754
        %v2834 = vadd.f32 %v2676, %v2757
        %v2835 = vadd.f32 %v2677, %v2760
        %v2836 = vadd.f32 %v2678, %v2763
        %v2837 = vadd.f32 %v2679, %v2766
        %v2838 = vadd.f32 %v2680, %v2769
        %v2839 = vadd.f32 %v2681, %v2772
        %v2840 = vadd.f32 %v2682, %v2775
        %v2841 = vadd.f32 %v2683, %v2778
        %v2842 = vadd.f32 %v2684, %v2781
        %v2843 = vadd.f32 %v2685, %v2784
        %v2844 = vadd.f32 %v2686, %v2787
        %v2845 = vadd.f32 %v2687, %v2790
        %v2846 = vadd.f32 %v2688, %v2793
        %v2847 = vadd.f32 %v2689, %v2796
        %v2848 = vadd.f32 %v2690, %v2799
        %v2849 = vadd.f32 %v2691, %v2802
        %v2850 = vadd.f32 %v2692, %v2805
        %v2851 = vadd.f32 %v2693, %v2808
        %v2852 = vadd.f32 %v2694, %v2811
        %v2853 = vadd.f32 %v2695, %v2814
        %v2854 = vadd.f32 %v2696, %v2817
        %v2855 = vadd.f32 %v2697, %v2820
        %v2856 = vadd.f32 %v2698, %v2823
        %v2860 = vrot.slane %v1518, 7
        %v2861 = vrot.slane %v1519, 7
        %v2862 = vsel %vm1574, %v2860, %v2861
        %v2863 = vrot.slane %v1520, 7
        %v2864 = vsel %vm1574, %v2861, %v2863
        %s2865 = scalar_lea.vmem %s3, 96
        %v2866 = vld [vmem:[%s2865] sm:$0xff]
        %v2867 = vld [vmem:[%s2865 + $0x8] sm:$0xff]
        %v2868 = vsel %vm1344, %v2862, 0
        %v2870 = vsel %vm1344, %v2864, 0
        %2872 = vmatpush.msra.mxu0 0.0
        %2873 = vmatpush.msra.mxu0 0.0
        %2874 = vmatpush.msra.mxu0 0.0
        %2875 = vmatpush.msra.mxu0 0.0
        %2876 = vmatpush.msra.mxu0 0.0
        %2877 = vmatpush.msra.mxu0 0.0
        %2878 = vmatpush.msra.mxu0 0.0
        %2879 = vmatpush.msra.mxu0 0.0
        %2880 = vmatpush.msra.mxu0 0.0
        %2881 = vmatpush.msra.mxu0 0.0
        %2882 = vmatpush.msra.mxu0 0.0
        %2883 = vmatpush.msra.mxu0 0.0
        %2884 = vmatpush.msra.mxu0 0.0
        %2885 = vmatpush.msra.mxu0 0.0
        %2886 = vmatpush.msra.mxu0 %v2867
        %2887 = vmatpush.msra.mxu0 %v2866
        %2888 = vmatmul.f32.gmra.mxu0 %v1665
        %v2889 = vpop.f32.mrf.mxu0
        %v2890 = vadd.f32 0.0, %v2889
        %2891 = vmatmul.f32.gmra.mxu0 %v1667
        %v2892 = vpop.f32.mrf.mxu0
        %v2893 = vadd.f32 0.0, %v2892
        %2894 = vmatmul.f32.gmra.mxu0 %v1669
        %v2895 = vpop.f32.mrf.mxu0
        %v2896 = vadd.f32 0.0, %v2895
        %2897 = vmatmul.f32.gmra.mxu0 %v1671
        %v2898 = vpop.f32.mrf.mxu0
        %v2899 = vadd.f32 0.0, %v2898
        %2900 = vmatmul.f32.gmra.mxu0 %v1673
        %v2901 = vpop.f32.mrf.mxu0
        %v2902 = vadd.f32 0.0, %v2901
        %2903 = vmatmul.f32.gmra.mxu0 %v1675
        %v2904 = vpop.f32.mrf.mxu0
        %v2905 = vadd.f32 0.0, %v2904
        %2906 = vmatmul.f32.gmra.mxu0 %v1677
        %v2907 = vpop.f32.mrf.mxu0
        %v2908 = vadd.f32 0.0, %v2907
        %2909 = vmatmul.f32.gmra.mxu0 %v1679
        %v2910 = vpop.f32.mrf.mxu0
        %v2911 = vadd.f32 0.0, %v2910
        %2912 = vmatmul.f32.gmra.mxu0 %v1681
        %v2913 = vpop.f32.mrf.mxu0
        %v2914 = vadd.f32 0.0, %v2913
        %2915 = vmatmul.f32.gmra.mxu0 %v1683
        %v2916 = vpop.f32.mrf.mxu0
        %v2917 = vadd.f32 0.0, %v2916
        %2918 = vmatmul.f32.gmra.mxu0 %v1685
        %v2919 = vpop.f32.mrf.mxu0
        %v2920 = vadd.f32 0.0, %v2919
        %2921 = vmatmul.f32.gmra.mxu0 %v1687
        %v2922 = vpop.f32.mrf.mxu0
        %v2923 = vadd.f32 0.0, %v2922
        %2924 = vmatmul.f32.gmra.mxu0 %v1689
        %v2925 = vpop.f32.mrf.mxu0
        %v2926 = vadd.f32 0.0, %v2925
        %2927 = vmatmul.f32.gmra.mxu0 %v1691
        %v2928 = vpop.f32.mrf.mxu0
        %v2929 = vadd.f32 0.0, %v2928
        %2930 = vmatmul.f32.gmra.mxu0 %v1693
        %v2931 = vpop.f32.mrf.mxu0
        %v2932 = vadd.f32 0.0, %v2931
        %2933 = vmatmul.f32.gmra.mxu0 %v1695
        %v2934 = vpop.f32.mrf.mxu0
        %v2935 = vadd.f32 0.0, %v2934
        %2936 = vmatmul.f32.gmra.mxu0 %v1697
        %v2937 = vpop.f32.mrf.mxu0
        %v2938 = vadd.f32 0.0, %v2937
        %2939 = vmatmul.f32.gmra.mxu0 %v1699
        %v2940 = vpop.f32.mrf.mxu0
        %v2941 = vadd.f32 0.0, %v2940
        %2942 = vmatmul.f32.gmra.mxu0 %v1701
        %v2943 = vpop.f32.mrf.mxu0
        %v2944 = vadd.f32 0.0, %v2943
        %2945 = vmatmul.f32.gmra.mxu0 %v1703
        %v2946 = vpop.f32.mrf.mxu0
        %v2947 = vadd.f32 0.0, %v2946
        %2948 = vmatmul.f32.gmra.mxu0 %v1705
        %v2949 = vpop.f32.mrf.mxu0
        %v2950 = vadd.f32 0.0, %v2949
        %2951 = vmatmul.f32.gmra.mxu0 %v1707
        %v2952 = vpop.f32.mrf.mxu0
        %v2953 = vadd.f32 0.0, %v2952
        %2954 = vmatmul.f32.gmra.mxu0 %v1709
        %v2955 = vpop.f32.mrf.mxu0
        %v2956 = vadd.f32 0.0, %v2955
        %2957 = vmatmul.f32.gmra.mxu0 %v1711
        %v2958 = vpop.f32.mrf.mxu0
        %v2959 = vadd.f32 0.0, %v2958
        %2960 = vmatmul.f32.gmra.mxu0 %v1713
        %v2961 = vpop.f32.mrf.mxu0
        %v2962 = vadd.f32 0.0, %v2961
        %2963 = vmatmul.f32.gmra.mxu0 %v1715
        %v2964 = vpop.f32.mrf.mxu0
        %v2965 = vadd.f32 0.0, %v2964
        %2966 = vmatmul.f32.gmra.mxu0 %v1717
        %v2967 = vpop.f32.mrf.mxu0
        %v2968 = vadd.f32 0.0, %v2967
        %2969 = vmatmul.f32.gmra.mxu0 %v1719
        %v2970 = vpop.f32.mrf.mxu0
        %v2971 = vadd.f32 0.0, %v2970
        %2972 = vmatmul.f32.gmra.mxu0 %v2398
        %v2973 = vpop.f32.mrf.mxu0
        %v2974 = vadd.f32 0.0, %v2973
        %2975 = vmatmul.f32.gmra.mxu0 %v2400
        %v2976 = vpop.f32.mrf.mxu0
        %v2977 = vadd.f32 0.0, %v2976
        %2978 = vmatmul.f32.gmra.mxu0 %v2868
        %v2979 = vpop.f32.mrf.mxu0
        %v2980 = vadd.f32 0.0, %v2979
        %2981 = vmatmul.f32.gmra.mxu0 %v2870
        %v2982 = vpop.f32.mrf.mxu0
        %v2983 = vadd.f32 0.0, %v2982
        %2984 = vdwg.mxu0
        %v2985 = vadd.f32 %v2825, %v2890
        %v2986 = vadd.f32 %v2826, %v2893
        %v2987 = vadd.f32 %v2827, %v2896
        %v2988 = vadd.f32 %v2828, %v2899
        %v2989 = vadd.f32 %v2829, %v2902
        %v2990 = vadd.f32 %v2830, %v2905
        %v2991 = vadd.f32 %v2831, %v2908
        %v2992 = vadd.f32 %v2832, %v2911
        %v2993 = vadd.f32 %v2833, %v2914
        %v2994 = vadd.f32 %v2834, %v2917
        %v2995 = vadd.f32 %v2835, %v2920
        %v2996 = vadd.f32 %v2836, %v2923
        %v2997 = vadd.f32 %v2837, %v2926
        %v2998 = vadd.f32 %v2838, %v2929
        %v2999 = vadd.f32 %v2839, %v2932
        %v3000 = vadd.f32 %v2840, %v2935
        %v3001 = vadd.f32 %v2841, %v2938
        %v3002 = vadd.f32 %v2842, %v2941
        %v3003 = vadd.f32 %v2843, %v2944
        %v3004 = vadd.f32 %v2844, %v2947
        %v3005 = vadd.f32 %v2845, %v2950
        %v3006 = vadd.f32 %v2846, %v2953
        %v3007 = vadd.f32 %v2847, %v2956
        %v3008 = vadd.f32 %v2848, %v2959
        %v3009 = vadd.f32 %v2849, %v2962
        %v3010 = vadd.f32 %v2850, %v2965
        %v3011 = vadd.f32 %v2851, %v2968
        %v3012 = vadd.f32 %v2852, %v2971
        %v3013 = vadd.f32 %v2853, %v2974
        %v3014 = vadd.f32 %v2854, %v2977
        %v3015 = vadd.f32 %v2855, %v2980
        %v3016 = vadd.f32 %v2856, %v2983
        %s3017 = scalar_lea.vmem %s3, 112
        %v3018 = vld [vmem:[%s3017] sm:$0xff]
        %v3019 = vld [vmem:[%s3017 + $0x8] sm:$0xff]
        %v3020 = vsel %vm1344, %v1519, 0
        %v3022 = vsel %vm1344, %v1520, 0
        %3024 = vmatpush.msra.mxu0 0.0
        %3025 = vmatpush.msra.mxu0 0.0
        %3026 = vmatpush.msra.mxu0 0.0
        %3027 = vmatpush.msra.mxu0 0.0
        %3028 = vmatpush.msra.mxu0 0.0
        %3029 = vmatpush.msra.mxu0 0.0
        %3030 = vmatpush.msra.mxu0 0.0
        %3031 = vmatpush.msra.mxu0 0.0
        %3032 = vmatpush.msra.mxu0 0.0
        %3033 = vmatpush.msra.mxu0 0.0
        %3034 = vmatpush.msra.mxu0 0.0
        %3035 = vmatpush.msra.mxu0 0.0
        %3036 = vmatpush.msra.mxu0 0.0
        %3037 = vmatpush.msra.mxu0 0.0
        %3038 = vmatpush.msra.mxu0 %v3019
        %3039 = vmatpush.msra.mxu0 %v3018
        %3040 = vmatmul.f32.gmra.mxu0 %v1877
        %v3041 = vpop.f32.mrf.mxu0
        %v3042 = vadd.f32 0.0, %v3041
        %3043 = vmatmul.f32.gmra.mxu0 %v1879
        %v3044 = vpop.f32.mrf.mxu0
        %v3045 = vadd.f32 0.0, %v3044
        %3046 = vmatmul.f32.gmra.mxu0 %v1881
        %v3047 = vpop.f32.mrf.mxu0
        %v3048 = vadd.f32 0.0, %v3047
        %3049 = vmatmul.f32.gmra.mxu0 %v1883
        %v3050 = vpop.f32.mrf.mxu0
        %v3051 = vadd.f32 0.0, %v3050
        %3052 = vmatmul.f32.gmra.mxu0 %v1885
        %v3053 = vpop.f32.mrf.mxu0
        %v3054 = vadd.f32 0.0, %v3053
        %3055 = vmatmul.f32.gmra.mxu0 %v1887
        %v3056 = vpop.f32.mrf.mxu0
        %v3057 = vadd.f32 0.0, %v3056
        %3058 = vmatmul.f32.gmra.mxu0 %v1889
        %v3059 = vpop.f32.mrf.mxu0
        %v3060 = vadd.f32 0.0, %v3059
        %3061 = vmatmul.f32.gmra.mxu0 %v1891
        %v3062 = vpop.f32.mrf.mxu0
        %v3063 = vadd.f32 0.0, %v3062
        %3064 = vmatmul.f32.gmra.mxu0 %v1893
        %v3065 = vpop.f32.mrf.mxu0
        %v3066 = vadd.f32 0.0, %v3065
        %3067 = vmatmul.f32.gmra.mxu0 %v1895
        %v3068 = vpop.f32.mrf.mxu0
        %v3069 = vadd.f32 0.0, %v3068
        %3070 = vmatmul.f32.gmra.mxu0 %v1897
        %v3071 = vpop.f32.mrf.mxu0
        %v3072 = vadd.f32 0.0, %v3071
        %3073 = vmatmul.f32.gmra.mxu0 %v1899
        %v3074 = vpop.f32.mrf.mxu0
        %v3075 = vadd.f32 0.0, %v3074
        %3076 = vmatmul.f32.gmra.mxu0 %v1901
        %v3077 = vpop.f32.mrf.mxu0
        %v3078 = vadd.f32 0.0, %v3077
        %3079 = vmatmul.f32.gmra.mxu0 %v1903
        %v3080 = vpop.f32.mrf.mxu0
        %v3081 = vadd.f32 0.0, %v3080
        %3082 = vmatmul.f32.gmra.mxu0 %v1905
        %v3083 = vpop.f32.mrf.mxu0
        %v3084 = vadd.f32 0.0, %v3083
        %3085 = vmatmul.f32.gmra.mxu0 %v1907
        %v3086 = vpop.f32.mrf.mxu0
        %v3087 = vadd.f32 0.0, %v3086
        %3088 = vmatmul.f32.gmra.mxu0 %v1909
        %v3089 = vpop.f32.mrf.mxu0
        %v3090 = vadd.f32 0.0, %v3089
        %3091 = vmatmul.f32.gmra.mxu0 %v1911
        %v3092 = vpop.f32.mrf.mxu0
        %v3093 = vadd.f32 0.0, %v3092
        %3094 = vmatmul.f32.gmra.mxu0 %v1913
        %v3095 = vpop.f32.mrf.mxu0
        %v3096 = vadd.f32 0.0, %v3095
        %3097 = vmatmul.f32.gmra.mxu0 %v1915
        %v3098 = vpop.f32.mrf.mxu0
        %v3099 = vadd.f32 0.0, %v3098
        %3100 = vmatmul.f32.gmra.mxu0 %v1917
        %v3101 = vpop.f32.mrf.mxu0
        %v3102 = vadd.f32 0.0, %v3101
        %3103 = vmatmul.f32.gmra.mxu0 %v1919
        %v3104 = vpop.f32.mrf.mxu0
        %v3105 = vadd.f32 0.0, %v3104
        %3106 = vmatmul.f32.gmra.mxu0 %v1921
        %v3107 = vpop.f32.mrf.mxu0
        %v3108 = vadd.f32 0.0, %v3107
        %3109 = vmatmul.f32.gmra.mxu0 %v1923
        %v3110 = vpop.f32.mrf.mxu0
        %v3111 = vadd.f32 0.0, %v3110
        %3112 = vmatmul.f32.gmra.mxu0 %v1925
        %v3113 = vpop.f32.mrf.mxu0
        %v3114 = vadd.f32 0.0, %v3113
        %3115 = vmatmul.f32.gmra.mxu0 %v1927
        %v3116 = vpop.f32.mrf.mxu0
        %v3117 = vadd.f32 0.0, %v3116
        %3118 = vmatmul.f32.gmra.mxu0 %v1929
        %v3119 = vpop.f32.mrf.mxu0
        %v3120 = vadd.f32 0.0, %v3119
        %3121 = vmatmul.f32.gmra.mxu0 %v1931
        %v3122 = vpop.f32.mrf.mxu0
        %v3123 = vadd.f32 0.0, %v3122
        %3124 = vmatmul.f32.gmra.mxu0 %v2550
        %v3125 = vpop.f32.mrf.mxu0
        %v3126 = vadd.f32 0.0, %v3125
        %3127 = vmatmul.f32.gmra.mxu0 %v2552
        %v3128 = vpop.f32.mrf.mxu0
        %v3129 = vadd.f32 0.0, %v3128
        %3130 = vmatmul.f32.gmra.mxu0 %v3020
        %v3131 = vpop.f32.mrf.mxu0
        %v3132 = vadd.f32 0.0, %v3131
        %3133 = vmatmul.f32.gmra.mxu0 %v3022
        %v3134 = vpop.f32.mrf.mxu0
        %v3135 = vadd.f32 0.0, %v3134
        %3136 = vdwg.mxu0
        %v3137 = vadd.f32 %v2985, %v3042
        %v3138 = vadd.f32 %v2986, %v3045
        %v3139 = vadd.f32 %v2987, %v3048
        %v3140 = vadd.f32 %v2988, %v3051
        %v3141 = vadd.f32 %v2989, %v3054
        %v3142 = vadd.f32 %v2990, %v3057
        %v3143 = vadd.f32 %v2991, %v3060
        %v3144 = vadd.f32 %v2992, %v3063
        %v3145 = vadd.f32 %v2993, %v3066
        %v3146 = vadd.f32 %v2994, %v3069
        %v3147 = vadd.f32 %v2995, %v3072
        %v3148 = vadd.f32 %v2996, %v3075
        %v3149 = vadd.f32 %v2997, %v3078
        %v3150 = vadd.f32 %v2998, %v3081
        %v3151 = vadd.f32 %v2999, %v3084
        %v3152 = vadd.f32 %v3000, %v3087
        %v3153 = vadd.f32 %v3001, %v3090
        %v3154 = vadd.f32 %v3002, %v3093
        %v3155 = vadd.f32 %v3003, %v3096
        %v3156 = vadd.f32 %v3004, %v3099
        %v3157 = vadd.f32 %v3005, %v3102
        %v3158 = vadd.f32 %v3006, %v3105
        %v3159 = vadd.f32 %v3007, %v3108
        %v3160 = vadd.f32 %v3008, %v3111
        %v3161 = vadd.f32 %v3009, %v3114
        %v3162 = vadd.f32 %v3010, %v3117
        %v3163 = vadd.f32 %v3011, %v3120
        %v3164 = vadd.f32 %v3012, %v3123
        %v3165 = vadd.f32 %v3013, %v3126
        %v3166 = vadd.f32 %v3014, %v3129
        %v3167 = vadd.f32 %v3015, %v3132
        %v3168 = vadd.f32 %v3016, %v3135
        %v3170 = vrot.slane %v1519, 1
        %v3171 = vrot.slane %v1520, 1
        %v3172 = vsel %vm2094, %v3170, %v3171
        %v3173 = vrot.slane %v1521, 1
        %v3174 = vsel %vm2094, %v3171, %v3173
        %s3175 = scalar_lea.vmem %s3, 128
        %v3176 = vld [vmem:[%s3175] sm:$0xff]
        %v3177 = vld [vmem:[%s3175 + $0x8] sm:$0xff]
        %v3178 = vsel %vm1344, %v3172, 0
        %v3180 = vsel %vm1344, %v3174, 0
        %3182 = vmatpush.msra.mxu0 0.0
        %3183 = vmatpush.msra.mxu0 0.0
        %3184 = vmatpush.msra.mxu0 0.0
        %3185 = vmatpush.msra.mxu0 0.0
        %3186 = vmatpush.msra.mxu0 0.0
        %3187 = vmatpush.msra.mxu0 0.0
        %3188 = vmatpush.msra.mxu0 0.0
        %3189 = vmatpush.msra.mxu0 0.0
        %3190 = vmatpush.msra.mxu0 0.0
        %3191 = vmatpush.msra.mxu0 0.0
        %3192 = vmatpush.msra.mxu0 0.0
        %3193 = vmatpush.msra.mxu0 0.0
        %3194 = vmatpush.msra.mxu0 0.0
        %3195 = vmatpush.msra.mxu0 0.0
        %3196 = vmatpush.msra.mxu0 %v3177
        %3197 = vmatpush.msra.mxu0 %v3176
        %3198 = vmatmul.f32.gmra.mxu0 %v2186
        %v3199 = vpop.f32.mrf.mxu0
        %v3200 = vadd.f32 0.0, %v3199
        %3201 = vmatmul.f32.gmra.mxu0 %v2188
        %v3202 = vpop.f32.mrf.mxu0
        %v3203 = vadd.f32 0.0, %v3202
        %3204 = vmatmul.f32.gmra.mxu0 %v2190
        %v3205 = vpop.f32.mrf.mxu0
        %v3206 = vadd.f32 0.0, %v3205
        %3207 = vmatmul.f32.gmra.mxu0 %v2192
        %v3208 = vpop.f32.mrf.mxu0
        %v3209 = vadd.f32 0.0, %v3208
        %3210 = vmatmul.f32.gmra.mxu0 %v2194
        %v3211 = vpop.f32.mrf.mxu0
        %v3212 = vadd.f32 0.0, %v3211
        %3213 = vmatmul.f32.gmra.mxu0 %v2196
        %v3214 = vpop.f32.mrf.mxu0
        %v3215 = vadd.f32 0.0, %v3214
        %3216 = vmatmul.f32.gmra.mxu0 %v2198
        %v3217 = vpop.f32.mrf.mxu0
        %v3218 = vadd.f32 0.0, %v3217
        %3219 = vmatmul.f32.gmra.mxu0 %v2200
        %v3220 = vpop.f32.mrf.mxu0
        %v3221 = vadd.f32 0.0, %v3220
        %3222 = vmatmul.f32.gmra.mxu0 %v2202
        %v3223 = vpop.f32.mrf.mxu0
        %v3224 = vadd.f32 0.0, %v3223
        %3225 = vmatmul.f32.gmra.mxu0 %v2204
        %v3226 = vpop.f32.mrf.mxu0
        %v3227 = vadd.f32 0.0, %v3226
        %3228 = vmatmul.f32.gmra.mxu0 %v2206
        %v3229 = vpop.f32.mrf.mxu0
        %v3230 = vadd.f32 0.0, %v3229
        %3231 = vmatmul.f32.gmra.mxu0 %v2208
        %v3232 = vpop.f32.mrf.mxu0
        %v3233 = vadd.f32 0.0, %v3232
        %3234 = vmatmul.f32.gmra.mxu0 %v2210
        %v3235 = vpop.f32.mrf.mxu0
        %v3236 = vadd.f32 0.0, %v3235
        %3237 = vmatmul.f32.gmra.mxu0 %v2212
        %v3238 = vpop.f32.mrf.mxu0
        %v3239 = vadd.f32 0.0, %v3238
        %3240 = vmatmul.f32.gmra.mxu0 %v2214
        %v3241 = vpop.f32.mrf.mxu0
        %v3242 = vadd.f32 0.0, %v3241
        %3243 = vmatmul.f32.gmra.mxu0 %v2216
        %v3244 = vpop.f32.mrf.mxu0
        %v3245 = vadd.f32 0.0, %v3244
        %3246 = vmatmul.f32.gmra.mxu0 %v2218
        %v3247 = vpop.f32.mrf.mxu0
        %v3248 = vadd.f32 0.0, %v3247
        %3249 = vmatmul.f32.gmra.mxu0 %v2220
        %v3250 = vpop.f32.mrf.mxu0
        %v3251 = vadd.f32 0.0, %v3250
        %3252 = vmatmul.f32.gmra.mxu0 %v2222
        %v3253 = vpop.f32.mrf.mxu0
        %v3254 = vadd.f32 0.0, %v3253
        %3255 = vmatmul.f32.gmra.mxu0 %v2224
        %v3256 = vpop.f32.mrf.mxu0
        %v3257 = vadd.f32 0.0, %v3256
        %3258 = vmatmul.f32.gmra.mxu0 %v2226
        %v3259 = vpop.f32.mrf.mxu0
        %v3260 = vadd.f32 0.0, %v3259
        %3261 = vmatmul.f32.gmra.mxu0 %v2228
        %v3262 = vpop.f32.mrf.mxu0
        %v3263 = vadd.f32 0.0, %v3262
        %3264 = vmatmul.f32.gmra.mxu0 %v2230
        %v3265 = vpop.f32.mrf.mxu0
        %v3266 = vadd.f32 0.0, %v3265
        %3267 = vmatmul.f32.gmra.mxu0 %v2232
        %v3268 = vpop.f32.mrf.mxu0
        %v3269 = vadd.f32 0.0, %v3268
        %3270 = vmatmul.f32.gmra.mxu0 %v2234
        %v3271 = vpop.f32.mrf.mxu0
        %v3272 = vadd.f32 0.0, %v3271
        %3273 = vmatmul.f32.gmra.mxu0 %v2236
        %v3274 = vpop.f32.mrf.mxu0
        %v3275 = vadd.f32 0.0, %v3274
        %3276 = vmatmul.f32.gmra.mxu0 %v2238
        %v3277 = vpop.f32.mrf.mxu0
        %v3278 = vadd.f32 0.0, %v3277
        %3279 = vmatmul.f32.gmra.mxu0 %v2240
        %v3280 = vpop.f32.mrf.mxu0
        %v3281 = vadd.f32 0.0, %v3280
        %3282 = vmatmul.f32.gmra.mxu0 %v2708
        %v3283 = vpop.f32.mrf.mxu0
        %v3284 = vadd.f32 0.0, %v3283
        %3285 = vmatmul.f32.gmra.mxu0 %v2710
        %v3286 = vpop.f32.mrf.mxu0
        %v3287 = vadd.f32 0.0, %v3286
        %3288 = vmatmul.f32.gmra.mxu0 %v3178
        %v3289 = vpop.f32.mrf.mxu0
        %v3290 = vadd.f32 0.0, %v3289
        %3291 = vmatmul.f32.gmra.mxu0 %v3180
        %v3292 = vpop.f32.mrf.mxu0
        %v3293 = vadd.f32 0.0, %v3292
        %3294 = vdwg.mxu0
        %v3295 = vadd.f32 %v3137, %v3200
        %v3296 = vadd.f32 %v3138, %v3203
        %v3297 = vadd.f32 %v3139, %v3206
        %v3298 = vadd.f32 %v3140, %v3209
        %v3299 = vadd.f32 %v3141, %v3212
        %v3300 = vadd.f32 %v3142, %v3215
        %v3301 = vadd.f32 %v3143, %v3218
        %v3302 = vadd.f32 %v3144, %v3221
        %v3303 = vadd.f32 %v3145, %v3224
        %v3304 = vadd.f32 %v3146, %v3227
        %v3305 = vadd.f32 %v3147, %v3230
        %v3306 = vadd.f32 %v3148, %v3233
        %v3307 = vadd.f32 %v3149, %v3236
        %v3308 = vadd.f32 %v3150, %v3239
        %v3309 = vadd.f32 %v3151, %v3242
        %v3310 = vadd.f32 %v3152, %v3245
        %v3311 = vadd.f32 %v3153, %v3248
        %v3312 = vadd.f32 %v3154, %v3251
        %v3313 = vadd.f32 %v3155, %v3254
        %v3314 = vadd.f32 %v3156, %v3257
        %v3315 = vadd.f32 %v3157, %v3260
        %v3316 = vadd.f32 %v3158, %v3263
        %v3317 = vadd.f32 %v3159, %v3266
        %v3318 = vadd.f32 %v3160, %v3269
        %v3319 = vadd.f32 %v3161, %v3272
        %v3320 = vadd.f32 %v3162, %v3275
        %v3321 = vadd.f32 %v3163, %v3278
        %v3322 = vadd.f32 %v3164, %v3281
        %v3323 = vadd.f32 %v3165, %v3284
        %v3324 = vadd.f32 %v3166, %v3287
        %v3325 = vadd.f32 %v3167, %v3290
        %v3326 = vadd.f32 %v3168, %v3293
        %v3327 = vmax.f32 %v3295, 0.0
        %v3328 = vmax.f32 %v3296, 0.0
        %v3329 = vmax.f32 %v3297, 0.0
        %v3330 = vmax.f32 %v3298, 0.0
        %v3331 = vmax.f32 %v3299, 0.0
        %v3332 = vmax.f32 %v3300, 0.0
        %v3333 = vmax.f32 %v3301, 0.0
        %v3334 = vmax.f32 %v3302, 0.0
        %v3335 = vmax.f32 %v3303, 0.0
        %v3336 = vmax.f32 %v3304, 0.0
        %v3337 = vmax.f32 %v3305, 0.0
        %v3338 = vmax.f32 %v3306, 0.0
        %v3339 = vmax.f32 %v3307, 0.0
        %v3340 = vmax.f32 %v3308, 0.0
        %v3341 = vmax.f32 %v3309, 0.0
        %v3342 = vmax.f32 %v3310, 0.0
        %v3343 = vmax.f32 %v3311, 0.0
        %v3344 = vmax.f32 %v3312, 0.0
        %v3345 = vmax.f32 %v3313, 0.0
        %v3346 = vmax.f32 %v3314, 0.0
        %v3347 = vmax.f32 %v3315, 0.0
        %v3348 = vmax.f32 %v3316, 0.0
        %v3349 = vmax.f32 %v3317, 0.0
        %v3350 = vmax.f32 %v3318, 0.0
        %v3351 = vmax.f32 %v3319, 0.0
        %v3352 = vmax.f32 %v3320, 0.0
        %v3353 = vmax.f32 %v3321, 0.0
        %v3354 = vmax.f32 %v3322, 0.0
        %v3355 = vmax.f32 %v3323, 0.0
        %v3356 = vmax.f32 %v3324, 0.0
        %v3357 = vmax.f32 %v3325, 0.0
        %v3358 = vmax.f32 %v3326, 0.0
        %vm3359 = vcmask 261120
        %3360 = vst.msk [vmem:[#allocation3] sm:$0xff] %vm3359, 0.0
        %3361 = vst.msk [vmem:[#allocation3 + $0x8] sm:$0xff] %vm3359, 0.0
        %3362 = vst.msk [vmem:[#allocation3 + $0x10] sm:$0xff] %vm3359, 0.0
        %3363 = vst.msk [vmem:[#allocation3 + $0x18] sm:$0xff] %vm3359, 0.0
        %3364 = vst.msk [vmem:[#allocation3 + $0x20] sm:$0xff] %vm3359, 0.0
        %3365 = vst.msk [vmem:[#allocation3 + $0x28] sm:$0xff] %vm3359, 0.0
        %3366 = vst.msk [vmem:[#allocation3 + $0x30] sm:$0xff] %vm3359, 0.0
        %3367 = vst.msk [vmem:[#allocation3 + $0x38] sm:$0xff] %vm3359, 0.0
        %3368 = vst.msk [vmem:[#allocation3 + $0x40] sm:$0xff] %vm3359, 0.0
        %3369 = vst.msk [vmem:[#allocation3 + $0x48] sm:$0xff] %vm3359, 0.0
        %3370 = vst.msk [vmem:[#allocation3 + $0x50] sm:$0xff] %vm3359, 0.0
        %3371 = vst.msk [vmem:[#allocation3 + $0x58] sm:$0xff] %vm3359, 0.0
        %3372 = vst.msk [vmem:[#allocation3 + $0x60] sm:$0xff] %vm3359, 0.0
        %3373 = vst.msk [vmem:[#allocation3 + $0x68] sm:$0xff] %vm3359, 0.0
        %3374 = vst.msk [vmem:[#allocation3 + $0x70] sm:$0xff] %vm3359, 0.0
        %3375 = vst.msk [vmem:[#allocation3 + $0x78] sm:$0xff] %vm3359, 0.0
        %3376 = vst.msk [vmem:[#allocation3 + $0x80] sm:$0xff] %vm3359, 0.0
        %3377 = vst.msk [vmem:[#allocation3 + $0x88] sm:$0xff] %vm3359, 0.0
        %3378 = vst.msk [vmem:[#allocation3 + $0x90] sm:$0xff] %vm3359, 0.0
        %3379 = vst.msk [vmem:[#allocation3 + $0x98] sm:$0xff] %vm3359, 0.0
        %3380 = vst.msk [vmem:[#allocation3 + $0xa0] sm:$0xff] %vm3359, 0.0
        %3381 = vst.msk [vmem:[#allocation3 + $0xa8] sm:$0xff] %vm3359, 0.0
        %3382 = vst.msk [vmem:[#allocation3 + $0xb0] sm:$0xff] %vm3359, 0.0
        %3383 = vst.msk [vmem:[#allocation3 + $0xb8] sm:$0xff] %vm3359, 0.0
        %3384 = vst.msk [vmem:[#allocation3 + $0xc0] sm:$0xff] %vm3359, 0.0
        %3385 = vst.msk [vmem:[#allocation3 + $0xc8] sm:$0xff] %vm3359, 0.0
        %3386 = vst.msk [vmem:[#allocation3 + $0xd0] sm:$0xff] %vm3359, 0.0
        %3387 = vst.msk [vmem:[#allocation3 + $0xd8] sm:$0xff] %vm3359, 0.0
        %3388 = vst.msk [vmem:[#allocation3 + $0xe0] sm:$0xff] %vm3359, 0.0
        %3389 = vst.msk [vmem:[#allocation3 + $0xe8] sm:$0xff] %vm3359, 0.0
        %3390 = vst.msk [vmem:[#allocation3 + $0xf0] sm:$0xff] %vm3359, 0.0
        %3391 = vst.msk [vmem:[#allocation3 + $0xf8] sm:$0xff] %vm3359, 0.0
        %3392 = vst.msk [vmem:[#allocation3 + $0x100] sm:$0xff] %vm3359, 0.0
        %3393 = vst.msk [vmem:[#allocation3 + $0x108] sm:$0xff] %vm3359, 0.0
        %3394 = vst.msk [vmem:[#allocation3 + $0x110] sm:$0xff] %vm3359, 0.0
        %3395 = vst.msk [vmem:[#allocation3 + $0x118] sm:$0xff] %vm3359, 0.0
        %3396 = vst.msk [vmem:[#allocation3 + $0x120] sm:$0xff] %vm3359, 0.0
        %3397 = vst.msk [vmem:[#allocation3 + $0x128] sm:$0xff] %vm3359, 0.0
        %3398 = vst.msk [vmem:[#allocation3 + $0x130] sm:$0xff] %vm3359, 0.0
        %3399 = vst.msk [vmem:[#allocation3 + $0x138] sm:$0xff] %vm3359, 0.0
        %3400 = vst.msk [vmem:[#allocation3 + $0x140] sm:$0xff] %vm3359, 0.0
        %3401 = vst.msk [vmem:[#allocation3 + $0x148] sm:$0xff] %vm3359, 0.0
        %3402 = vst.msk [vmem:[#allocation3 + $0x150] sm:$0xff] %vm3359, 0.0
        %3403 = vst.msk [vmem:[#allocation3 + $0x158] sm:$0xff] %vm3359, 0.0
        %3404 = vst.msk [vmem:[#allocation3 + $0x160] sm:$0xff] %vm3359, 0.0
        %3405 = vst.msk [vmem:[#allocation3 + $0x168] sm:$0xff] %vm3359, 0.0
        %3406 = vst.msk [vmem:[#allocation3 + $0x170] sm:$0xff] %vm3359, 0.0
        %3407 = vst.msk [vmem:[#allocation3 + $0x178] sm:$0xff] %vm3359, 0.0
        %3408 = vst.msk [vmem:[#allocation3 + $0x180] sm:$0xff] %vm3359, 0.0
        %3409 = vst.msk [vmem:[#allocation3 + $0x188] sm:$0xff] %vm3359, 0.0
        %3410 = vst.msk [vmem:[#allocation3 + $0x190] sm:$0xff] %vm3359, 0.0
        %3411 = vst.msk [vmem:[#allocation3 + $0x198] sm:$0xff] %vm3359, 0.0
        %3412 = vst.msk [vmem:[#allocation3 + $0x1a0] sm:$0xff] %vm3359, 0.0
        %3413 = vst.msk [vmem:[#allocation3 + $0x1a8] sm:$0xff] %vm3359, 0.0
        %3414 = vst.msk [vmem:[#allocation3 + $0x1b0] sm:$0xff] %vm3359, 0.0
        %3415 = vst.msk [vmem:[#allocation3 + $0x1b8] sm:$0xff] %vm3359, 0.0
        %3416 = vst.msk [vmem:[#allocation3 + $0x1c0] sm:$0xff] %vm3359, 0.0
        %3417 = vst.msk [vmem:[#allocation3 + $0x1c8] sm:$0xff] %vm3359, 0.0
        %3418 = vst.msk [vmem:[#allocation3 + $0x1d0] sm:$0xff] %vm3359, 0.0
        %3419 = vst.msk [vmem:[#allocation3 + $0x1d8] sm:$0xff] %vm3359, 0.0
        %3420 = vst.msk [vmem:[#allocation3 + $0x1e0] sm:$0xff] %vm3359, 0.0
        %3421 = vst.msk [vmem:[#allocation3 + $0x1e8] sm:$0xff] %vm3359, 0.0
        %3422 = vst.msk [vmem:[#allocation3 + $0x1f0] sm:$0xff] %vm3359, 0.0
        %3423 = vst.msk [vmem:[#allocation3 + $0x1f8] sm:$0xff] %vm3359, 0.0
        %3424 = vst.msk [vmem:[#allocation3 + $0x200] sm:$0xff] %vm3359, 0.0
        %3425 = vst.msk [vmem:[#allocation3 + $0x208] sm:$0xff] %vm3359, 0.0
        %3426 = vst.msk [vmem:[#allocation3 + $0x210] sm:$0xff] %vm3359, 0.0
        %3427 = vst.msk [vmem:[#allocation3 + $0x218] sm:$0xff] %vm3359, 0.0
        %3428 = vst.msk [vmem:[#allocation3 + $0x220] sm:$0xff] %vm3359, 0.0
        %3429 = vst.msk [vmem:[#allocation3 + $0x228] sm:$0xff] %vm3359, 0.0
        %3430 = vst.msk [vmem:[#allocation3 + $0x230] sm:$0xff] %vm3359, 0.0
        %3431 = vst.msk [vmem:[#allocation3 + $0x238] sm:$0xff] %vm3359, 0.0
        %s3432 = scalar_lea.vmem [#allocation3], 32
        %3433 = vst.msk [vmem:[%s3432 + $0x8] sm:$0xff] %vm3359, %v3327
        %3434 = vst.msk [vmem:[%s3432 + $0x10] sm:$0xff] %vm3359, %v3328
        %3435 = vst.msk [vmem:[%s3432 + $0x28] sm:$0xff] %vm3359, %v3329
        %3436 = vst.msk [vmem:[%s3432 + $0x30] sm:$0xff] %vm3359, %v3330
        %3437 = vst.msk [vmem:[%s3432 + $0x48] sm:$0xff] %vm3359, %v3331
        %3438 = vst.msk [vmem:[%s3432 + $0x50] sm:$0xff] %vm3359, %v3332
        %3439 = vst.msk [vmem:[%s3432 + $0x68] sm:$0xff] %vm3359, %v3333
        %3440 = vst.msk [vmem:[%s3432 + $0x70] sm:$0xff] %vm3359, %v3334
        %3441 = vst.msk [vmem:[%s3432 + $0x88] sm:$0xff] %vm3359, %v3335
        %3442 = vst.msk [vmem:[%s3432 + $0x90] sm:$0xff] %vm3359, %v3336
        %3443 = vst.msk [vmem:[%s3432 + $0xa8] sm:$0xff] %vm3359, %v3337
        %3444 = vst.msk [vmem:[%s3432 + $0xb0] sm:$0xff] %vm3359, %v3338
        %3445 = vst.msk [vmem:[%s3432 + $0xc8] sm:$0xff] %vm3359, %v3339
        %3446 = vst.msk [vmem:[%s3432 + $0xd0] sm:$0xff] %vm3359, %v3340
        %3447 = vst.msk [vmem:[%s3432 + $0xe8] sm:$0xff] %vm3359, %v3341
        %3448 = vst.msk [vmem:[%s3432 + $0xf0] sm:$0xff] %vm3359, %v3342
        %3449 = vst.msk [vmem:[%s3432 + $0x108] sm:$0xff] %vm3359, %v3343
        %3450 = vst.msk [vmem:[%s3432 + $0x110] sm:$0xff] %vm3359, %v3344
        %3451 = vst.msk [vmem:[%s3432 + $0x128] sm:$0xff] %vm3359, %v3345
        %3452 = vst.msk [vmem:[%s3432 + $0x130] sm:$0xff] %vm3359, %v3346
        %3453 = vst.msk [vmem:[%s3432 + $0x148] sm:$0xff] %vm3359, %v3347
        %3454 = vst.msk [vmem:[%s3432 + $0x150] sm:$0xff] %vm3359, %v3348
        %3455 = vst.msk [vmem:[%s3432 + $0x168] sm:$0xff] %vm3359, %v3349
        %3456 = vst.msk [vmem:[%s3432 + $0x170] sm:$0xff] %vm3359, %v3350
        %3457 = vst.msk [vmem:[%s3432 + $0x188] sm:$0xff] %vm3359, %v3351
        %3458 = vst.msk [vmem:[%s3432 + $0x190] sm:$0xff] %vm3359, %v3352
        %3459 = vst.msk [vmem:[%s3432 + $0x1a8] sm:$0xff] %vm3359, %v3353
        %3460 = vst.msk [vmem:[%s3432 + $0x1b0] sm:$0xff] %vm3359, %v3354
        %3461 = vst.msk [vmem:[%s3432 + $0x1c8] sm:$0xff] %vm3359, %v3355
        %3462 = vst.msk [vmem:[%s3432 + $0x1d0] sm:$0xff] %vm3359, %v3356
        %3463 = vst.msk [vmem:[%s3432 + $0x1e8] sm:$0xff] %vm3359, %v3357
        %3464 = vst.msk [vmem:[%s3432 + $0x1f0] sm:$0xff] %vm3359, %v3358
        %v3465 = vld [vmem:[#allocation3] sm:$0xff]
        %v3466 = vld [vmem:[#allocation3 + $0x8] sm:$0xff]
        %v3467 = vld [vmem:[#allocation3 + $0x10] sm:$0xff]
        %v3468 = vld [vmem:[#allocation3 + $0x18] sm:$0xff]
        %v3469 = vld [vmem:[#allocation3 + $0x20] sm:$0xff]
        %v3470 = vld [vmem:[#allocation3 + $0x28] sm:$0xff]
        %v3471 = vld [vmem:[#allocation3 + $0x30] sm:$0xff]
        %v3472 = vld [vmem:[#allocation3 + $0x38] sm:$0xff]
        %v3473 = vld [vmem:[#allocation3 + $0x40] sm:$0xff]
        %v3474 = vld [vmem:[#allocation3 + $0x48] sm:$0xff]
        %v3475 = vld [vmem:[#allocation3 + $0x50] sm:$0xff]
        %v3476 = vld [vmem:[#allocation3 + $0x58] sm:$0xff]
        %v3477 = vld [vmem:[#allocation3 + $0x60] sm:$0xff]
        %v3478 = vld [vmem:[#allocation3 + $0x68] sm:$0xff]
        %v3479 = vld [vmem:[#allocation3 + $0x70] sm:$0xff]
        %v3480 = vld [vmem:[#allocation3 + $0x78] sm:$0xff]
        %v3481 = vld [vmem:[#allocation3 + $0x80] sm:$0xff]
        %v3482 = vld [vmem:[#allocation3 + $0x88] sm:$0xff]
        %v3483 = vld [vmem:[#allocation3 + $0x90] sm:$0xff]
        %v3484 = vld [vmem:[#allocation3 + $0x98] sm:$0xff]
        %v3485 = vld [vmem:[#allocation3 + $0xa0] sm:$0xff]
        %v3486 = vld [vmem:[#allocation3 + $0xa8] sm:$0xff]
        %v3487 = vld [vmem:[#allocation3 + $0xb0] sm:$0xff]
        %v3488 = vld [vmem:[#allocation3 + $0xb8] sm:$0xff]
        %v3489 = vld [vmem:[#allocation3 + $0xc0] sm:$0xff]
        %v3490 = vld [vmem:[#allocation3 + $0xc8] sm:$0xff]
        %v3491 = vld [vmem:[#allocation3 + $0xd0] sm:$0xff]
        %v3492 = vld [vmem:[#allocation3 + $0xd8] sm:$0xff]
        %v3493 = vld [vmem:[#allocation3 + $0xe0] sm:$0xff]
        %v3494 = vld [vmem:[#allocation3 + $0xe8] sm:$0xff]
        %v3495 = vld [vmem:[#allocation3 + $0xf0] sm:$0xff]
        %v3496 = vld [vmem:[#allocation3 + $0xf8] sm:$0xff]
        %v3497 = vld [vmem:[#allocation3 + $0x100] sm:$0xff]
        %v3498 = vld [vmem:[#allocation3 + $0x108] sm:$0xff]
        %v3499 = vld [vmem:[#allocation3 + $0x110] sm:$0xff]
        %v3500 = vld [vmem:[#allocation3 + $0x118] sm:$0xff]
        %v3501 = vld [vmem:[#allocation3 + $0x120] sm:$0xff]
        %v3502 = vld [vmem:[#allocation3 + $0x128] sm:$0xff]
        %v3503 = vld [vmem:[#allocation3 + $0x130] sm:$0xff]
        %v3504 = vld [vmem:[#allocation3 + $0x138] sm:$0xff]
        %v3505 = vld [vmem:[#allocation3 + $0x140] sm:$0xff]
        %v3506 = vld [vmem:[#allocation3 + $0x148] sm:$0xff]
        %v3507 = vld [vmem:[#allocation3 + $0x150] sm:$0xff]
        %v3508 = vld [vmem:[#allocation3 + $0x158] sm:$0xff]
        %v3509 = vld [vmem:[#allocation3 + $0x160] sm:$0xff]
        %v3510 = vld [vmem:[#allocation3 + $0x168] sm:$0xff]
        %v3511 = vld [vmem:[#allocation3 + $0x170] sm:$0xff]
        %v3512 = vld [vmem:[#allocation3 + $0x178] sm:$0xff]
        %v3513 = vld [vmem:[#allocation3 + $0x180] sm:$0xff]
        %v3514 = vld [vmem:[#allocation3 + $0x188] sm:$0xff]
        %v3515 = vld [vmem:[#allocation3 + $0x190] sm:$0xff]
        %v3516 = vld [vmem:[#allocation3 + $0x198] sm:$0xff]
        %v3517 = vld [vmem:[#allocation3 + $0x1a0] sm:$0xff]
        %v3518 = vld [vmem:[#allocation3 + $0x1a8] sm:$0xff]
        %v3519 = vld [vmem:[#allocation3 + $0x1b0] sm:$0xff]
        %v3520 = vld [vmem:[#allocation3 + $0x1b8] sm:$0xff]
        %v3521 = vld [vmem:[#allocation3 + $0x1c0] sm:$0xff]
        %v3522 = vld [vmem:[#allocation3 + $0x1c8] sm:$0xff]
        %v3523 = vld [vmem:[#allocation3 + $0x1d0] sm:$0xff]
        %v3524 = vld [vmem:[#allocation3 + $0x1d8] sm:$0xff]
        %v3525 = vld [vmem:[#allocation3 + $0x1e0] sm:$0xff]
        %v3526 = vld [vmem:[#allocation3 + $0x1e8] sm:$0xff]
        %v3527 = vld [vmem:[#allocation3 + $0x1f0] sm:$0xff]
        %v3528 = vld [vmem:[#allocation3 + $0x1f8] sm:$0xff]
        %v3529 = vld [vmem:[#allocation3 + $0x200] sm:$0xff]
        %v3530 = vld [vmem:[#allocation3 + $0x208] sm:$0xff]
        %v3531 = vld [vmem:[#allocation3 + $0x210] sm:$0xff]
        %v3532 = vld [vmem:[#allocation3 + $0x218] sm:$0xff]
        %v3533 = vld [vmem:[#allocation3 + $0x220] sm:$0xff]
        %v3534 = vld [vmem:[#allocation3 + $0x228] sm:$0xff]
        %v3535 = vld [vmem:[#allocation3 + $0x230] sm:$0xff]
        %v3536 = vld [vmem:[#allocation3 + $0x238] sm:$0xff]
        %v3537 = vld [vmem:[%s6] sm:$0x1]
        %v3539 = vperm.slane %v3537, 0
        %v3589 = vrot.slane %v3465, 7
        %v3590 = vrot.slane %v3466, 7
        %v3591 = vsel %vm1574, %v3589, %v3590
        %v3592 = vrot.slane %v3467, 7
        %v3593 = vsel %vm1574, %v3590, %v3592
        %v3594 = vrot.slane %v3469, 7
        %v3595 = vrot.slane %v3470, 7
        %v3596 = vsel %vm1574, %v3594, %v3595
        %v3597 = vrot.slane %v3471, 7
        %v3598 = vsel %vm1574, %v3595, %v3597
        %v3599 = vrot.slane %v3473, 7
        %v3600 = vrot.slane %v3474, 7
        %v3601 = vsel %vm1574, %v3599, %v3600
        %v3602 = vrot.slane %v3475, 7
        %v3603 = vsel %vm1574, %v3600, %v3602
        %v3604 = vrot.slane %v3477, 7
        %v3605 = vrot.slane %v3478, 7
        %v3606 = vsel %vm1574, %v3604, %v3605
        %v3607 = vrot.slane %v3479, 7
        %v3608 = vsel %vm1574, %v3605, %v3607
        %v3609 = vrot.slane %v3481, 7
        %v3610 = vrot.slane %v3482, 7
        %v3611 = vsel %vm1574, %v3609, %v3610
        %v3612 = vrot.slane %v3483, 7
        %v3613 = vsel %vm1574, %v3610, %v3612
        %v3614 = vrot.slane %v3485, 7
        %v3615 = vrot.slane %v3486, 7
        %v3616 = vsel %vm1574, %v3614, %v3615
        %v3617 = vrot.slane %v3487, 7
        %v3618 = vsel %vm1574, %v3615, %v3617
        %v3619 = vrot.slane %v3489, 7
        %v3620 = vrot.slane %v3490, 7
        %v3621 = vsel %vm1574, %v3619, %v3620
        %v3622 = vrot.slane %v3491, 7
        %v3623 = vsel %vm1574, %v3620, %v3622
        %v3624 = vrot.slane %v3493, 7
        %v3625 = vrot.slane %v3494, 7
        %v3626 = vsel %vm1574, %v3624, %v3625
        %v3627 = vrot.slane %v3495, 7
        %v3628 = vsel %vm1574, %v3625, %v3627
        %v3629 = vrot.slane %v3497, 7
        %v3630 = vrot.slane %v3498, 7
        %v3631 = vsel %vm1574, %v3629, %v3630
        %v3632 = vrot.slane %v3499, 7
        %v3633 = vsel %vm1574, %v3630, %v3632
        %v3634 = vrot.slane %v3501, 7
        %v3635 = vrot.slane %v3502, 7
        %v3636 = vsel %vm1574, %v3634, %v3635
        %v3637 = vrot.slane %v3503, 7
        %v3638 = vsel %vm1574, %v3635, %v3637
        %v3639 = vrot.slane %v3505, 7
        %v3640 = vrot.slane %v3506, 7
        %v3641 = vsel %vm1574, %v3639, %v3640
        %v3642 = vrot.slane %v3507, 7
        %v3643 = vsel %vm1574, %v3640, %v3642
        %v3644 = vrot.slane %v3509, 7
        %v3645 = vrot.slane %v3510, 7
        %v3646 = vsel %vm1574, %v3644, %v3645
        %v3647 = vrot.slane %v3511, 7
        %v3648 = vsel %vm1574, %v3645, %v3647
        %v3649 = vrot.slane %v3513, 7
        %v3650 = vrot.slane %v3514, 7
        %v3651 = vsel %vm1574, %v3649, %v3650
        %v3652 = vrot.slane %v3515, 7
        %v3653 = vsel %vm1574, %v3650, %v3652
        %v3654 = vrot.slane %v3517, 7
        %v3655 = vrot.slane %v3518, 7
        %v3656 = vsel %vm1574, %v3654, %v3655
        %v3657 = vrot.slane %v3519, 7
        %v3658 = vsel %vm1574, %v3655, %v3657
        %v3659 = vrot.slane %v3521, 7
        %v3660 = vrot.slane %v3522, 7
        %v3661 = vsel %vm1574, %v3659, %v3660
        %v3662 = vrot.slane %v3523, 7
        %v3663 = vsel %vm1574, %v3660, %v3662
        %v3664 = vrot.slane %v3525, 7
        %v3665 = vrot.slane %v3526, 7
        %v3666 = vsel %vm1574, %v3664, %v3665
        %v3667 = vrot.slane %v3527, 7
        %v3668 = vsel %vm1574, %v3665, %v3667
        %v3669 = vld [vmem:[%s5] sm:$0xff]
        %v3670 = vld [vmem:[%s5 + $0x8] sm:$0xff]
        %v3671 = vld [vmem:[%s5 + $0x10] sm:$0xff]
        %v3672 = vld [vmem:[%s5 + $0x18] sm:$0xff]
        %v3673 = vsel %vm3359, %v3591, 0
        %v3675 = vsel %vm3359, %v3593, 0
        %v3677 = vsel %vm3359, %v3596, 0
        %v3679 = vsel %vm3359, %v3598, 0
        %v3681 = vsel %vm3359, %v3601, 0
        %v3683 = vsel %vm3359, %v3603, 0
        %v3685 = vsel %vm3359, %v3606, 0
        %v3687 = vsel %vm3359, %v3608, 0
        %v3689 = vsel %vm3359, %v3611, 0
        %v3691 = vsel %vm3359, %v3613, 0
        %v3693 = vsel %vm3359, %v3616, 0
        %v3695 = vsel %vm3359, %v3618, 0
        %v3697 = vsel %vm3359, %v3621, 0
        %v3699 = vsel %vm3359, %v3623, 0
        %v3701 = vsel %vm3359, %v3626, 0
        %v3703 = vsel %vm3359, %v3628, 0
        %v3705 = vsel %vm3359, %v3631, 0
        %v3707 = vsel %vm3359, %v3633, 0
        %v3709 = vsel %vm3359, %v3636, 0
        %v3711 = vsel %vm3359, %v3638, 0
        %v3713 = vsel %vm3359, %v3641, 0
        %v3715 = vsel %vm3359, %v3643, 0
        %v3717 = vsel %vm3359, %v3646, 0
        %v3719 = vsel %vm3359, %v3648, 0
        %v3721 = vsel %vm3359, %v3651, 0
        %v3723 = vsel %vm3359, %v3653, 0
        %v3725 = vsel %vm3359, %v3656, 0
        %v3727 = vsel %vm3359, %v3658, 0
        %v3729 = vsel %vm3359, %v3661, 0
        %v3731 = vsel %vm3359, %v3663, 0
        %v3733 = vsel %vm3359, %v3666, 0
        %v3735 = vsel %vm3359, %v3668, 0
        %3737 = vmatpush.msra.mxu0 0.0
        %3738 = vmatpush.msra.mxu0 0.0
        %3739 = vmatpush.msra.mxu0 0.0
        %3740 = vmatpush.msra.mxu0 0.0
        %3741 = vmatpush.msra.mxu0 0.0
        %3742 = vmatpush.msra.mxu0 0.0
        %3743 = vmatpush.msra.mxu0 0.0
        %3744 = vmatpush.msra.mxu0 0.0
        %3745 = vmatpush.msra.mxu0 0.0
        %3746 = vmatpush.msra.mxu0 0.0
        %3747 = vmatpush.msra.mxu0 0.0
        %3748 = vmatpush.msra.mxu0 0.0
        %3749 = vmatpush.msra.mxu0 %v3672
        %3750 = vmatpush.msra.mxu0 %v3671
        %3751 = vmatpush.msra.mxu0 %v3670
        %3752 = vmatpush.msra.mxu0 %v3669
        %3753 = vmatmul.f32.gmra.mxu0 %v3673
        %v3754 = vpop.f32.mrf.mxu0
        %v3755 = vadd.f32 0.0, %v3754
        %3756 = vmatmul.f32.gmra.mxu0 %v3675
        %v3757 = vpop.f32.mrf.mxu0
        %v3758 = vadd.f32 0.0, %v3757
        %3759 = vmatmul.f32.gmra.mxu0 %v3677
        %v3760 = vpop.f32.mrf.mxu0
        %v3761 = vadd.f32 0.0, %v3760
        %3762 = vmatmul.f32.gmra.mxu0 %v3679
        %v3763 = vpop.f32.mrf.mxu0
        %v3764 = vadd.f32 0.0, %v3763
        %3765 = vmatmul.f32.gmra.mxu0 %v3681
        %v3766 = vpop.f32.mrf.mxu0
        %v3767 = vadd.f32 0.0, %v3766
        %3768 = vmatmul.f32.gmra.mxu0 %v3683
        %v3769 = vpop.f32.mrf.mxu0
        %v3770 = vadd.f32 0.0, %v3769
        %3771 = vmatmul.f32.gmra.mxu0 %v3685
        %v3772 = vpop.f32.mrf.mxu0
        %v3773 = vadd.f32 0.0, %v3772
        %3774 = vmatmul.f32.gmra.mxu0 %v3687
        %v3775 = vpop.f32.mrf.mxu0
        %v3776 = vadd.f32 0.0, %v3775
        %3777 = vmatmul.f32.gmra.mxu0 %v3689
        %v3778 = vpop.f32.mrf.mxu0
        %v3779 = vadd.f32 0.0, %v3778
        %3780 = vmatmul.f32.gmra.mxu0 %v3691
        %v3781 = vpop.f32.mrf.mxu0
        %v3782 = vadd.f32 0.0, %v3781
        %3783 = vmatmul.f32.gmra.mxu0 %v3693
        %v3784 = vpop.f32.mrf.mxu0
        %v3785 = vadd.f32 0.0, %v3784
        %3786 = vmatmul.f32.gmra.mxu0 %v3695
        %v3787 = vpop.f32.mrf.mxu0
        %v3788 = vadd.f32 0.0, %v3787
        %3789 = vmatmul.f32.gmra.mxu0 %v3697
        %v3790 = vpop.f32.mrf.mxu0
        %v3791 = vadd.f32 0.0, %v3790
        %3792 = vmatmul.f32.gmra.mxu0 %v3699
        %v3793 = vpop.f32.mrf.mxu0
        %v3794 = vadd.f32 0.0, %v3793
        %3795 = vmatmul.f32.gmra.mxu0 %v3701
        %v3796 = vpop.f32.mrf.mxu0
        %v3797 = vadd.f32 0.0, %v3796
        %3798 = vmatmul.f32.gmra.mxu0 %v3703
        %v3799 = vpop.f32.mrf.mxu0
        %v3800 = vadd.f32 0.0, %v3799
        %3801 = vmatmul.f32.gmra.mxu0 %v3705
        %v3802 = vpop.f32.mrf.mxu0
        %v3803 = vadd.f32 0.0, %v3802
        %3804 = vmatmul.f32.gmra.mxu0 %v3707
        %v3805 = vpop.f32.mrf.mxu0
        %v3806 = vadd.f32 0.0, %v3805
        %3807 = vmatmul.f32.gmra.mxu0 %v3709
        %v3808 = vpop.f32.mrf.mxu0
        %v3809 = vadd.f32 0.0, %v3808
        %3810 = vmatmul.f32.gmra.mxu0 %v3711
        %v3811 = vpop.f32.mrf.mxu0
        %v3812 = vadd.f32 0.0, %v3811
        %3813 = vmatmul.f32.gmra.mxu0 %v3713
        %v3814 = vpop.f32.mrf.mxu0
        %v3815 = vadd.f32 0.0, %v3814
        %3816 = vmatmul.f32.gmra.mxu0 %v3715
        %v3817 = vpop.f32.mrf.mxu0
        %v3818 = vadd.f32 0.0, %v3817
        %3819 = vmatmul.f32.gmra.mxu0 %v3717
        %v3820 = vpop.f32.mrf.mxu0
        %v3821 = vadd.f32 0.0, %v3820
        %3822 = vmatmul.f32.gmra.mxu0 %v3719
        %v3823 = vpop.f32.mrf.mxu0
        %v3824 = vadd.f32 0.0, %v3823
        %3825 = vmatmul.f32.gmra.mxu0 %v3721
        %v3826 = vpop.f32.mrf.mxu0
        %v3827 = vadd.f32 0.0, %v3826
        %3828 = vmatmul.f32.gmra.mxu0 %v3723
        %v3829 = vpop.f32.mrf.mxu0
        %v3830 = vadd.f32 0.0, %v3829
        %3831 = vmatmul.f32.gmra.mxu0 %v3725
        %v3832 = vpop.f32.mrf.mxu0
        %v3833 = vadd.f32 0.0, %v3832
        %3834 = vmatmul.f32.gmra.mxu0 %v3727
        %v3835 = vpop.f32.mrf.mxu0
        %v3836 = vadd.f32 0.0, %v3835
        %3837 = vmatmul.f32.gmra.mxu0 %v3729
        %v3838 = vpop.f32.mrf.mxu0
        %v3839 = vadd.f32 0.0, %v3838
        %3840 = vmatmul.f32.gmra.mxu0 %v3731
        %v3841 = vpop.f32.mrf.mxu0
        %v3842 = vadd.f32 0.0, %v3841
        %3843 = vmatmul.f32.gmra.mxu0 %v3733
        %v3844 = vpop.f32.mrf.mxu0
        %v3845 = vadd.f32 0.0, %v3844
        %3846 = vmatmul.f32.gmra.mxu0 %v3735
        %v3847 = vpop.f32.mrf.mxu0
        %v3848 = vadd.f32 0.0, %v3847
        %3849 = vdwg.mxu0
        %v3850 = vadd.f32 %v3539, %v3755
        %v3851 = vadd.f32 %v3539, %v3758
        %v3852 = vadd.f32 %v3539, %v3761
        %v3853 = vadd.f32 %v3539, %v3764
        %v3854 = vadd.f32 %v3539, %v3767
        %v3855 = vadd.f32 %v3539, %v3770
        %v3856 = vadd.f32 %v3539, %v3773
        %v3857 = vadd.f32 %v3539, %v3776
        %v3858 = vadd.f32 %v3539, %v3779
        %v3859 = vadd.f32 %v3539, %v3782
        %v3860 = vadd.f32 %v3539, %v3785
        %v3861 = vadd.f32 %v3539, %v3788
        %v3862 = vadd.f32 %v3539, %v3791
        %v3863 = vadd.f32 %v3539, %v3794
        %v3864 = vadd.f32 %v3539, %v3797
        %v3865 = vadd.f32 %v3539, %v3800
        %v3866 = vadd.f32 %v3539, %v3803
        %v3867 = vadd.f32 %v3539, %v3806
        %v3868 = vadd.f32 %v3539, %v3809
        %v3869 = vadd.f32 %v3539, %v3812
        %v3870 = vadd.f32 %v3539, %v3815
        %v3871 = vadd.f32 %v3539, %v3818
        %v3872 = vadd.f32 %v3539, %v3821
        %v3873 = vadd.f32 %v3539, %v3824
        %v3874 = vadd.f32 %v3539, %v3827
        %v3875 = vadd.f32 %v3539, %v3830
        %v3876 = vadd.f32 %v3539, %v3833
        %v3877 = vadd.f32 %v3539, %v3836
        %v3878 = vadd.f32 %v3539, %v3839
        %v3879 = vadd.f32 %v3539, %v3842
        %v3880 = vadd.f32 %v3539, %v3845
        %v3881 = vadd.f32 %v3539, %v3848
        %s3882 = scalar_lea.vmem %s5, 32
        %v3883 = vld [vmem:[%s3882] sm:$0xff]
        %v3884 = vld [vmem:[%s3882 + $0x8] sm:$0xff]
        %v3885 = vld [vmem:[%s3882 + $0x10] sm:$0xff]
        %v3886 = vld [vmem:[%s3882 + $0x18] sm:$0xff]
        %v3887 = vsel %vm3359, %v3466, 0
        %v3889 = vsel %vm3359, %v3467, 0
        %v3891 = vsel %vm3359, %v3470, 0
        %v3893 = vsel %vm3359, %v3471, 0
        %v3895 = vsel %vm3359, %v3474, 0
        %v3897 = vsel %vm3359, %v3475, 0
        %v3899 = vsel %vm3359, %v3478, 0
        %v3901 = vsel %vm3359, %v3479, 0
        %v3903 = vsel %vm3359, %v3482, 0
        %v3905 = vsel %vm3359, %v3483, 0
        %v3907 = vsel %vm3359, %v3486, 0
        %v3909 = vsel %vm3359, %v3487, 0
        %v3911 = vsel %vm3359, %v3490, 0
        %v3913 = vsel %vm3359, %v3491, 0
        %v3915 = vsel %vm3359, %v3494, 0
        %v3917 = vsel %vm3359, %v3495, 0
        %v3919 = vsel %vm3359, %v3498, 0
        %v3921 = vsel %vm3359, %v3499, 0
        %v3923 = vsel %vm3359, %v3502, 0
        %v3925 = vsel %vm3359, %v3503, 0
        %v3927 = vsel %vm3359, %v3506, 0
        %v3929 = vsel %vm3359, %v3507, 0
        %v3931 = vsel %vm3359, %v3510, 0
        %v3933 = vsel %vm3359, %v3511, 0
        %v3935 = vsel %vm3359, %v3514, 0
        %v3937 = vsel %vm3359, %v3515, 0
        %v3939 = vsel %vm3359, %v3518, 0
        %v3941 = vsel %vm3359, %v3519, 0
        %v3943 = vsel %vm3359, %v3522, 0
        %v3945 = vsel %vm3359, %v3523, 0
        %v3947 = vsel %vm3359, %v3526, 0
        %v3949 = vsel %vm3359, %v3527, 0
        %3951 = vmatpush.msra.mxu0 0.0
        %3952 = vmatpush.msra.mxu0 0.0
        %3953 = vmatpush.msra.mxu0 0.0
        %3954 = vmatpush.msra.mxu0 0.0
        %3955 = vmatpush.msra.mxu0 0.0
        %3956 = vmatpush.msra.mxu0 0.0
        %3957 = vmatpush.msra.mxu0 0.0
        %3958 = vmatpush.msra.mxu0 0.0
        %3959 = vmatpush.msra.mxu0 0.0
        %3960 = vmatpush.msra.mxu0 0.0
        %3961 = vmatpush.msra.mxu0 0.0
        %3962 = vmatpush.msra.mxu0 0.0
        %3963 = vmatpush.msra.mxu0 %v3886
        %3964 = vmatpush.msra.mxu0 %v3885
        %3965 = vmatpush.msra.mxu0 %v3884
        %3966 = vmatpush.msra.mxu0 %v3883
        %3967 = vmatmul.f32.gmra.mxu0 %v3887
        %v3968 = vpop.f32.mrf.mxu0
        %v3969 = vadd.f32 0.0, %v3968
        %3970 = vmatmul.f32.gmra.mxu0 %v3889
        %v3971 = vpop.f32.mrf.mxu0
        %v3972 = vadd.f32 0.0, %v3971
        %3973 = vmatmul.f32.gmra.mxu0 %v3891
        %v3974 = vpop.f32.mrf.mxu0
        %v3975 = vadd.f32 0.0, %v3974
        %3976 = vmatmul.f32.gmra.mxu0 %v3893
        %v3977 = vpop.f32.mrf.mxu0
        %v3978 = vadd.f32 0.0, %v3977
        %3979 = vmatmul.f32.gmra.mxu0 %v3895
        %v3980 = vpop.f32.mrf.mxu0
        %v3981 = vadd.f32 0.0, %v3980
        %3982 = vmatmul.f32.gmra.mxu0 %v3897
        %v3983 = vpop.f32.mrf.mxu0
        %v3984 = vadd.f32 0.0, %v3983
        %3985 = vmatmul.f32.gmra.mxu0 %v3899
        %v3986 = vpop.f32.mrf.mxu0
        %v3987 = vadd.f32 0.0, %v3986
        %3988 = vmatmul.f32.gmra.mxu0 %v3901
        %v3989 = vpop.f32.mrf.mxu0
        %v3990 = vadd.f32 0.0, %v3989
        %3991 = vmatmul.f32.gmra.mxu0 %v3903
        %v3992 = vpop.f32.mrf.mxu0
        %v3993 = vadd.f32 0.0, %v3992
        %3994 = vmatmul.f32.gmra.mxu0 %v3905
        %v3995 = vpop.f32.mrf.mxu0
        %v3996 = vadd.f32 0.0, %v3995
        %3997 = vmatmul.f32.gmra.mxu0 %v3907
        %v3998 = vpop.f32.mrf.mxu0
        %v3999 = vadd.f32 0.0, %v3998
        %4000 = vmatmul.f32.gmra.mxu0 %v3909
        %v4001 = vpop.f32.mrf.mxu0
        %v4002 = vadd.f32 0.0, %v4001
        %4003 = vmatmul.f32.gmra.mxu0 %v3911
        %v4004 = vpop.f32.mrf.mxu0
        %v4005 = vadd.f32 0.0, %v4004
        %4006 = vmatmul.f32.gmra.mxu0 %v3913
        %v4007 = vpop.f32.mrf.mxu0
        %v4008 = vadd.f32 0.0, %v4007
        %4009 = vmatmul.f32.gmra.mxu0 %v3915
        %v4010 = vpop.f32.mrf.mxu0
        %v4011 = vadd.f32 0.0, %v4010
        %4012 = vmatmul.f32.gmra.mxu0 %v3917
        %v4013 = vpop.f32.mrf.mxu0
        %v4014 = vadd.f32 0.0, %v4013
        %4015 = vmatmul.f32.gmra.mxu0 %v3919
        %v4016 = vpop.f32.mrf.mxu0
        %v4017 = vadd.f32 0.0, %v4016
        %4018 = vmatmul.f32.gmra.mxu0 %v3921
        %v4019 = vpop.f32.mrf.mxu0
        %v4020 = vadd.f32 0.0, %v4019
        %4021 = vmatmul.f32.gmra.mxu0 %v3923
        %v4022 = vpop.f32.mrf.mxu0
        %v4023 = vadd.f32 0.0, %v4022
        %4024 = vmatmul.f32.gmra.mxu0 %v3925
        %v4025 = vpop.f32.mrf.mxu0
        %v4026 = vadd.f32 0.0, %v4025
        %4027 = vmatmul.f32.gmra.mxu0 %v3927
        %v4028 = vpop.f32.mrf.mxu0
        %v4029 = vadd.f32 0.0, %v4028
        %4030 = vmatmul.f32.gmra.mxu0 %v3929
        %v4031 = vpop.f32.mrf.mxu0
        %v4032 = vadd.f32 0.0, %v4031
        %4033 = vmatmul.f32.gmra.mxu0 %v3931
        %v4034 = vpop.f32.mrf.mxu0
        %v4035 = vadd.f32 0.0, %v4034
        %4036 = vmatmul.f32.gmra.mxu0 %v3933
        %v4037 = vpop.f32.mrf.mxu0
        %v4038 = vadd.f32 0.0, %v4037
        %4039 = vmatmul.f32.gmra.mxu0 %v3935
        %v4040 = vpop.f32.mrf.mxu0
        %v4041 = vadd.f32 0.0, %v4040
        %4042 = vmatmul.f32.gmra.mxu0 %v3937
        %v4043 = vpop.f32.mrf.mxu0
        %v4044 = vadd.f32 0.0, %v4043
        %4045 = vmatmul.f32.gmra.mxu0 %v3939
        %v4046 = vpop.f32.mrf.mxu0
        %v4047 = vadd.f32 0.0, %v4046
        %4048 = vmatmul.f32.gmra.mxu0 %v3941
        %v4049 = vpop.f32.mrf.mxu0
        %v4050 = vadd.f32 0.0, %v4049
        %4051 = vmatmul.f32.gmra.mxu0 %v3943
        %v4052 = vpop.f32.mrf.mxu0
        %v4053 = vadd.f32 0.0, %v4052
        %4054 = vmatmul.f32.gmra.mxu0 %v3945
        %v4055 = vpop.f32.mrf.mxu0
        %v4056 = vadd.f32 0.0, %v4055
        %4057 = vmatmul.f32.gmra.mxu0 %v3947
        %v4058 = vpop.f32.mrf.mxu0
        %v4059 = vadd.f32 0.0, %v4058
        %4060 = vmatmul.f32.gmra.mxu0 %v3949
        %v4061 = vpop.f32.mrf.mxu0
        %v4062 = vadd.f32 0.0, %v4061
        %4063 = vdwg.mxu0
        %v4064 = vadd.f32 %v3850, %v3969
        %v4065 = vadd.f32 %v3851, %v3972
        %v4066 = vadd.f32 %v3852, %v3975
        %v4067 = vadd.f32 %v3853, %v3978
        %v4068 = vadd.f32 %v3854, %v3981
        %v4069 = vadd.f32 %v3855, %v3984
        %v4070 = vadd.f32 %v3856, %v3987
        %v4071 = vadd.f32 %v3857, %v3990
        %v4072 = vadd.f32 %v3858, %v3993
        %v4073 = vadd.f32 %v3859, %v3996
        %v4074 = vadd.f32 %v3860, %v3999
        %v4075 = vadd.f32 %v3861, %v4002
        %v4076 = vadd.f32 %v3862, %v4005
        %v4077 = vadd.f32 %v3863, %v4008
        %v4078 = vadd.f32 %v3864, %v4011
        %v4079 = vadd.f32 %v3865, %v4014
        %v4080 = vadd.f32 %v3866, %v4017
        %v4081 = vadd.f32 %v3867, %v4020
        %v4082 = vadd.f32 %v3868, %v4023
        %v4083 = vadd.f32 %v3869, %v4026
        %v4084 = vadd.f32 %v3870, %v4029
        %v4085 = vadd.f32 %v3871, %v4032
        %v4086 = vadd.f32 %v3872, %v4035
        %v4087 = vadd.f32 %v3873, %v4038
        %v4088 = vadd.f32 %v3874, %v4041
        %v4089 = vadd.f32 %v3875, %v4044
        %v4090 = vadd.f32 %v3876, %v4047
        %v4091 = vadd.f32 %v3877, %v4050
        %v4092 = vadd.f32 %v3878, %v4053
        %v4093 = vadd.f32 %v3879, %v4056
        %v4094 = vadd.f32 %v3880, %v4059
        %v4095 = vadd.f32 %v3881, %v4062
        %v4112 = vrot.slane %v3466, 1
        %v4113 = vrot.slane %v3467, 1
        %v4114 = vsel %vm2094, %v4112, %v4113
        %v4115 = vrot.slane %v3468, 1
        %v4116 = vsel %vm2094, %v4113, %v4115
        %v4117 = vrot.slane %v3470, 1
        %v4118 = vrot.slane %v3471, 1
        %v4119 = vsel %vm2094, %v4117, %v4118
        %v4120 = vrot.slane %v3472, 1
        %v4121 = vsel %vm2094, %v4118, %v4120
        %v4122 = vrot.slane %v3474, 1
        %v4123 = vrot.slane %v3475, 1
        %v4124 = vsel %vm2094, %v4122, %v4123
        %v4125 = vrot.slane %v3476, 1
        %v4126 = vsel %vm2094, %v4123, %v4125
        %v4127 = vrot.slane %v3478, 1
        %v4128 = vrot.slane %v3479, 1
        %v4129 = vsel %vm2094, %v4127, %v4128
        %v4130 = vrot.slane %v3480, 1
        %v4131 = vsel %vm2094, %v4128, %v4130
        %v4132 = vrot.slane %v3482, 1
        %v4133 = vrot.slane %v3483, 1
        %v4134 = vsel %vm2094, %v4132, %v4133
        %v4135 = vrot.slane %v3484, 1
        %v4136 = vsel %vm2094, %v4133, %v4135
        %v4137 = vrot.slane %v3486, 1
        %v4138 = vrot.slane %v3487, 1
        %v4139 = vsel %vm2094, %v4137, %v4138
        %v4140 = vrot.slane %v3488, 1
        %v4141 = vsel %vm2094, %v4138, %v4140
        %v4142 = vrot.slane %v3490, 1
        %v4143 = vrot.slane %v3491, 1
        %v4144 = vsel %vm2094, %v4142, %v4143
        %v4145 = vrot.slane %v3492, 1
        %v4146 = vsel %vm2094, %v4143, %v4145
        %v4147 = vrot.slane %v3494, 1
        %v4148 = vrot.slane %v3495, 1
        %v4149 = vsel %vm2094, %v4147, %v4148
        %v4150 = vrot.slane %v3496, 1
        %v4151 = vsel %vm2094, %v4148, %v4150
        %v4152 = vrot.slane %v3498, 1
        %v4153 = vrot.slane %v3499, 1
        %v4154 = vsel %vm2094, %v4152, %v4153
        %v4155 = vrot.slane %v3500, 1
        %v4156 = vsel %vm2094, %v4153, %v4155
        %v4157 = vrot.slane %v3502, 1
        %v4158 = vrot.slane %v3503, 1
        %v4159 = vsel %vm2094, %v4157, %v4158
        %v4160 = vrot.slane %v3504, 1
        %v4161 = vsel %vm2094, %v4158, %v4160
        %v4162 = vrot.slane %v3506, 1
        %v4163 = vrot.slane %v3507, 1
        %v4164 = vsel %vm2094, %v4162, %v4163
        %v4165 = vrot.slane %v3508, 1
        %v4166 = vsel %vm2094, %v4163, %v4165
        %v4167 = vrot.slane %v3510, 1
        %v4168 = vrot.slane %v3511, 1
        %v4169 = vsel %vm2094, %v4167, %v4168
        %v4170 = vrot.slane %v3512, 1
        %v4171 = vsel %vm2094, %v4168, %v4170
        %v4172 = vrot.slane %v3514, 1
        %v4173 = vrot.slane %v3515, 1
        %v4174 = vsel %vm2094, %v4172, %v4173
        %v4175 = vrot.slane %v3516, 1
        %v4176 = vsel %vm2094, %v4173, %v4175
        %v4177 = vrot.slane %v3518, 1
        %v4178 = vrot.slane %v3519, 1
        %v4179 = vsel %vm2094, %v4177, %v4178
        %v4180 = vrot.slane %v3520, 1
        %v4181 = vsel %vm2094, %v4178, %v4180
        %v4182 = vrot.slane %v3522, 1
        %v4183 = vrot.slane %v3523, 1
        %v4184 = vsel %vm2094, %v4182, %v4183
        %v4185 = vrot.slane %v3524, 1
        %v4186 = vsel %vm2094, %v4183, %v4185
        %v4187 = vrot.slane %v3526, 1
        %v4188 = vrot.slane %v3527, 1
        %v4189 = vsel %vm2094, %v4187, %v4188
        %v4190 = vrot.slane %v3528, 1
        %v4191 = vsel %vm2094, %v4188, %v4190
        %s4192 = scalar_lea.vmem %s5, 64
        %v4193 = vld [vmem:[%s4192] sm:$0xff]
        %v4194 = vld [vmem:[%s4192 + $0x8] sm:$0xff]
        %v4195 = vld [vmem:[%s4192 + $0x10] sm:$0xff]
        %v4196 = vld [vmem:[%s4192 + $0x18] sm:$0xff]
        %v4197 = vsel %vm3359, %v4114, 0
        %v4199 = vsel %vm3359, %v4116, 0
        %v4201 = vsel %vm3359, %v4119, 0
        %v4203 = vsel %vm3359, %v4121, 0
        %v4205 = vsel %vm3359, %v4124, 0
        %v4207 = vsel %vm3359, %v4126, 0
        %v4209 = vsel %vm3359, %v4129, 0
        %v4211 = vsel %vm3359, %v4131, 0
        %v4213 = vsel %vm3359, %v4134, 0
        %v4215 = vsel %vm3359, %v4136, 0
        %v4217 = vsel %vm3359, %v4139, 0
        %v4219 = vsel %vm3359, %v4141, 0
        %v4221 = vsel %vm3359, %v4144, 0
        %v4223 = vsel %vm3359, %v4146, 0
        %v4225 = vsel %vm3359, %v4149, 0
        %v4227 = vsel %vm3359, %v4151, 0
        %v4229 = vsel %vm3359, %v4154, 0
        %v4231 = vsel %vm3359, %v4156, 0
        %v4233 = vsel %vm3359, %v4159, 0
        %v4235 = vsel %vm3359, %v4161, 0
        %v4237 = vsel %vm3359, %v4164, 0
        %v4239 = vsel %vm3359, %v4166, 0
        %v4241 = vsel %vm3359, %v4169, 0
        %v4243 = vsel %vm3359, %v4171, 0
        %v4245 = vsel %vm3359, %v4174, 0
        %v4247 = vsel %vm3359, %v4176, 0
        %v4249 = vsel %vm3359, %v4179, 0
        %v4251 = vsel %vm3359, %v4181, 0
        %v4253 = vsel %vm3359, %v4184, 0
        %v4255 = vsel %vm3359, %v4186, 0
        %v4257 = vsel %vm3359, %v4189, 0
        %v4259 = vsel %vm3359, %v4191, 0
        %4261 = vmatpush.msra.mxu0 0.0
        %4262 = vmatpush.msra.mxu0 0.0
        %4263 = vmatpush.msra.mxu0 0.0
        %4264 = vmatpush.msra.mxu0 0.0
        %4265 = vmatpush.msra.mxu0 0.0
        %4266 = vmatpush.msra.mxu0 0.0
        %4267 = vmatpush.msra.mxu0 0.0
        %4268 = vmatpush.msra.mxu0 0.0
        %4269 = vmatpush.msra.mxu0 0.0
        %4270 = vmatpush.msra.mxu0 0.0
        %4271 = vmatpush.msra.mxu0 0.0
        %4272 = vmatpush.msra.mxu0 0.0
        %4273 = vmatpush.msra.mxu0 %v4196
        %4274 = vmatpush.msra.mxu0 %v4195
        %4275 = vmatpush.msra.mxu0 %v4194
        %4276 = vmatpush.msra.mxu0 %v4193
        %4277 = vmatmul.f32.gmra.mxu0 %v4197
        %v4278 = vpop.f32.mrf.mxu0
        %v4279 = vadd.f32 0.0, %v4278
        %4280 = vmatmul.f32.gmra.mxu0 %v4199
        %v4281 = vpop.f32.mrf.mxu0
        %v4282 = vadd.f32 0.0, %v4281
        %4283 = vmatmul.f32.gmra.mxu0 %v4201
        %v4284 = vpop.f32.mrf.mxu0
        %v4285 = vadd.f32 0.0, %v4284
        %4286 = vmatmul.f32.gmra.mxu0 %v4203
        %v4287 = vpop.f32.mrf.mxu0
        %v4288 = vadd.f32 0.0, %v4287
        %4289 = vmatmul.f32.gmra.mxu0 %v4205
        %v4290 = vpop.f32.mrf.mxu0
        %v4291 = vadd.f32 0.0, %v4290
        %4292 = vmatmul.f32.gmra.mxu0 %v4207
        %v4293 = vpop.f32.mrf.mxu0
        %v4294 = vadd.f32 0.0, %v4293
        %4295 = vmatmul.f32.gmra.mxu0 %v4209
        %v4296 = vpop.f32.mrf.mxu0
        %v4297 = vadd.f32 0.0, %v4296
        %4298 = vmatmul.f32.gmra.mxu0 %v4211
        %v4299 = vpop.f32.mrf.mxu0
        %v4300 = vadd.f32 0.0, %v4299
        %4301 = vmatmul.f32.gmra.mxu0 %v4213
        %v4302 = vpop.f32.mrf.mxu0
        %v4303 = vadd.f32 0.0, %v4302
        %4304 = vmatmul.f32.gmra.mxu0 %v4215
        %v4305 = vpop.f32.mrf.mxu0
        %v4306 = vadd.f32 0.0, %v4305
        %4307 = vmatmul.f32.gmra.mxu0 %v4217
        %v4308 = vpop.f32.mrf.mxu0
        %v4309 = vadd.f32 0.0, %v4308
        %4310 = vmatmul.f32.gmra.mxu0 %v4219
        %v4311 = vpop.f32.mrf.mxu0
        %v4312 = vadd.f32 0.0, %v4311
        %4313 = vmatmul.f32.gmra.mxu0 %v4221
        %v4314 = vpop.f32.mrf.mxu0
        %v4315 = vadd.f32 0.0, %v4314
        %4316 = vmatmul.f32.gmra.mxu0 %v4223
        %v4317 = vpop.f32.mrf.mxu0
        %v4318 = vadd.f32 0.0, %v4317
        %4319 = vmatmul.f32.gmra.mxu0 %v4225
        %v4320 = vpop.f32.mrf.mxu0
        %v4321 = vadd.f32 0.0, %v4320
        %4322 = vmatmul.f32.gmra.mxu0 %v4227
        %v4323 = vpop.f32.mrf.mxu0
        %v4324 = vadd.f32 0.0, %v4323
        %4325 = vmatmul.f32.gmra.mxu0 %v4229
        %v4326 = vpop.f32.mrf.mxu0
        %v4327 = vadd.f32 0.0, %v4326
        %4328 = vmatmul.f32.gmra.mxu0 %v4231
        %v4329 = vpop.f32.mrf.mxu0
        %v4330 = vadd.f32 0.0, %v4329
        %4331 = vmatmul.f32.gmra.mxu0 %v4233
        %v4332 = vpop.f32.mrf.mxu0
        %v4333 = vadd.f32 0.0, %v4332
        %4334 = vmatmul.f32.gmra.mxu0 %v4235
        %v4335 = vpop.f32.mrf.mxu0
        %v4336 = vadd.f32 0.0, %v4335
        %4337 = vmatmul.f32.gmra.mxu0 %v4237
        %v4338 = vpop.f32.mrf.mxu0
        %v4339 = vadd.f32 0.0, %v4338
        %4340 = vmatmul.f32.gmra.mxu0 %v4239
        %v4341 = vpop.f32.mrf.mxu0
        %v4342 = vadd.f32 0.0, %v4341
        %4343 = vmatmul.f32.gmra.mxu0 %v4241
        %v4344 = vpop.f32.mrf.mxu0
        %v4345 = vadd.f32 0.0, %v4344
        %4346 = vmatmul.f32.gmra.mxu0 %v4243
        %v4347 = vpop.f32.mrf.mxu0
        %v4348 = vadd.f32 0.0, %v4347
        %4349 = vmatmul.f32.gmra.mxu0 %v4245
        %v4350 = vpop.f32.mrf.mxu0
        %v4351 = vadd.f32 0.0, %v4350
        %4352 = vmatmul.f32.gmra.mxu0 %v4247
        %v4353 = vpop.f32.mrf.mxu0
        %v4354 = vadd.f32 0.0, %v4353
        %4355 = vmatmul.f32.gmra.mxu0 %v4249
        %v4356 = vpop.f32.mrf.mxu0
        %v4357 = vadd.f32 0.0, %v4356
        %4358 = vmatmul.f32.gmra.mxu0 %v4251
        %v4359 = vpop.f32.mrf.mxu0
        %v4360 = vadd.f32 0.0, %v4359
        %4361 = vmatmul.f32.gmra.mxu0 %v4253
        %v4362 = vpop.f32.mrf.mxu0
        %v4363 = vadd.f32 0.0, %v4362
        %4364 = vmatmul.f32.gmra.mxu0 %v4255
        %v4365 = vpop.f32.mrf.mxu0
        %v4366 = vadd.f32 0.0, %v4365
        %4367 = vmatmul.f32.gmra.mxu0 %v4257
        %v4368 = vpop.f32.mrf.mxu0
        %v4369 = vadd.f32 0.0, %v4368
        %4370 = vmatmul.f32.gmra.mxu0 %v4259
        %v4371 = vpop.f32.mrf.mxu0
        %v4372 = vadd.f32 0.0, %v4371
        %4373 = vdwg.mxu0
        %v4374 = vadd.f32 %v4064, %v4279
        %v4375 = vadd.f32 %v4065, %v4282
        %v4376 = vadd.f32 %v4066, %v4285
        %v4377 = vadd.f32 %v4067, %v4288
        %v4378 = vadd.f32 %v4068, %v4291
        %v4379 = vadd.f32 %v4069, %v4294
        %v4380 = vadd.f32 %v4070, %v4297
        %v4381 = vadd.f32 %v4071, %v4300
        %v4382 = vadd.f32 %v4072, %v4303
        %v4383 = vadd.f32 %v4073, %v4306
        %v4384 = vadd.f32 %v4074, %v4309
        %v4385 = vadd.f32 %v4075, %v4312
        %v4386 = vadd.f32 %v4076, %v4315
        %v4387 = vadd.f32 %v4077, %v4318
        %v4388 = vadd.f32 %v4078, %v4321
        %v4389 = vadd.f32 %v4079, %v4324
        %v4390 = vadd.f32 %v4080, %v4327
        %v4391 = vadd.f32 %v4081, %v4330
        %v4392 = vadd.f32 %v4082, %v4333
        %v4393 = vadd.f32 %v4083, %v4336
        %v4394 = vadd.f32 %v4084, %v4339
        %v4395 = vadd.f32 %v4085, %v4342
        %v4396 = vadd.f32 %v4086, %v4345
        %v4397 = vadd.f32 %v4087, %v4348
        %v4398 = vadd.f32 %v4088, %v4351
        %v4399 = vadd.f32 %v4089, %v4354
        %v4400 = vadd.f32 %v4090, %v4357
        %v4401 = vadd.f32 %v4091, %v4360
        %v4402 = vadd.f32 %v4092, %v4363
        %v4403 = vadd.f32 %v4093, %v4366
        %v4404 = vadd.f32 %v4094, %v4369
        %v4405 = vadd.f32 %v4095, %v4372
        %v4409 = vrot.slane %v3529, 7
        %v4410 = vrot.slane %v3530, 7
        %v4411 = vsel %vm1574, %v4409, %v4410
        %v4412 = vrot.slane %v3531, 7
        %v4413 = vsel %vm1574, %v4410, %v4412
        %s4414 = scalar_lea.vmem %s5, 96
        %v4415 = vld [vmem:[%s4414] sm:$0xff]
        %v4416 = vld [vmem:[%s4414 + $0x8] sm:$0xff]
        %v4417 = vld [vmem:[%s4414 + $0x10] sm:$0xff]
        %v4418 = vld [vmem:[%s4414 + $0x18] sm:$0xff]
        %v4419 = vsel %vm3359, %v4411, 0
        %v4421 = vsel %vm3359, %v4413, 0
        %4423 = vmatpush.msra.mxu0 0.0
        %4424 = vmatpush.msra.mxu0 0.0
        %4425 = vmatpush.msra.mxu0 0.0
        %4426 = vmatpush.msra.mxu0 0.0
        %4427 = vmatpush.msra.mxu0 0.0
        %4428 = vmatpush.msra.mxu0 0.0
        %4429 = vmatpush.msra.mxu0 0.0
        %4430 = vmatpush.msra.mxu0 0.0
        %4431 = vmatpush.msra.mxu0 0.0
        %4432 = vmatpush.msra.mxu0 0.0
        %4433 = vmatpush.msra.mxu0 0.0
        %4434 = vmatpush.msra.mxu0 0.0
        %4435 = vmatpush.msra.mxu0 %v4418
        %4436 = vmatpush.msra.mxu0 %v4417
        %4437 = vmatpush.msra.mxu0 %v4416
        %4438 = vmatpush.msra.mxu0 %v4415
        %4439 = vmatmul.f32.gmra.mxu0 %v3677
        %v4440 = vpop.f32.mrf.mxu0
        %v4441 = vadd.f32 0.0, %v4440
        %4442 = vmatmul.f32.gmra.mxu0 %v3679
        %v4443 = vpop.f32.mrf.mxu0
        %v4444 = vadd.f32 0.0, %v4443
        %4445 = vmatmul.f32.gmra.mxu0 %v3681
        %v4446 = vpop.f32.mrf.mxu0
        %v4447 = vadd.f32 0.0, %v4446
        %4448 = vmatmul.f32.gmra.mxu0 %v3683
        %v4449 = vpop.f32.mrf.mxu0
        %v4450 = vadd.f32 0.0, %v4449
        %4451 = vmatmul.f32.gmra.mxu0 %v3685
        %v4452 = vpop.f32.mrf.mxu0
        %v4453 = vadd.f32 0.0, %v4452
        %4454 = vmatmul.f32.gmra.mxu0 %v3687
        %v4455 = vpop.f32.mrf.mxu0
        %v4456 = vadd.f32 0.0, %v4455
        %4457 = vmatmul.f32.gmra.mxu0 %v3689
        %v4458 = vpop.f32.mrf.mxu0
        %v4459 = vadd.f32 0.0, %v4458
        %4460 = vmatmul.f32.gmra.mxu0 %v3691
        %v4461 = vpop.f32.mrf.mxu0
        %v4462 = vadd.f32 0.0, %v4461
        %4463 = vmatmul.f32.gmra.mxu0 %v3693
        %v4464 = vpop.f32.mrf.mxu0
        %v4465 = vadd.f32 0.0, %v4464
        %4466 = vmatmul.f32.gmra.mxu0 %v3695
        %v4467 = vpop.f32.mrf.mxu0
        %v4468 = vadd.f32 0.0, %v4467
        %4469 = vmatmul.f32.gmra.mxu0 %v3697
        %v4470 = vpop.f32.mrf.mxu0
        %v4471 = vadd.f32 0.0, %v4470
        %4472 = vmatmul.f32.gmra.mxu0 %v3699
        %v4473 = vpop.f32.mrf.mxu0
        %v4474 = vadd.f32 0.0, %v4473
        %4475 = vmatmul.f32.gmra.mxu0 %v3701
        %v4476 = vpop.f32.mrf.mxu0
        %v4477 = vadd.f32 0.0, %v4476
        %4478 = vmatmul.f32.gmra.mxu0 %v3703
        %v4479 = vpop.f32.mrf.mxu0
        %v4480 = vadd.f32 0.0, %v4479
        %4481 = vmatmul.f32.gmra.mxu0 %v3705
        %v4482 = vpop.f32.mrf.mxu0
        %v4483 = vadd.f32 0.0, %v4482
        %4484 = vmatmul.f32.gmra.mxu0 %v3707
        %v4485 = vpop.f32.mrf.mxu0
        %v4486 = vadd.f32 0.0, %v4485
        %4487 = vmatmul.f32.gmra.mxu0 %v3709
        %v4488 = vpop.f32.mrf.mxu0
        %v4489 = vadd.f32 0.0, %v4488
        %4490 = vmatmul.f32.gmra.mxu0 %v3711
        %v4491 = vpop.f32.mrf.mxu0
        %v4492 = vadd.f32 0.0, %v4491
        %4493 = vmatmul.f32.gmra.mxu0 %v3713
        %v4494 = vpop.f32.mrf.mxu0
        %v4495 = vadd.f32 0.0, %v4494
        %4496 = vmatmul.f32.gmra.mxu0 %v3715
        %v4497 = vpop.f32.mrf.mxu0
        %v4498 = vadd.f32 0.0, %v4497
        %4499 = vmatmul.f32.gmra.mxu0 %v3717
        %v4500 = vpop.f32.mrf.mxu0
        %v4501 = vadd.f32 0.0, %v4500
        %4502 = vmatmul.f32.gmra.mxu0 %v3719
        %v4503 = vpop.f32.mrf.mxu0
        %v4504 = vadd.f32 0.0, %v4503
        %4505 = vmatmul.f32.gmra.mxu0 %v3721
        %v4506 = vpop.f32.mrf.mxu0
        %v4507 = vadd.f32 0.0, %v4506
        %4508 = vmatmul.f32.gmra.mxu0 %v3723
        %v4509 = vpop.f32.mrf.mxu0
        %v4510 = vadd.f32 0.0, %v4509
        %4511 = vmatmul.f32.gmra.mxu0 %v3725
        %v4512 = vpop.f32.mrf.mxu0
        %v4513 = vadd.f32 0.0, %v4512
        %4514 = vmatmul.f32.gmra.mxu0 %v3727
        %v4515 = vpop.f32.mrf.mxu0
        %v4516 = vadd.f32 0.0, %v4515
        %4517 = vmatmul.f32.gmra.mxu0 %v3729
        %v4518 = vpop.f32.mrf.mxu0
        %v4519 = vadd.f32 0.0, %v4518
        %4520 = vmatmul.f32.gmra.mxu0 %v3731
        %v4521 = vpop.f32.mrf.mxu0
        %v4522 = vadd.f32 0.0, %v4521
        %4523 = vmatmul.f32.gmra.mxu0 %v3733
        %v4524 = vpop.f32.mrf.mxu0
        %v4525 = vadd.f32 0.0, %v4524
        %4526 = vmatmul.f32.gmra.mxu0 %v3735
        %v4527 = vpop.f32.mrf.mxu0
        %v4528 = vadd.f32 0.0, %v4527
        %4529 = vmatmul.f32.gmra.mxu0 %v4419
        %v4530 = vpop.f32.mrf.mxu0
        %v4531 = vadd.f32 0.0, %v4530
        %4532 = vmatmul.f32.gmra.mxu0 %v4421
        %v4533 = vpop.f32.mrf.mxu0
        %v4534 = vadd.f32 0.0, %v4533
        %4535 = vdwg.mxu0
        %v4536 = vadd.f32 %v4374, %v4441
        %v4537 = vadd.f32 %v4375, %v4444
        %v4538 = vadd.f32 %v4376, %v4447
        %v4539 = vadd.f32 %v4377, %v4450
        %v4540 = vadd.f32 %v4378, %v4453
        %v4541 = vadd.f32 %v4379, %v4456
        %v4542 = vadd.f32 %v4380, %v4459
        %v4543 = vadd.f32 %v4381, %v4462
        %v4544 = vadd.f32 %v4382, %v4465
        %v4545 = vadd.f32 %v4383, %v4468
        %v4546 = vadd.f32 %v4384, %v4471
        %v4547 = vadd.f32 %v4385, %v4474
        %v4548 = vadd.f32 %v4386, %v4477
        %v4549 = vadd.f32 %v4387, %v4480
        %v4550 = vadd.f32 %v4388, %v4483
        %v4551 = vadd.f32 %v4389, %v4486
        %v4552 = vadd.f32 %v4390, %v4489
        %v4553 = vadd.f32 %v4391, %v4492
        %v4554 = vadd.f32 %v4392, %v4495
        %v4555 = vadd.f32 %v4393, %v4498
        %v4556 = vadd.f32 %v4394, %v4501
        %v4557 = vadd.f32 %v4395, %v4504
        %v4558 = vadd.f32 %v4396, %v4507
        %v4559 = vadd.f32 %v4397, %v4510
        %v4560 = vadd.f32 %v4398, %v4513
        %v4561 = vadd.f32 %v4399, %v4516
        %v4562 = vadd.f32 %v4400, %v4519
        %v4563 = vadd.f32 %v4401, %v4522
        %v4564 = vadd.f32 %v4402, %v4525
        %v4565 = vadd.f32 %v4403, %v4528
        %v4566 = vadd.f32 %v4404, %v4531
        %v4567 = vadd.f32 %v4405, %v4534
        %s4568 = scalar_lea.vmem %s5, 128
        %v4569 = vld [vmem:[%s4568] sm:$0xff]
        %v4570 = vld [vmem:[%s4568 + $0x8] sm:$0xff]
        %v4571 = vld [vmem:[%s4568 + $0x10] sm:$0xff]
        %v4572 = vld [vmem:[%s4568 + $0x18] sm:$0xff]
        %v4573 = vsel %vm3359, %v3530, 0
        %v4575 = vsel %vm3359, %v3531, 0
        %4577 = vmatpush.msra.mxu0 0.0
        %4578 = vmatpush.msra.mxu0 0.0
        %4579 = vmatpush.msra.mxu0 0.0
        %4580 = vmatpush.msra.mxu0 0.0
        %4581 = vmatpush.msra.mxu0 0.0
        %4582 = vmatpush.msra.mxu0 0.0
        %4583 = vmatpush.msra.mxu0 0.0
        %4584 = vmatpush.msra.mxu0 0.0
        %4585 = vmatpush.msra.mxu0 0.0
        %4586 = vmatpush.msra.mxu0 0.0
        %4587 = vmatpush.msra.mxu0 0.0
        %4588 = vmatpush.msra.mxu0 0.0
        %4589 = vmatpush.msra.mxu0 %v4572
        %4590 = vmatpush.msra.mxu0 %v4571
        %4591 = vmatpush.msra.mxu0 %v4570
        %4592 = vmatpush.msra.mxu0 %v4569
        %4593 = vmatmul.f32.gmra.mxu0 %v3891
        %v4594 = vpop.f32.mrf.mxu0
        %v4595 = vadd.f32 0.0, %v4594
        %4596 = vmatmul.f32.gmra.mxu0 %v3893
        %v4597 = vpop.f32.mrf.mxu0
        %v4598 = vadd.f32 0.0, %v4597
        %4599 = vmatmul.f32.gmra.mxu0 %v3895
        %v4600 = vpop.f32.mrf.mxu0
        %v4601 = vadd.f32 0.0, %v4600
        %4602 = vmatmul.f32.gmra.mxu0 %v3897
        %v4603 = vpop.f32.mrf.mxu0
        %v4604 = vadd.f32 0.0, %v4603
        %4605 = vmatmul.f32.gmra.mxu0 %v3899
        %v4606 = vpop.f32.mrf.mxu0
        %v4607 = vadd.f32 0.0, %v4606
        %4608 = vmatmul.f32.gmra.mxu0 %v3901
        %v4609 = vpop.f32.mrf.mxu0
        %v4610 = vadd.f32 0.0, %v4609
        %4611 = vmatmul.f32.gmra.mxu0 %v3903
        %v4612 = vpop.f32.mrf.mxu0
        %v4613 = vadd.f32 0.0, %v4612
        %4614 = vmatmul.f32.gmra.mxu0 %v3905
        %v4615 = vpop.f32.mrf.mxu0
        %v4616 = vadd.f32 0.0, %v4615
        %4617 = vmatmul.f32.gmra.mxu0 %v3907
        %v4618 = vpop.f32.mrf.mxu0
        %v4619 = vadd.f32 0.0, %v4618
        %4620 = vmatmul.f32.gmra.mxu0 %v3909
        %v4621 = vpop.f32.mrf.mxu0
        %v4622 = vadd.f32 0.0, %v4621
        %4623 = vmatmul.f32.gmra.mxu0 %v3911
        %v4624 = vpop.f32.mrf.mxu0
        %v4625 = vadd.f32 0.0, %v4624
        %4626 = vmatmul.f32.gmra.mxu0 %v3913
        %v4627 = vpop.f32.mrf.mxu0
        %v4628 = vadd.f32 0.0, %v4627
        %4629 = vmatmul.f32.gmra.mxu0 %v3915
        %v4630 = vpop.f32.mrf.mxu0
        %v4631 = vadd.f32 0.0, %v4630
        %4632 = vmatmul.f32.gmra.mxu0 %v3917
        %v4633 = vpop.f32.mrf.mxu0
        %v4634 = vadd.f32 0.0, %v4633
        %4635 = vmatmul.f32.gmra.mxu0 %v3919
        %v4636 = vpop.f32.mrf.mxu0
        %v4637 = vadd.f32 0.0, %v4636
        %4638 = vmatmul.f32.gmra.mxu0 %v3921
        %v4639 = vpop.f32.mrf.mxu0
        %v4640 = vadd.f32 0.0, %v4639
        %4641 = vmatmul.f32.gmra.mxu0 %v3923
        %v4642 = vpop.f32.mrf.mxu0
        %v4643 = vadd.f32 0.0, %v4642
        %4644 = vmatmul.f32.gmra.mxu0 %v3925
        %v4645 = vpop.f32.mrf.mxu0
        %v4646 = vadd.f32 0.0, %v4645
        %4647 = vmatmul.f32.gmra.mxu0 %v3927
        %v4648 = vpop.f32.mrf.mxu0
        %v4649 = vadd.f32 0.0, %v4648
        %4650 = vmatmul.f32.gmra.mxu0 %v3929
        %v4651 = vpop.f32.mrf.mxu0
        %v4652 = vadd.f32 0.0, %v4651
        %4653 = vmatmul.f32.gmra.mxu0 %v3931
        %v4654 = vpop.f32.mrf.mxu0
        %v4655 = vadd.f32 0.0, %v4654
        %4656 = vmatmul.f32.gmra.mxu0 %v3933
        %v4657 = vpop.f32.mrf.mxu0
        %v4658 = vadd.f32 0.0, %v4657
        %4659 = vmatmul.f32.gmra.mxu0 %v3935
        %v4660 = vpop.f32.mrf.mxu0
        %v4661 = vadd.f32 0.0, %v4660
        %4662 = vmatmul.f32.gmra.mxu0 %v3937
        %v4663 = vpop.f32.mrf.mxu0
        %v4664 = vadd.f32 0.0, %v4663
        %4665 = vmatmul.f32.gmra.mxu0 %v3939
        %v4666 = vpop.f32.mrf.mxu0
        %v4667 = vadd.f32 0.0, %v4666
        %4668 = vmatmul.f32.gmra.mxu0 %v3941
        %v4669 = vpop.f32.mrf.mxu0
        %v4670 = vadd.f32 0.0, %v4669
        %4671 = vmatmul.f32.gmra.mxu0 %v3943
        %v4672 = vpop.f32.mrf.mxu0
        %v4673 = vadd.f32 0.0, %v4672
        %4674 = vmatmul.f32.gmra.mxu0 %v3945
        %v4675 = vpop.f32.mrf.mxu0
        %v4676 = vadd.f32 0.0, %v4675
        %4677 = vmatmul.f32.gmra.mxu0 %v3947
        %v4678 = vpop.f32.mrf.mxu0
        %v4679 = vadd.f32 0.0, %v4678
        %4680 = vmatmul.f32.gmra.mxu0 %v3949
        %v4681 = vpop.f32.mrf.mxu0
        %v4682 = vadd.f32 0.0, %v4681
        %4683 = vmatmul.f32.gmra.mxu0 %v4573
        %v4684 = vpop.f32.mrf.mxu0
        %v4685 = vadd.f32 0.0, %v4684
        %4686 = vmatmul.f32.gmra.mxu0 %v4575
        %v4687 = vpop.f32.mrf.mxu0
        %v4688 = vadd.f32 0.0, %v4687
        %4689 = vdwg.mxu0
        %v4690 = vadd.f32 %v4536, %v4595
        %v4691 = vadd.f32 %v4537, %v4598
        %v4692 = vadd.f32 %v4538, %v4601
        %v4693 = vadd.f32 %v4539, %v4604
        %v4694 = vadd.f32 %v4540, %v4607
        %v4695 = vadd.f32 %v4541, %v4610
        %v4696 = vadd.f32 %v4542, %v4613
        %v4697 = vadd.f32 %v4543, %v4616
        %v4698 = vadd.f32 %v4544, %v4619
        %v4699 = vadd.f32 %v4545, %v4622
        %v4700 = vadd.f32 %v4546, %v4625
        %v4701 = vadd.f32 %v4547, %v4628
        %v4702 = vadd.f32 %v4548, %v4631
        %v4703 = vadd.f32 %v4549, %v4634
        %v4704 = vadd.f32 %v4550, %v4637
        %v4705 = vadd.f32 %v4551, %v4640
        %v4706 = vadd.f32 %v4552, %v4643
        %v4707 = vadd.f32 %v4553, %v4646
        %v4708 = vadd.f32 %v4554, %v4649
        %v4709 = vadd.f32 %v4555, %v4652
        %v4710 = vadd.f32 %v4556, %v4655
        %v4711 = vadd.f32 %v4557, %v4658
        %v4712 = vadd.f32 %v4558, %v4661
        %v4713 = vadd.f32 %v4559, %v4664
        %v4714 = vadd.f32 %v4560, %v4667
        %v4715 = vadd.f32 %v4561, %v4670
        %v4716 = vadd.f32 %v4562, %v4673
        %v4717 = vadd.f32 %v4563, %v4676
        %v4718 = vadd.f32 %v4564, %v4679
        %v4719 = vadd.f32 %v4565, %v4682
        %v4720 = vadd.f32 %v4566, %v4685
        %v4721 = vadd.f32 %v4567, %v4688
        %v4723 = vrot.slane %v3530, 1
        %v4724 = vrot.slane %v3531, 1
        %v4725 = vsel %vm2094, %v4723, %v4724
        %v4726 = vrot.slane %v3532, 1
        %v4727 = vsel %vm2094, %v4724, %v4726
        %s4728 = scalar_lea.vmem %s5, 160
        %v4729 = vld [vmem:[%s4728] sm:$0xff]
        %v4730 = vld [vmem:[%s4728 + $0x8] sm:$0xff]
        %v4731 = vld [vmem:[%s4728 + $0x10] sm:$0xff]
        %v4732 = vld [vmem:[%s4728 + $0x18] sm:$0xff]
        %v4733 = vsel %vm3359, %v4725, 0
        %v4735 = vsel %vm3359, %v4727, 0
        %4737 = vmatpush.msra.mxu0 0.0
        %4738 = vmatpush.msra.mxu0 0.0
        %4739 = vmatpush.msra.mxu0 0.0
        %4740 = vmatpush.msra.mxu0 0.0
        %4741 = vmatpush.msra.mxu0 0.0
        %4742 = vmatpush.msra.mxu0 0.0
        %4743 = vmatpush.msra.mxu0 0.0
        %4744 = vmatpush.msra.mxu0 0.0
        %4745 = vmatpush.msra.mxu0 0.0
        %4746 = vmatpush.msra.mxu0 0.0
        %4747 = vmatpush.msra.mxu0 0.0
        %4748 = vmatpush.msra.mxu0 0.0
        %4749 = vmatpush.msra.mxu0 %v4732
        %4750 = vmatpush.msra.mxu0 %v4731
        %4751 = vmatpush.msra.mxu0 %v4730
        %4752 = vmatpush.msra.mxu0 %v4729
        %4753 = vmatmul.f32.gmra.mxu0 %v4201
        %v4754 = vpop.f32.mrf.mxu0
        %v4755 = vadd.f32 0.0, %v4754
        %4756 = vmatmul.f32.gmra.mxu0 %v4203
        %v4757 = vpop.f32.mrf.mxu0
        %v4758 = vadd.f32 0.0, %v4757
        %4759 = vmatmul.f32.gmra.mxu0 %v4205
        %v4760 = vpop.f32.mrf.mxu0
        %v4761 = vadd.f32 0.0, %v4760
        %4762 = vmatmul.f32.gmra.mxu0 %v4207
        %v4763 = vpop.f32.mrf.mxu0
        %v4764 = vadd.f32 0.0, %v4763
        %4765 = vmatmul.f32.gmra.mxu0 %v4209
        %v4766 = vpop.f32.mrf.mxu0
        %v4767 = vadd.f32 0.0, %v4766
        %4768 = vmatmul.f32.gmra.mxu0 %v4211
        %v4769 = vpop.f32.mrf.mxu0
        %v4770 = vadd.f32 0.0, %v4769
        %4771 = vmatmul.f32.gmra.mxu0 %v4213
        %v4772 = vpop.f32.mrf.mxu0
        %v4773 = vadd.f32 0.0, %v4772
        %4774 = vmatmul.f32.gmra.mxu0 %v4215
        %v4775 = vpop.f32.mrf.mxu0
        %v4776 = vadd.f32 0.0, %v4775
        %4777 = vmatmul.f32.gmra.mxu0 %v4217
        %v4778 = vpop.f32.mrf.mxu0
        %v4779 = vadd.f32 0.0, %v4778
        %4780 = vmatmul.f32.gmra.mxu0 %v4219
        %v4781 = vpop.f32.mrf.mxu0
        %v4782 = vadd.f32 0.0, %v4781
        %4783 = vmatmul.f32.gmra.mxu0 %v4221
        %v4784 = vpop.f32.mrf.mxu0
        %v4785 = vadd.f32 0.0, %v4784
        %4786 = vmatmul.f32.gmra.mxu0 %v4223
        %v4787 = vpop.f32.mrf.mxu0
        %v4788 = vadd.f32 0.0, %v4787
        %4789 = vmatmul.f32.gmra.mxu0 %v4225
        %v4790 = vpop.f32.mrf.mxu0
        %v4791 = vadd.f32 0.0, %v4790
        %4792 = vmatmul.f32.gmra.mxu0 %v4227
        %v4793 = vpop.f32.mrf.mxu0
        %v4794 = vadd.f32 0.0, %v4793
        %4795 = vmatmul.f32.gmra.mxu0 %v4229
        %v4796 = vpop.f32.mrf.mxu0
        %v4797 = vadd.f32 0.0, %v4796
        %4798 = vmatmul.f32.gmra.mxu0 %v4231
        %v4799 = vpop.f32.mrf.mxu0
        %v4800 = vadd.f32 0.0, %v4799
        %4801 = vmatmul.f32.gmra.mxu0 %v4233
        %v4802 = vpop.f32.mrf.mxu0
        %v4803 = vadd.f32 0.0, %v4802
        %4804 = vmatmul.f32.gmra.mxu0 %v4235
        %v4805 = vpop.f32.mrf.mxu0
        %v4806 = vadd.f32 0.0, %v4805
        %4807 = vmatmul.f32.gmra.mxu0 %v4237
        %v4808 = vpop.f32.mrf.mxu0
        %v4809 = vadd.f32 0.0, %v4808
        %4810 = vmatmul.f32.gmra.mxu0 %v4239
        %v4811 = vpop.f32.mrf.mxu0
        %v4812 = vadd.f32 0.0, %v4811
        %4813 = vmatmul.f32.gmra.mxu0 %v4241
        %v4814 = vpop.f32.mrf.mxu0
        %v4815 = vadd.f32 0.0, %v4814
        %4816 = vmatmul.f32.gmra.mxu0 %v4243
        %v4817 = vpop.f32.mrf.mxu0
        %v4818 = vadd.f32 0.0, %v4817
        %4819 = vmatmul.f32.gmra.mxu0 %v4245
        %v4820 = vpop.f32.mrf.mxu0
        %v4821 = vadd.f32 0.0, %v4820
        %4822 = vmatmul.f32.gmra.mxu0 %v4247
        %v4823 = vpop.f32.mrf.mxu0
        %v4824 = vadd.f32 0.0, %v4823
        %4825 = vmatmul.f32.gmra.mxu0 %v4249
        %v4826 = vpop.f32.mrf.mxu0
        %v4827 = vadd.f32 0.0, %v4826
        %4828 = vmatmul.f32.gmra.mxu0 %v4251
        %v4829 = vpop.f32.mrf.mxu0
        %v4830 = vadd.f32 0.0, %v4829
        %4831 = vmatmul.f32.gmra.mxu0 %v4253
        %v4832 = vpop.f32.mrf.mxu0
        %v4833 = vadd.f32 0.0, %v4832
        %4834 = vmatmul.f32.gmra.mxu0 %v4255
        %v4835 = vpop.f32.mrf.mxu0
        %v4836 = vadd.f32 0.0, %v4835
        %4837 = vmatmul.f32.gmra.mxu0 %v4257
        %v4838 = vpop.f32.mrf.mxu0
        %v4839 = vadd.f32 0.0, %v4838
        %4840 = vmatmul.f32.gmra.mxu0 %v4259
        %v4841 = vpop.f32.mrf.mxu0
        %v4842 = vadd.f32 0.0, %v4841
        %4843 = vmatmul.f32.gmra.mxu0 %v4733
        %v4844 = vpop.f32.mrf.mxu0
        %v4845 = vadd.f32 0.0, %v4844
        %4846 = vmatmul.f32.gmra.mxu0 %v4735
        %v4847 = vpop.f32.mrf.mxu0
        %v4848 = vadd.f32 0.0, %v4847
        %4849 = vdwg.mxu0
        %v4850 = vadd.f32 %v4690, %v4755
        %v4851 = vadd.f32 %v4691, %v4758
        %v4852 = vadd.f32 %v4692, %v4761
        %v4853 = vadd.f32 %v4693, %v4764
        %v4854 = vadd.f32 %v4694, %v4767
        %v4855 = vadd.f32 %v4695, %v4770
        %v4856 = vadd.f32 %v4696, %v4773
        %v4857 = vadd.f32 %v4697, %v4776
        %v4858 = vadd.f32 %v4698, %v4779
        %v4859 = vadd.f32 %v4699, %v4782
        %v4860 = vadd.f32 %v4700, %v4785
        %v4861 = vadd.f32 %v4701, %v4788
        %v4862 = vadd.f32 %v4702, %v4791
        %v4863 = vadd.f32 %v4703, %v4794
        %v4864 = vadd.f32 %v4704, %v4797
        %v4865 = vadd.f32 %v4705, %v4800
        %v4866 = vadd.f32 %v4706, %v4803
        %v4867 = vadd.f32 %v4707, %v4806
        %v4868 = vadd.f32 %v4708, %v4809
        %v4869 = vadd.f32 %v4709, %v4812
        %v4870 = vadd.f32 %v4710, %v4815
        %v4871 = vadd.f32 %v4711, %v4818
        %v4872 = vadd.f32 %v4712, %v4821
        %v4873 = vadd.f32 %v4713, %v4824
        %v4874 = vadd.f32 %v4714, %v4827
        %v4875 = vadd.f32 %v4715, %v4830
        %v4876 = vadd.f32 %v4716, %v4833
        %v4877 = vadd.f32 %v4717, %v4836
        %v4878 = vadd.f32 %v4718, %v4839
        %v4879 = vadd.f32 %v4719, %v4842
        %v4880 = vadd.f32 %v4720, %v4845
        %v4881 = vadd.f32 %v4721, %v4848
        %v4885 = vrot.slane %v3533, 7
        %v4886 = vrot.slane %v3534, 7
        %v4887 = vsel %vm1574, %v4885, %v4886
        %v4888 = vrot.slane %v3535, 7
        %v4889 = vsel %vm1574, %v4886, %v4888
        %s4890 = scalar_lea.vmem %s5, 192
        %v4891 = vld [vmem:[%s4890] sm:$0xff]
        %v4892 = vld [vmem:[%s4890 + $0x8] sm:$0xff]
        %v4893 = vld [vmem:[%s4890 + $0x10] sm:$0xff]
        %v4894 = vld [vmem:[%s4890 + $0x18] sm:$0xff]
        %v4895 = vsel %vm3359, %v4887, 0
        %v4897 = vsel %vm3359, %v4889, 0
        %4899 = vmatpush.msra.mxu0 0.0
        %4900 = vmatpush.msra.mxu0 0.0
        %4901 = vmatpush.msra.mxu0 0.0
        %4902 = vmatpush.msra.mxu0 0.0
        %4903 = vmatpush.msra.mxu0 0.0
        %4904 = vmatpush.msra.mxu0 0.0
        %4905 = vmatpush.msra.mxu0 0.0
        %4906 = vmatpush.msra.mxu0 0.0
        %4907 = vmatpush.msra.mxu0 0.0
        %4908 = vmatpush.msra.mxu0 0.0
        %4909 = vmatpush.msra.mxu0 0.0
        %4910 = vmatpush.msra.mxu0 0.0
        %4911 = vmatpush.msra.mxu0 %v4894
        %4912 = vmatpush.msra.mxu0 %v4893
        %4913 = vmatpush.msra.mxu0 %v4892
        %4914 = vmatpush.msra.mxu0 %v4891
        %4915 = vmatmul.f32.gmra.mxu0 %v3681
        %v4916 = vpop.f32.mrf.mxu0
        %v4917 = vadd.f32 0.0, %v4916
        %4918 = vmatmul.f32.gmra.mxu0 %v3683
        %v4919 = vpop.f32.mrf.mxu0
        %v4920 = vadd.f32 0.0, %v4919
        %4921 = vmatmul.f32.gmra.mxu0 %v3685
        %v4922 = vpop.f32.mrf.mxu0
        %v4923 = vadd.f32 0.0, %v4922
        %4924 = vmatmul.f32.gmra.mxu0 %v3687
        %v4925 = vpop.f32.mrf.mxu0
        %v4926 = vadd.f32 0.0, %v4925
        %4927 = vmatmul.f32.gmra.mxu0 %v3689
        %v4928 = vpop.f32.mrf.mxu0
        %v4929 = vadd.f32 0.0, %v4928
        %4930 = vmatmul.f32.gmra.mxu0 %v3691
        %v4931 = vpop.f32.mrf.mxu0
        %v4932 = vadd.f32 0.0, %v4931
        %4933 = vmatmul.f32.gmra.mxu0 %v3693
        %v4934 = vpop.f32.mrf.mxu0
        %v4935 = vadd.f32 0.0, %v4934
        %4936 = vmatmul.f32.gmra.mxu0 %v3695
        %v4937 = vpop.f32.mrf.mxu0
        %v4938 = vadd.f32 0.0, %v4937
        %4939 = vmatmul.f32.gmra.mxu0 %v3697
        %v4940 = vpop.f32.mrf.mxu0
        %v4941 = vadd.f32 0.0, %v4940
        %4942 = vmatmul.f32.gmra.mxu0 %v3699
        %v4943 = vpop.f32.mrf.mxu0
        %v4944 = vadd.f32 0.0, %v4943
        %4945 = vmatmul.f32.gmra.mxu0 %v3701
        %v4946 = vpop.f32.mrf.mxu0
        %v4947 = vadd.f32 0.0, %v4946
        %4948 = vmatmul.f32.gmra.mxu0 %v3703
        %v4949 = vpop.f32.mrf.mxu0
        %v4950 = vadd.f32 0.0, %v4949
        %4951 = vmatmul.f32.gmra.mxu0 %v3705
        %v4952 = vpop.f32.mrf.mxu0
        %v4953 = vadd.f32 0.0, %v4952
        %4954 = vmatmul.f32.gmra.mxu0 %v3707
        %v4955 = vpop.f32.mrf.mxu0
        %v4956 = vadd.f32 0.0, %v4955
        %4957 = vmatmul.f32.gmra.mxu0 %v3709
        %v4958 = vpop.f32.mrf.mxu0
        %v4959 = vadd.f32 0.0, %v4958
        %4960 = vmatmul.f32.gmra.mxu0 %v3711
        %v4961 = vpop.f32.mrf.mxu0
        %v4962 = vadd.f32 0.0, %v4961
        %4963 = vmatmul.f32.gmra.mxu0 %v3713
        %v4964 = vpop.f32.mrf.mxu0
        %v4965 = vadd.f32 0.0, %v4964
        %4966 = vmatmul.f32.gmra.mxu0 %v3715
        %v4967 = vpop.f32.mrf.mxu0
        %v4968 = vadd.f32 0.0, %v4967
        %4969 = vmatmul.f32.gmra.mxu0 %v3717
        %v4970 = vpop.f32.mrf.mxu0
        %v4971 = vadd.f32 0.0, %v4970
        %4972 = vmatmul.f32.gmra.mxu0 %v3719
        %v4973 = vpop.f32.mrf.mxu0
        %v4974 = vadd.f32 0.0, %v4973
        %4975 = vmatmul.f32.gmra.mxu0 %v3721
        %v4976 = vpop.f32.mrf.mxu0
        %v4977 = vadd.f32 0.0, %v4976
        %4978 = vmatmul.f32.gmra.mxu0 %v3723
        %v4979 = vpop.f32.mrf.mxu0
        %v4980 = vadd.f32 0.0, %v4979
        %4981 = vmatmul.f32.gmra.mxu0 %v3725
        %v4982 = vpop.f32.mrf.mxu0
        %v4983 = vadd.f32 0.0, %v4982
        %4984 = vmatmul.f32.gmra.mxu0 %v3727
        %v4985 = vpop.f32.mrf.mxu0
        %v4986 = vadd.f32 0.0, %v4985
        %4987 = vmatmul.f32.gmra.mxu0 %v3729
        %v4988 = vpop.f32.mrf.mxu0
        %v4989 = vadd.f32 0.0, %v4988
        %4990 = vmatmul.f32.gmra.mxu0 %v3731
        %v4991 = vpop.f32.mrf.mxu0
        %v4992 = vadd.f32 0.0, %v4991
        %4993 = vmatmul.f32.gmra.mxu0 %v3733
        %v4994 = vpop.f32.mrf.mxu0
        %v4995 = vadd.f32 0.0, %v4994
        %4996 = vmatmul.f32.gmra.mxu0 %v3735
        %v4997 = vpop.f32.mrf.mxu0
        %v4998 = vadd.f32 0.0, %v4997
        %4999 = vmatmul.f32.gmra.mxu0 %v4419
        %v5000 = vpop.f32.mrf.mxu0
        %v5001 = vadd.f32 0.0, %v5000
        %5002 = vmatmul.f32.gmra.mxu0 %v4421
        %v5003 = vpop.f32.mrf.mxu0
        %v5004 = vadd.f32 0.0, %v5003
        %5005 = vmatmul.f32.gmra.mxu0 %v4895
        %v5006 = vpop.f32.mrf.mxu0
        %v5007 = vadd.f32 0.0, %v5006
        %5008 = vmatmul.f32.gmra.mxu0 %v4897
        %v5009 = vpop.f32.mrf.mxu0
        %v5010 = vadd.f32 0.0, %v5009
        %5011 = vdwg.mxu0
        %v5012 = vadd.f32 %v4850, %v4917
        %v5013 = vadd.f32 %v4851, %v4920
        %v5014 = vadd.f32 %v4852, %v4923
        %v5015 = vadd.f32 %v4853, %v4926
        %v5016 = vadd.f32 %v4854, %v4929
        %v5017 = vadd.f32 %v4855, %v4932
        %v5018 = vadd.f32 %v4856, %v4935
        %v5019 = vadd.f32 %v4857, %v4938
        %v5020 = vadd.f32 %v4858, %v4941
        %v5021 = vadd.f32 %v4859, %v4944
        %v5022 = vadd.f32 %v4860, %v4947
        %v5023 = vadd.f32 %v4861, %v4950
        %v5024 = vadd.f32 %v4862, %v4953
        %v5025 = vadd.f32 %v4863, %v4956
        %v5026 = vadd.f32 %v4864, %v4959
        %v5027 = vadd.f32 %v4865, %v4962
        %v5028 = vadd.f32 %v4866, %v4965
        %v5029 = vadd.f32 %v4867, %v4968
        %v5030 = vadd.f32 %v4868, %v4971
        %v5031 = vadd.f32 %v4869, %v4974
        %v5032 = vadd.f32 %v4870, %v4977
        %v5033 = vadd.f32 %v4871, %v4980
        %v5034 = vadd.f32 %v4872, %v4983
        %v5035 = vadd.f32 %v4873, %v4986
        %v5036 = vadd.f32 %v4874, %v4989
        %v5037 = vadd.f32 %v4875, %v4992
        %v5038 = vadd.f32 %v4876, %v4995
        %v5039 = vadd.f32 %v4877, %v4998
        %v5040 = vadd.f32 %v4878, %v5001
        %v5041 = vadd.f32 %v4879, %v5004
        %v5042 = vadd.f32 %v4880, %v5007
        %v5043 = vadd.f32 %v4881, %v5010
        %s5044 = scalar_lea.vmem %s5, 224
        %v5045 = vld [vmem:[%s5044] sm:$0xff]
        %v5046 = vld [vmem:[%s5044 + $0x8] sm:$0xff]
        %v5047 = vld [vmem:[%s5044 + $0x10] sm:$0xff]
        %v5048 = vld [vmem:[%s5044 + $0x18] sm:$0xff]
        %v5049 = vsel %vm3359, %v3534, 0
        %v5051 = vsel %vm3359, %v3535, 0
        %5053 = vmatpush.msra.mxu0 0.0
        %5054 = vmatpush.msra.mxu0 0.0
        %5055 = vmatpush.msra.mxu0 0.0
        %5056 = vmatpush.msra.mxu0 0.0
        %5057 = vmatpush.msra.mxu0 0.0
        %5058 = vmatpush.msra.mxu0 0.0
        %5059 = vmatpush.msra.mxu0 0.0
        %5060 = vmatpush.msra.mxu0 0.0
        %5061 = vmatpush.msra.mxu0 0.0
        %5062 = vmatpush.msra.mxu0 0.0
        %5063 = vmatpush.msra.mxu0 0.0
        %5064 = vmatpush.msra.mxu0 0.0
        %5065 = vmatpush.msra.mxu0 %v5048
        %5066 = vmatpush.msra.mxu0 %v5047
        %5067 = vmatpush.msra.mxu0 %v5046
        %5068 = vmatpush.msra.mxu0 %v5045
        %5069 = vmatmul.f32.gmra.mxu0 %v3895
        %v5070 = vpop.f32.mrf.mxu0
        %v5071 = vadd.f32 0.0, %v5070
        %5072 = vmatmul.f32.gmra.mxu0 %v3897
        %v5073 = vpop.f32.mrf.mxu0
        %v5074 = vadd.f32 0.0, %v5073
        %5075 = vmatmul.f32.gmra.mxu0 %v3899
        %v5076 = vpop.f32.mrf.mxu0
        %v5077 = vadd.f32 0.0, %v5076
        %5078 = vmatmul.f32.gmra.mxu0 %v3901
        %v5079 = vpop.f32.mrf.mxu0
        %v5080 = vadd.f32 0.0, %v5079
        %5081 = vmatmul.f32.gmra.mxu0 %v3903
        %v5082 = vpop.f32.mrf.mxu0
        %v5083 = vadd.f32 0.0, %v5082
        %5084 = vmatmul.f32.gmra.mxu0 %v3905
        %v5085 = vpop.f32.mrf.mxu0
        %v5086 = vadd.f32 0.0, %v5085
        %5087 = vmatmul.f32.gmra.mxu0 %v3907
        %v5088 = vpop.f32.mrf.mxu0
        %v5089 = vadd.f32 0.0, %v5088
        %5090 = vmatmul.f32.gmra.mxu0 %v3909
        %v5091 = vpop.f32.mrf.mxu0
        %v5092 = vadd.f32 0.0, %v5091
        %5093 = vmatmul.f32.gmra.mxu0 %v3911
        %v5094 = vpop.f32.mrf.mxu0
        %v5095 = vadd.f32 0.0, %v5094
        %5096 = vmatmul.f32.gmra.mxu0 %v3913
        %v5097 = vpop.f32.mrf.mxu0
        %v5098 = vadd.f32 0.0, %v5097
        %5099 = vmatmul.f32.gmra.mxu0 %v3915
        %v5100 = vpop.f32.mrf.mxu0
        %v5101 = vadd.f32 0.0, %v5100
        %5102 = vmatmul.f32.gmra.mxu0 %v3917
        %v5103 = vpop.f32.mrf.mxu0
        %v5104 = vadd.f32 0.0, %v5103
        %5105 = vmatmul.f32.gmra.mxu0 %v3919
        %v5106 = vpop.f32.mrf.mxu0
        %v5107 = vadd.f32 0.0, %v5106
        %5108 = vmatmul.f32.gmra.mxu0 %v3921
        %v5109 = vpop.f32.mrf.mxu0
        %v5110 = vadd.f32 0.0, %v5109
        %5111 = vmatmul.f32.gmra.mxu0 %v3923
        %v5112 = vpop.f32.mrf.mxu0
        %v5113 = vadd.f32 0.0, %v5112
        %5114 = vmatmul.f32.gmra.mxu0 %v3925
        %v5115 = vpop.f32.mrf.mxu0
        %v5116 = vadd.f32 0.0, %v5115
        %5117 = vmatmul.f32.gmra.mxu0 %v3927
        %v5118 = vpop.f32.mrf.mxu0
        %v5119 = vadd.f32 0.0, %v5118
        %5120 = vmatmul.f32.gmra.mxu0 %v3929
        %v5121 = vpop.f32.mrf.mxu0
        %v5122 = vadd.f32 0.0, %v5121
        %5123 = vmatmul.f32.gmra.mxu0 %v3931
        %v5124 = vpop.f32.mrf.mxu0
        %v5125 = vadd.f32 0.0, %v5124
        %5126 = vmatmul.f32.gmra.mxu0 %v3933
        %v5127 = vpop.f32.mrf.mxu0
        %v5128 = vadd.f32 0.0, %v5127
        %5129 = vmatmul.f32.gmra.mxu0 %v3935
        %v5130 = vpop.f32.mrf.mxu0
        %v5131 = vadd.f32 0.0, %v5130
        %5132 = vmatmul.f32.gmra.mxu0 %v3937
        %v5133 = vpop.f32.mrf.mxu0
        %v5134 = vadd.f32 0.0, %v5133
        %5135 = vmatmul.f32.gmra.mxu0 %v3939
        %v5136 = vpop.f32.mrf.mxu0
        %v5137 = vadd.f32 0.0, %v5136
        %5138 = vmatmul.f32.gmra.mxu0 %v3941
        %v5139 = vpop.f32.mrf.mxu0
        %v5140 = vadd.f32 0.0, %v5139
        %5141 = vmatmul.f32.gmra.mxu0 %v3943
        %v5142 = vpop.f32.mrf.mxu0
        %v5143 = vadd.f32 0.0, %v5142
        %5144 = vmatmul.f32.gmra.mxu0 %v3945
        %v5145 = vpop.f32.mrf.mxu0
        %v5146 = vadd.f32 0.0, %v5145
        %5147 = vmatmul.f32.gmra.mxu0 %v3947
        %v5148 = vpop.f32.mrf.mxu0
        %v5149 = vadd.f32 0.0, %v5148
        %5150 = vmatmul.f32.gmra.mxu0 %v3949
        %v5151 = vpop.f32.mrf.mxu0
        %v5152 = vadd.f32 0.0, %v5151
        %5153 = vmatmul.f32.gmra.mxu0 %v4573
        %v5154 = vpop.f32.mrf.mxu0
        %v5155 = vadd.f32 0.0, %v5154
        %5156 = vmatmul.f32.gmra.mxu0 %v4575
        %v5157 = vpop.f32.mrf.mxu0
        %v5158 = vadd.f32 0.0, %v5157
        %5159 = vmatmul.f32.gmra.mxu0 %v5049
        %v5160 = vpop.f32.mrf.mxu0
        %v5161 = vadd.f32 0.0, %v5160
        %5162 = vmatmul.f32.gmra.mxu0 %v5051
        %v5163 = vpop.f32.mrf.mxu0
        %v5164 = vadd.f32 0.0, %v5163
        %5165 = vdwg.mxu0
        %v5166 = vadd.f32 %v5012, %v5071
        %v5167 = vadd.f32 %v5013, %v5074
        %v5168 = vadd.f32 %v5014, %v5077
        %v5169 = vadd.f32 %v5015, %v5080
        %v5170 = vadd.f32 %v5016, %v5083
        %v5171 = vadd.f32 %v5017, %v5086
        %v5172 = vadd.f32 %v5018, %v5089
        %v5173 = vadd.f32 %v5019, %v5092
        %v5174 = vadd.f32 %v5020, %v5095
        %v5175 = vadd.f32 %v5021, %v5098
        %v5176 = vadd.f32 %v5022, %v5101
        %v5177 = vadd.f32 %v5023, %v5104
        %v5178 = vadd.f32 %v5024, %v5107
        %v5179 = vadd.f32 %v5025, %v5110
        %v5180 = vadd.f32 %v5026, %v5113
        %v5181 = vadd.f32 %v5027, %v5116
        %v5182 = vadd.f32 %v5028, %v5119
        %v5183 = vadd.f32 %v5029, %v5122
        %v5184 = vadd.f32 %v5030, %v5125
        %v5185 = vadd.f32 %v5031, %v5128
        %v5186 = vadd.f32 %v5032, %v5131
        %v5187 = vadd.f32 %v5033, %v5134
        %v5188 = vadd.f32 %v5034, %v5137
        %v5189 = vadd.f32 %v5035, %v5140
        %v5190 = vadd.f32 %v5036, %v5143
        %v5191 = vadd.f32 %v5037, %v5146
        %v5192 = vadd.f32 %v5038, %v5149
        %v5193 = vadd.f32 %v5039, %v5152
        %v5194 = vadd.f32 %v5040, %v5155
        %v5195 = vadd.f32 %v5041, %v5158
        %v5196 = vadd.f32 %v5042, %v5161
        %v5197 = vadd.f32 %v5043, %v5164
        %v5199 = vrot.slane %v3534, 1
        %v5200 = vrot.slane %v3535, 1
        %v5201 = vsel %vm2094, %v5199, %v5200
        %v5202 = vrot.slane %v3536, 1
        %v5203 = vsel %vm2094, %v5200, %v5202
        %s5204 = scalar_lea.vmem %s5, 256
        %v5205 = vld [vmem:[%s5204] sm:$0xff]
        %v5206 = vld [vmem:[%s5204 + $0x8] sm:$0xff]
        %v5207 = vld [vmem:[%s5204 + $0x10] sm:$0xff]
        %v5208 = vld [vmem:[%s5204 + $0x18] sm:$0xff]
        %v5209 = vsel %vm3359, %v5201, 0
        %v5211 = vsel %vm3359, %v5203, 0
        %5213 = vmatpush.msra.mxu0 0.0
        %5214 = vmatpush.msra.mxu0 0.0
        %5215 = vmatpush.msra.mxu0 0.0
        %5216 = vmatpush.msra.mxu0 0.0
        %5217 = vmatpush.msra.mxu0 0.0
        %5218 = vmatpush.msra.mxu0 0.0
        %5219 = vmatpush.msra.mxu0 0.0
        %5220 = vmatpush.msra.mxu0 0.0
        %5221 = vmatpush.msra.mxu0 0.0
        %5222 = vmatpush.msra.mxu0 0.0
        %5223 = vmatpush.msra.mxu0 0.0
        %5224 = vmatpush.msra.mxu0 0.0
        %5225 = vmatpush.msra.mxu0 %v5208
        %5226 = vmatpush.msra.mxu0 %v5207
        %5227 = vmatpush.msra.mxu0 %v5206
        %5228 = vmatpush.msra.mxu0 %v5205
        %5229 = vmatmul.f32.gmra.mxu0 %v4205
        %v5230 = vpop.f32.mrf.mxu0
        %v5231 = vadd.f32 0.0, %v5230
        %5232 = vmatmul.f32.gmra.mxu0 %v4207
        %v5233 = vpop.f32.mrf.mxu0
        %v5234 = vadd.f32 0.0, %v5233
        %5235 = vmatmul.f32.gmra.mxu0 %v4209
        %v5236 = vpop.f32.mrf.mxu0
        %v5237 = vadd.f32 0.0, %v5236
        %5238 = vmatmul.f32.gmra.mxu0 %v4211
        %v5239 = vpop.f32.mrf.mxu0
        %v5240 = vadd.f32 0.0, %v5239
        %5241 = vmatmul.f32.gmra.mxu0 %v4213
        %v5242 = vpop.f32.mrf.mxu0
        %v5243 = vadd.f32 0.0, %v5242
        %5244 = vmatmul.f32.gmra.mxu0 %v4215
        %v5245 = vpop.f32.mrf.mxu0
        %v5246 = vadd.f32 0.0, %v5245
        %5247 = vmatmul.f32.gmra.mxu0 %v4217
        %v5248 = vpop.f32.mrf.mxu0
        %v5249 = vadd.f32 0.0, %v5248
        %5250 = vmatmul.f32.gmra.mxu0 %v4219
        %v5251 = vpop.f32.mrf.mxu0
        %v5252 = vadd.f32 0.0, %v5251
        %5253 = vmatmul.f32.gmra.mxu0 %v4221
        %v5254 = vpop.f32.mrf.mxu0
        %v5255 = vadd.f32 0.0, %v5254
        %5256 = vmatmul.f32.gmra.mxu0 %v4223
        %v5257 = vpop.f32.mrf.mxu0
        %v5258 = vadd.f32 0.0, %v5257
        %5259 = vmatmul.f32.gmra.mxu0 %v4225
        %v5260 = vpop.f32.mrf.mxu0
        %v5261 = vadd.f32 0.0, %v5260
        %5262 = vmatmul.f32.gmra.mxu0 %v4227
        %v5263 = vpop.f32.mrf.mxu0
        %v5264 = vadd.f32 0.0, %v5263
        %5265 = vmatmul.f32.gmra.mxu0 %v4229
        %v5266 = vpop.f32.mrf.mxu0
        %v5267 = vadd.f32 0.0, %v5266
        %5268 = vmatmul.f32.gmra.mxu0 %v4231
        %v5269 = vpop.f32.mrf.mxu0
        %v5270 = vadd.f32 0.0, %v5269
        %5271 = vmatmul.f32.gmra.mxu0 %v4233
        %v5272 = vpop.f32.mrf.mxu0
        %v5273 = vadd.f32 0.0, %v5272
        %5274 = vmatmul.f32.gmra.mxu0 %v4235
        %v5275 = vpop.f32.mrf.mxu0
        %v5276 = vadd.f32 0.0, %v5275
        %5277 = vmatmul.f32.gmra.mxu0 %v4237
        %v5278 = vpop.f32.mrf.mxu0
        %v5279 = vadd.f32 0.0, %v5278
        %5280 = vmatmul.f32.gmra.mxu0 %v4239
        %v5281 = vpop.f32.mrf.mxu0
        %v5282 = vadd.f32 0.0, %v5281
        %5283 = vmatmul.f32.gmra.mxu0 %v4241
        %v5284 = vpop.f32.mrf.mxu0
        %v5285 = vadd.f32 0.0, %v5284
        %5286 = vmatmul.f32.gmra.mxu0 %v4243
        %v5287 = vpop.f32.mrf.mxu0
        %v5288 = vadd.f32 0.0, %v5287
        %5289 = vmatmul.f32.gmra.mxu0 %v4245
        %v5290 = vpop.f32.mrf.mxu0
        %v5291 = vadd.f32 0.0, %v5290
        %5292 = vmatmul.f32.gmra.mxu0 %v4247
        %v5293 = vpop.f32.mrf.mxu0
        %v5294 = vadd.f32 0.0, %v5293
        %5295 = vmatmul.f32.gmra.mxu0 %v4249
        %v5296 = vpop.f32.mrf.mxu0
        %v5297 = vadd.f32 0.0, %v5296
        %5298 = vmatmul.f32.gmra.mxu0 %v4251
        %v5299 = vpop.f32.mrf.mxu0
        %v5300 = vadd.f32 0.0, %v5299
        %5301 = vmatmul.f32.gmra.mxu0 %v4253
        %v5302 = vpop.f32.mrf.mxu0
        %v5303 = vadd.f32 0.0, %v5302
        %5304 = vmatmul.f32.gmra.mxu0 %v4255
        %v5305 = vpop.f32.mrf.mxu0
        %v5306 = vadd.f32 0.0, %v5305
        %5307 = vmatmul.f32.gmra.mxu0 %v4257
        %v5308 = vpop.f32.mrf.mxu0
        %v5309 = vadd.f32 0.0, %v5308
        %5310 = vmatmul.f32.gmra.mxu0 %v4259
        %v5311 = vpop.f32.mrf.mxu0
        %v5312 = vadd.f32 0.0, %v5311
        %5313 = vmatmul.f32.gmra.mxu0 %v4733
        %v5314 = vpop.f32.mrf.mxu0
        %v5315 = vadd.f32 0.0, %v5314
        %5316 = vmatmul.f32.gmra.mxu0 %v4735
        %v5317 = vpop.f32.mrf.mxu0
        %v5318 = vadd.f32 0.0, %v5317
        %5319 = vmatmul.f32.gmra.mxu0 %v5209
        %v5320 = vpop.f32.mrf.mxu0
        %v5321 = vadd.f32 0.0, %v5320
        %5322 = vmatmul.f32.gmra.mxu0 %v5211
        %v5323 = vpop.f32.mrf.mxu0
        %v5324 = vadd.f32 0.0, %v5323
        %5325 = vdwg.mxu0
        %v5326 = vadd.f32 %v5166, %v5231
        %v5327 = vadd.f32 %v5167, %v5234
        %v5328 = vadd.f32 %v5168, %v5237
        %v5329 = vadd.f32 %v5169, %v5240
        %v5330 = vadd.f32 %v5170, %v5243
        %v5331 = vadd.f32 %v5171, %v5246
        %v5332 = vadd.f32 %v5172, %v5249
        %v5333 = vadd.f32 %v5173, %v5252
        %v5334 = vadd.f32 %v5174, %v5255
        %v5335 = vadd.f32 %v5175, %v5258
        %v5336 = vadd.f32 %v5176, %v5261
        %v5337 = vadd.f32 %v5177, %v5264
        %v5338 = vadd.f32 %v5178, %v5267
        %v5339 = vadd.f32 %v5179, %v5270
        %v5340 = vadd.f32 %v5180, %v5273
        %v5341 = vadd.f32 %v5181, %v5276
        %v5342 = vadd.f32 %v5182, %v5279
        %v5343 = vadd.f32 %v5183, %v5282
        %v5344 = vadd.f32 %v5184, %v5285
        %v5345 = vadd.f32 %v5185, %v5288
        %v5346 = vadd.f32 %v5186, %v5291
        %v5347 = vadd.f32 %v5187, %v5294
        %v5348 = vadd.f32 %v5188, %v5297
        %v5349 = vadd.f32 %v5189, %v5300
        %v5350 = vadd.f32 %v5190, %v5303
        %v5351 = vadd.f32 %v5191, %v5306
        %v5352 = vadd.f32 %v5192, %v5309
        %v5353 = vadd.f32 %v5193, %v5312
        %v5354 = vadd.f32 %v5194, %v5315
        %v5355 = vadd.f32 %v5195, %v5318
        %v5356 = vadd.f32 %v5196, %v5321
        %v5357 = vadd.f32 %v5197, %v5324
        %v5358 = vmax.f32 %v5326, 0.0
        %v5359 = vmax.f32 %v5327, 0.0
        %v5360 = vmax.f32 %v5328, 0.0
        %v5361 = vmax.f32 %v5329, 0.0
        %v5362 = vmax.f32 %v5330, 0.0
        %v5363 = vmax.f32 %v5331, 0.0
        %v5364 = vmax.f32 %v5332, 0.0
        %v5365 = vmax.f32 %v5333, 0.0
        %v5366 = vmax.f32 %v5334, 0.0
        %v5367 = vmax.f32 %v5335, 0.0
        %v5368 = vmax.f32 %v5336, 0.0
        %v5369 = vmax.f32 %v5337, 0.0
        %v5370 = vmax.f32 %v5338, 0.0
        %v5371 = vmax.f32 %v5339, 0.0
        %v5372 = vmax.f32 %v5340, 0.0
        %v5373 = vmax.f32 %v5341, 0.0
        %v5374 = vmax.f32 %v5342, 0.0
        %v5375 = vmax.f32 %v5343, 0.0
        %v5376 = vmax.f32 %v5344, 0.0
        %v5377 = vmax.f32 %v5345, 0.0
        %v5378 = vmax.f32 %v5346, 0.0
        %v5379 = vmax.f32 %v5347, 0.0
        %v5380 = vmax.f32 %v5348, 0.0
        %v5381 = vmax.f32 %v5349, 0.0
        %v5382 = vmax.f32 %v5350, 0.0
        %v5383 = vmax.f32 %v5351, 0.0
        %v5384 = vmax.f32 %v5352, 0.0
        %v5385 = vmax.f32 %v5353, 0.0
        %v5386 = vmax.f32 %v5354, 0.0
        %v5387 = vmax.f32 %v5355, 0.0
        %v5388 = vmax.f32 %v5356, 0.0
        %v5389 = vmax.f32 %v5357, 0.0
        %v5390 = vld [vmem:[#allocation9] sm:$0x1]
        %v5392 = vperm.slane %v5390, 0
        %v5394 = vld [vmem:[%s7] sm:$0xff]
        %v5395 = vld [vmem:[%s7 + $0x8] sm:$0xff]
        %v5396 = vld [vmem:[%s7 + $0x10] sm:$0xff]
        %v5397 = vld [vmem:[%s7 + $0x18] sm:$0xff]
        %v5399 = vsel %vm3359, %v3327, 0
        %v5402 = vsel %vm3359, %v3328, 0
        %v5405 = vsel %vm3359, %v3329, 0
        %v5408 = vsel %vm3359, %v3330, 0
        %v5411 = vsel %vm3359, %v3331, 0
        %v5414 = vsel %vm3359, %v3332, 0
        %v5417 = vsel %vm3359, %v3333, 0
        %v5420 = vsel %vm3359, %v3334, 0
        %v5423 = vsel %vm3359, %v3335, 0
        %v5426 = vsel %vm3359, %v3336, 0
        %v5429 = vsel %vm3359, %v3337, 0
        %v5432 = vsel %vm3359, %v3338, 0
        %v5435 = vsel %vm3359, %v3339, 0
        %v5438 = vsel %vm3359, %v3340, 0
        %v5441 = vsel %vm3359, %v3341, 0
        %v5444 = vsel %vm3359, %v3342, 0
        %v5447 = vsel %vm3359, %v3343, 0
        %v5450 = vsel %vm3359, %v3344, 0
        %v5453 = vsel %vm3359, %v3345, 0
        %v5456 = vsel %vm3359, %v3346, 0
        %v5459 = vsel %vm3359, %v3347, 0
        %v5462 = vsel %vm3359, %v3348, 0
        %v5465 = vsel %vm3359, %v3349, 0
        %v5468 = vsel %vm3359, %v3350, 0
        %v5471 = vsel %vm3359, %v3351, 0
        %v5474 = vsel %vm3359, %v3352, 0
        %v5477 = vsel %vm3359, %v3353, 0
        %v5480 = vsel %vm3359, %v3354, 0
        %v5483 = vsel %vm3359, %v3355, 0
        %v5486 = vsel %vm3359, %v3356, 0
        %v5489 = vsel %vm3359, %v3357, 0
        %v5492 = vsel %vm3359, %v3358, 0
        %5494 = vmatpush.msra.mxu0 0.0
        %5495 = vmatpush.msra.mxu0 0.0
        %5496 = vmatpush.msra.mxu0 0.0
        %5497 = vmatpush.msra.mxu0 0.0
        %5498 = vmatpush.msra.mxu0 0.0
        %5499 = vmatpush.msra.mxu0 0.0
        %5500 = vmatpush.msra.mxu0 0.0
        %5501 = vmatpush.msra.mxu0 0.0
        %5502 = vmatpush.msra.mxu0 0.0
        %5503 = vmatpush.msra.mxu0 0.0
        %5504 = vmatpush.msra.mxu0 0.0
        %5505 = vmatpush.msra.mxu0 0.0
        %5506 = vmatpush.msra.mxu0 %v5397
        %5507 = vmatpush.msra.mxu0 %v5396
        %5508 = vmatpush.msra.mxu0 %v5395
        %5509 = vmatpush.msra.mxu0 %v5394
        %5510 = vmatmul.f32.gmra.mxu0 %v5399
        %v5511 = vpop.f32.mrf.mxu0
        %v5512 = vadd.f32 0.0, %v5511
        %5513 = vmatmul.f32.gmra.mxu0 %v5402
        %v5514 = vpop.f32.mrf.mxu0
        %v5515 = vadd.f32 0.0, %v5514
        %5516 = vmatmul.f32.gmra.mxu0 %v5405
        %v5517 = vpop.f32.mrf.mxu0
        %v5518 = vadd.f32 0.0, %v5517
        %5519 = vmatmul.f32.gmra.mxu0 %v5408
        %v5520 = vpop.f32.mrf.mxu0
        %v5521 = vadd.f32 0.0, %v5520
        %5522 = vmatmul.f32.gmra.mxu0 %v5411
        %v5523 = vpop.f32.mrf.mxu0
        %v5524 = vadd.f32 0.0, %v5523
        %5525 = vmatmul.f32.gmra.mxu0 %v5414
        %v5526 = vpop.f32.mrf.mxu0
        %v5527 = vadd.f32 0.0, %v5526
        %5528 = vmatmul.f32.gmra.mxu0 %v5417
        %v5529 = vpop.f32.mrf.mxu0
        %v5530 = vadd.f32 0.0, %v5529
        %5531 = vmatmul.f32.gmra.mxu0 %v5420
        %v5532 = vpop.f32.mrf.mxu0
        %v5533 = vadd.f32 0.0, %v5532
        %5534 = vmatmul.f32.gmra.mxu0 %v5423
        %v5535 = vpop.f32.mrf.mxu0
        %v5536 = vadd.f32 0.0, %v5535
        %5537 = vmatmul.f32.gmra.mxu0 %v5426
        %v5538 = vpop.f32.mrf.mxu0
        %v5539 = vadd.f32 0.0, %v5538
        %5540 = vmatmul.f32.gmra.mxu0 %v5429
        %v5541 = vpop.f32.mrf.mxu0
        %v5542 = vadd.f32 0.0, %v5541
        %5543 = vmatmul.f32.gmra.mxu0 %v5432
        %v5544 = vpop.f32.mrf.mxu0
        %v5545 = vadd.f32 0.0, %v5544
        %5546 = vmatmul.f32.gmra.mxu0 %v5435
        %v5547 = vpop.f32.mrf.mxu0
        %v5548 = vadd.f32 0.0, %v5547
        %5549 = vmatmul.f32.gmra.mxu0 %v5438
        %v5550 = vpop.f32.mrf.mxu0
        %v5551 = vadd.f32 0.0, %v5550
        %5552 = vmatmul.f32.gmra.mxu0 %v5441
        %v5553 = vpop.f32.mrf.mxu0
        %v5554 = vadd.f32 0.0, %v5553
        %5555 = vmatmul.f32.gmra.mxu0 %v5444
        %v5556 = vpop.f32.mrf.mxu0
        %v5557 = vadd.f32 0.0, %v5556
        %5558 = vmatmul.f32.gmra.mxu0 %v5447
        %v5559 = vpop.f32.mrf.mxu0
        %v5560 = vadd.f32 0.0, %v5559
        %5561 = vmatmul.f32.gmra.mxu0 %v5450
        %v5562 = vpop.f32.mrf.mxu0
        %v5563 = vadd.f32 0.0, %v5562
        %5564 = vmatmul.f32.gmra.mxu0 %v5453
        %v5565 = vpop.f32.mrf.mxu0
        %v5566 = vadd.f32 0.0, %v5565
        %5567 = vmatmul.f32.gmra.mxu0 %v5456
        %v5568 = vpop.f32.mrf.mxu0
        %v5569 = vadd.f32 0.0, %v5568
        %5570 = vmatmul.f32.gmra.mxu0 %v5459
        %v5571 = vpop.f32.mrf.mxu0
        %v5572 = vadd.f32 0.0, %v5571
        %5573 = vmatmul.f32.gmra.mxu0 %v5462
        %v5574 = vpop.f32.mrf.mxu0
        %v5575 = vadd.f32 0.0, %v5574
        %5576 = vmatmul.f32.gmra.mxu0 %v5465
        %v5577 = vpop.f32.mrf.mxu0
        %v5578 = vadd.f32 0.0, %v5577
        %5579 = vmatmul.f32.gmra.mxu0 %v5468
        %v5580 = vpop.f32.mrf.mxu0
        %v5581 = vadd.f32 0.0, %v5580
        %5582 = vmatmul.f32.gmra.mxu0 %v5471
        %v5583 = vpop.f32.mrf.mxu0
        %v5584 = vadd.f32 0.0, %v5583
        %5585 = vmatmul.f32.gmra.mxu0 %v5474
        %v5586 = vpop.f32.mrf.mxu0
        %v5587 = vadd.f32 0.0, %v5586
        %5588 = vmatmul.f32.gmra.mxu0 %v5477
        %v5589 = vpop.f32.mrf.mxu0
        %v5590 = vadd.f32 0.0, %v5589
        %5591 = vmatmul.f32.gmra.mxu0 %v5480
        %v5592 = vpop.f32.mrf.mxu0
        %v5593 = vadd.f32 0.0, %v5592
        %5594 = vmatmul.f32.gmra.mxu0 %v5483
        %v5595 = vpop.f32.mrf.mxu0
        %v5596 = vadd.f32 0.0, %v5595
        %5597 = vmatmul.f32.gmra.mxu0 %v5486
        %v5598 = vpop.f32.mrf.mxu0
        %v5599 = vadd.f32 0.0, %v5598
        %5600 = vmatmul.f32.gmra.mxu0 %v5489
        %v5601 = vpop.f32.mrf.mxu0
        %v5602 = vadd.f32 0.0, %v5601
        %5603 = vmatmul.f32.gmra.mxu0 %v5492
        %v5604 = vpop.f32.mrf.mxu0
        %v5605 = vadd.f32 0.0, %v5604
        %5606 = vdwg.mxu0
        %v5607 = vadd.f32 %v5392, %v5512
        %v5608 = vadd.f32 %v5392, %v5515
        %v5609 = vadd.f32 %v5392, %v5518
        %v5610 = vadd.f32 %v5392, %v5521
        %v5611 = vadd.f32 %v5392, %v5524
        %v5612 = vadd.f32 %v5392, %v5527
        %v5613 = vadd.f32 %v5392, %v5530
        %v5614 = vadd.f32 %v5392, %v5533
        %v5615 = vadd.f32 %v5392, %v5536
        %v5616 = vadd.f32 %v5392, %v5539
        %v5617 = vadd.f32 %v5392, %v5542
        %v5618 = vadd.f32 %v5392, %v5545
        %v5619 = vadd.f32 %v5392, %v5548
        %v5620 = vadd.f32 %v5392, %v5551
        %v5621 = vadd.f32 %v5392, %v5554
        %v5622 = vadd.f32 %v5392, %v5557
        %v5623 = vadd.f32 %v5392, %v5560
        %v5624 = vadd.f32 %v5392, %v5563
        %v5625 = vadd.f32 %v5392, %v5566
        %v5626 = vadd.f32 %v5392, %v5569
        %v5627 = vadd.f32 %v5392, %v5572
        %v5628 = vadd.f32 %v5392, %v5575
        %v5629 = vadd.f32 %v5392, %v5578
        %v5630 = vadd.f32 %v5392, %v5581
        %v5631 = vadd.f32 %v5392, %v5584
        %v5632 = vadd.f32 %v5392, %v5587
        %v5633 = vadd.f32 %v5392, %v5590
        %v5634 = vadd.f32 %v5392, %v5593
        %v5635 = vadd.f32 %v5392, %v5596
        %v5636 = vadd.f32 %v5392, %v5599
        %v5637 = vadd.f32 %v5392, %v5602
        %v5638 = vadd.f32 %v5392, %v5605
        %v5639 = vld [vmem:[%s8] sm:$0xff]
        %v5640 = vld [vmem:[%s8 + $0x8] sm:$0xff]
        %v5641 = vld [vmem:[%s8 + $0x10] sm:$0xff]
        %v5642 = vld [vmem:[%s8 + $0x18] sm:$0xff]
        %v5644 = vsel %vm3359, %v5358, 0
        %v5647 = vsel %vm3359, %v5359, 0
        %v5650 = vsel %vm3359, %v5360, 0
        %v5653 = vsel %vm3359, %v5361, 0
        %v5656 = vsel %vm3359, %v5362, 0
        %v5659 = vsel %vm3359, %v5363, 0
        %v5662 = vsel %vm3359, %v5364, 0
        %v5665 = vsel %vm3359, %v5365, 0
        %v5668 = vsel %vm3359, %v5366, 0
        %v5671 = vsel %vm3359, %v5367, 0
        %v5674 = vsel %vm3359, %v5368, 0
        %v5677 = vsel %vm3359, %v5369, 0
        %v5680 = vsel %vm3359, %v5370, 0
        %v5683 = vsel %vm3359, %v5371, 0
        %v5686 = vsel %vm3359, %v5372, 0
        %v5689 = vsel %vm3359, %v5373, 0
        %v5692 = vsel %vm3359, %v5374, 0
        %v5695 = vsel %vm3359, %v5375, 0
        %v5698 = vsel %vm3359, %v5376, 0
        %v5701 = vsel %vm3359, %v5377, 0
        %v5704 = vsel %vm3359, %v5378, 0
        %v5707 = vsel %vm3359, %v5379, 0
        %v5710 = vsel %vm3359, %v5380, 0
        %v5713 = vsel %vm3359, %v5381, 0
        %v5716 = vsel %vm3359, %v5382, 0
        %v5719 = vsel %vm3359, %v5383, 0
        %v5722 = vsel %vm3359, %v5384, 0
        %v5725 = vsel %vm3359, %v5385, 0
        %v5728 = vsel %vm3359, %v5386, 0
        %v5731 = vsel %vm3359, %v5387, 0
        %v5734 = vsel %vm3359, %v5388, 0
        %v5737 = vsel %vm3359, %v5389, 0
        %5739 = vmatpush.msra.mxu0 0.0
        %5740 = vmatpush.msra.mxu0 0.0
        %5741 = vmatpush.msra.mxu0 0.0
        %5742 = vmatpush.msra.mxu0 0.0
        %5743 = vmatpush.msra.mxu0 0.0
        %5744 = vmatpush.msra.mxu0 0.0
        %5745 = vmatpush.msra.mxu0 0.0
        %5746 = vmatpush.msra.mxu0 0.0
        %5747 = vmatpush.msra.mxu0 0.0
        %5748 = vmatpush.msra.mxu0 0.0
        %5749 = vmatpush.msra.mxu0 0.0
        %5750 = vmatpush.msra.mxu0 0.0
        %5751 = vmatpush.msra.mxu0 %v5642
        %5752 = vmatpush.msra.mxu0 %v5641
        %5753 = vmatpush.msra.mxu0 %v5640
        %5754 = vmatpush.msra.mxu0 %v5639
        %5755 = vmatmul.f32.gmra.mxu0 %v5644
        %v5756 = vpop.f32.mrf.mxu0
        %v5757 = vadd.f32 0.0, %v5756
        %5758 = vmatmul.f32.gmra.mxu0 %v5647
        %v5759 = vpop.f32.mrf.mxu0
        %v5760 = vadd.f32 0.0, %v5759
        %5761 = vmatmul.f32.gmra.mxu0 %v5650
        %v5762 = vpop.f32.mrf.mxu0
        %v5763 = vadd.f32 0.0, %v5762
        %5764 = vmatmul.f32.gmra.mxu0 %v5653
        %v5765 = vpop.f32.mrf.mxu0
        %v5766 = vadd.f32 0.0, %v5765
        %5767 = vmatmul.f32.gmra.mxu0 %v5656
        %v5768 = vpop.f32.mrf.mxu0
        %v5769 = vadd.f32 0.0, %v5768
        %5770 = vmatmul.f32.gmra.mxu0 %v5659
        %v5771 = vpop.f32.mrf.mxu0
        %v5772 = vadd.f32 0.0, %v5771
        %5773 = vmatmul.f32.gmra.mxu0 %v5662
        %v5774 = vpop.f32.mrf.mxu0
        %v5775 = vadd.f32 0.0, %v5774
        %5776 = vmatmul.f32.gmra.mxu0 %v5665
        %v5777 = vpop.f32.mrf.mxu0
        %v5778 = vadd.f32 0.0, %v5777
        %5779 = vmatmul.f32.gmra.mxu0 %v5668
        %v5780 = vpop.f32.mrf.mxu0
        %v5781 = vadd.f32 0.0, %v5780
        %5782 = vmatmul.f32.gmra.mxu0 %v5671
        %v5783 = vpop.f32.mrf.mxu0
        %v5784 = vadd.f32 0.0, %v5783
        %5785 = vmatmul.f32.gmra.mxu0 %v5674
        %v5786 = vpop.f32.mrf.mxu0
        %v5787 = vadd.f32 0.0, %v5786
        %5788 = vmatmul.f32.gmra.mxu0 %v5677
        %v5789 = vpop.f32.mrf.mxu0
        %v5790 = vadd.f32 0.0, %v5789
        %5791 = vmatmul.f32.gmra.mxu0 %v5680
        %v5792 = vpop.f32.mrf.mxu0
        %v5793 = vadd.f32 0.0, %v5792
        %5794 = vmatmul.f32.gmra.mxu0 %v5683
        %v5795 = vpop.f32.mrf.mxu0
        %v5796 = vadd.f32 0.0, %v5795
        %5797 = vmatmul.f32.gmra.mxu0 %v5686
        %v5798 = vpop.f32.mrf.mxu0
        %v5799 = vadd.f32 0.0, %v5798
        %5800 = vmatmul.f32.gmra.mxu0 %v5689
        %v5801 = vpop.f32.mrf.mxu0
        %v5802 = vadd.f32 0.0, %v5801
        %5803 = vmatmul.f32.gmra.mxu0 %v5692
        %v5804 = vpop.f32.mrf.mxu0
        %v5805 = vadd.f32 0.0, %v5804
        %5806 = vmatmul.f32.gmra.mxu0 %v5695
        %v5807 = vpop.f32.mrf.mxu0
        %v5808 = vadd.f32 0.0, %v5807
        %5809 = vmatmul.f32.gmra.mxu0 %v5698
        %v5810 = vpop.f32.mrf.mxu0
        %v5811 = vadd.f32 0.0, %v5810
        %5812 = vmatmul.f32.gmra.mxu0 %v5701
        %v5813 = vpop.f32.mrf.mxu0
        %v5814 = vadd.f32 0.0, %v5813
        %5815 = vmatmul.f32.gmra.mxu0 %v5704
        %v5816 = vpop.f32.mrf.mxu0
        %v5817 = vadd.f32 0.0, %v5816
        %5818 = vmatmul.f32.gmra.mxu0 %v5707
        %v5819 = vpop.f32.mrf.mxu0
        %v5820 = vadd.f32 0.0, %v5819
        %5821 = vmatmul.f32.gmra.mxu0 %v5710
        %v5822 = vpop.f32.mrf.mxu0
        %v5823 = vadd.f32 0.0, %v5822
        %5824 = vmatmul.f32.gmra.mxu0 %v5713
        %v5825 = vpop.f32.mrf.mxu0
        %v5826 = vadd.f32 0.0, %v5825
        %5827 = vmatmul.f32.gmra.mxu0 %v5716
        %v5828 = vpop.f32.mrf.mxu0
        %v5829 = vadd.f32 0.0, %v5828
        %5830 = vmatmul.f32.gmra.mxu0 %v5719
        %v5831 = vpop.f32.mrf.mxu0
        %v5832 = vadd.f32 0.0, %v5831
        %5833 = vmatmul.f32.gmra.mxu0 %v5722
        %v5834 = vpop.f32.mrf.mxu0
        %v5835 = vadd.f32 0.0, %v5834
        %5836 = vmatmul.f32.gmra.mxu0 %v5725
        %v5837 = vpop.f32.mrf.mxu0
        %v5838 = vadd.f32 0.0, %v5837
        %5839 = vmatmul.f32.gmra.mxu0 %v5728
        %v5840 = vpop.f32.mrf.mxu0
        %v5841 = vadd.f32 0.0, %v5840
        %5842 = vmatmul.f32.gmra.mxu0 %v5731
        %v5843 = vpop.f32.mrf.mxu0
        %v5844 = vadd.f32 0.0, %v5843
        %5845 = vmatmul.f32.gmra.mxu0 %v5734
        %v5846 = vpop.f32.mrf.mxu0
        %v5847 = vadd.f32 0.0, %v5846
        %5848 = vmatmul.f32.gmra.mxu0 %v5737
        %v5849 = vpop.f32.mrf.mxu0
        %v5850 = vadd.f32 0.0, %v5849
        %5851 = vdwg.mxu0
        %v5852 = vadd.f32 %v5607, %v5757
        %v5853 = vadd.f32 %v5608, %v5760
        %v5854 = vadd.f32 %v5609, %v5763
        %v5855 = vadd.f32 %v5610, %v5766
        %v5856 = vadd.f32 %v5611, %v5769
        %v5857 = vadd.f32 %v5612, %v5772
        %v5858 = vadd.f32 %v5613, %v5775
        %v5859 = vadd.f32 %v5614, %v5778
        %v5860 = vadd.f32 %v5615, %v5781
        %v5861 = vadd.f32 %v5616, %v5784
        %v5862 = vadd.f32 %v5617, %v5787
        %v5863 = vadd.f32 %v5618, %v5790
        %v5864 = vadd.f32 %v5619, %v5793
        %v5865 = vadd.f32 %v5620, %v5796
        %v5866 = vadd.f32 %v5621, %v5799
        %v5867 = vadd.f32 %v5622, %v5802
        %v5868 = vadd.f32 %v5623, %v5805
        %v5869 = vadd.f32 %v5624, %v5808
        %v5870 = vadd.f32 %v5625, %v5811
        %v5871 = vadd.f32 %v5626, %v5814
        %v5872 = vadd.f32 %v5627, %v5817
        %v5873 = vadd.f32 %v5628, %v5820
        %v5874 = vadd.f32 %v5629, %v5823
        %v5875 = vadd.f32 %v5630, %v5826
        %v5876 = vadd.f32 %v5631, %v5829
        %v5877 = vadd.f32 %v5632, %v5832
        %v5878 = vadd.f32 %v5633, %v5835
        %v5879 = vadd.f32 %v5634, %v5838
        %v5880 = vadd.f32 %v5635, %v5841
        %v5881 = vadd.f32 %v5636, %v5844
        %v5882 = vadd.f32 %v5637, %v5847
        %v5883 = vadd.f32 %v5638, %v5850
        %v5884 = vmax.f32 %v5852, 0.0
        %v5885 = vmax.f32 %v5853, 0.0
        %v5886 = vmax.f32 %v5854, 0.0
        %v5887 = vmax.f32 %v5855, 0.0
        %v5888 = vmax.f32 %v5856, 0.0
        %v5889 = vmax.f32 %v5857, 0.0
        %v5890 = vmax.f32 %v5858, 0.0
        %v5891 = vmax.f32 %v5859, 0.0
        %v5892 = vmax.f32 %v5860, 0.0
        %v5893 = vmax.f32 %v5861, 0.0
        %v5894 = vmax.f32 %v5862, 0.0
        %v5895 = vmax.f32 %v5863, 0.0
        %v5896 = vmax.f32 %v5864, 0.0
        %v5897 = vmax.f32 %v5865, 0.0
        %v5898 = vmax.f32 %v5866, 0.0
        %v5899 = vmax.f32 %v5867, 0.0
        %v5900 = vmax.f32 %v5868, 0.0
        %v5901 = vmax.f32 %v5869, 0.0
        %v5902 = vmax.f32 %v5870, 0.0
        %v5903 = vmax.f32 %v5871, 0.0
        %v5904 = vmax.f32 %v5872, 0.0
        %v5905 = vmax.f32 %v5873, 0.0
        %v5906 = vmax.f32 %v5874, 0.0
        %v5907 = vmax.f32 %v5875, 0.0
        %v5908 = vmax.f32 %v5876, 0.0
        %v5909 = vmax.f32 %v5877, 0.0
        %v5910 = vmax.f32 %v5878, 0.0
        %v5911 = vmax.f32 %v5879, 0.0
        %v5912 = vmax.f32 %v5880, 0.0
        %v5913 = vmax.f32 %v5881, 0.0
        %v5914 = vmax.f32 %v5882, 0.0
        %v5915 = vmax.f32 %v5883, 0.0
        %v5916 = vld [vmem:[%s10] sm:$0xff]
        %v5917 = vld [vmem:[%s10 + $0x8] sm:$0xff]
        %v5918 = vld [vmem:[%s10 + $0x10] sm:$0xff]
        %v5919 = vld [vmem:[%s10 + $0x18] sm:$0xff]
        %v5920 = vld [vmem:[#allocation10] sm:$0x1]
        %v5922 = vperm.slane %v5920, 0
        %v5925 = vsel %vm3359, %v5884, 0
        %v5928 = vsel %vm3359, %v5885, 0
        %v5931 = vsel %vm3359, %v5886, 0
        %v5934 = vsel %vm3359, %v5887, 0
        %v5937 = vsel %vm3359, %v5888, 0
        %v5940 = vsel %vm3359, %v5889, 0
        %v5943 = vsel %vm3359, %v5890, 0
        %v5946 = vsel %vm3359, %v5891, 0
        %v5949 = vsel %vm3359, %v5892, 0
        %v5952 = vsel %vm3359, %v5893, 0
        %v5955 = vsel %vm3359, %v5894, 0
        %v5958 = vsel %vm3359, %v5895, 0
        %v5961 = vsel %vm3359, %v5896, 0
        %v5964 = vsel %vm3359, %v5897, 0
        %v5967 = vsel %vm3359, %v5898, 0
        %v5970 = vsel %vm3359, %v5899, 0
        %v5973 = vsel %vm3359, %v5900, 0
        %v5976 = vsel %vm3359, %v5901, 0
        %v5979 = vsel %vm3359, %v5902, 0
        %v5982 = vsel %vm3359, %v5903, 0
        %v5985 = vsel %vm3359, %v5904, 0
        %v5988 = vsel %vm3359, %v5905, 0
        %v5991 = vsel %vm3359, %v5906, 0
        %v5994 = vsel %vm3359, %v5907, 0
        %v5997 = vsel %vm3359, %v5908, 0
        %v6000 = vsel %vm3359, %v5909, 0
        %v6003 = vsel %vm3359, %v5910, 0
        %v6006 = vsel %vm3359, %v5911, 0
        %v6009 = vsel %vm3359, %v5912, 0
        %v6012 = vsel %vm3359, %v5913, 0
        %v6015 = vsel %vm3359, %v5914, 0
        %v6018 = vsel %vm3359, %v5915, 0
        %6020 = vmatpush.msra.mxu0 0.0
        %6021 = vmatpush.msra.mxu0 0.0
        %6022 = vmatpush.msra.mxu0 0.0
        %6023 = vmatpush.msra.mxu0 0.0
        %6024 = vmatpush.msra.mxu0 0.0
        %6025 = vmatpush.msra.mxu0 0.0
        %6026 = vmatpush.msra.mxu0 0.0
        %6027 = vmatpush.msra.mxu0 0.0
        %6028 = vmatpush.msra.mxu0 0.0
        %6029 = vmatpush.msra.mxu0 0.0
        %6030 = vmatpush.msra.mxu0 0.0
        %6031 = vmatpush.msra.mxu0 0.0
        %6032 = vmatpush.msra.mxu0 %v5919
        %6033 = vmatpush.msra.mxu0 %v5918
        %6034 = vmatpush.msra.mxu0 %v5917
        %6035 = vmatpush.msra.mxu0 %v5916
        %6036 = vmatmul.f32.gmra.mxu0 %v5925
        %v6037 = vpop.f32.mrf.mxu0
        %v6038 = vadd.f32 %v5922, %v6037
        %6039 = vmatmul.f32.gmra.mxu0 %v5928
        %v6040 = vpop.f32.mrf.mxu0
        %v6041 = vadd.f32 %v5922, %v6040
        %6042 = vmatmul.f32.gmra.mxu0 %v5931
        %v6043 = vpop.f32.mrf.mxu0
        %v6044 = vadd.f32 %v5922, %v6043
        %6045 = vmatmul.f32.gmra.mxu0 %v5934
        %v6046 = vpop.f32.mrf.mxu0
        %v6047 = vadd.f32 %v5922, %v6046
        %6048 = vmatmul.f32.gmra.mxu0 %v5937
        %v6049 = vpop.f32.mrf.mxu0
        %v6050 = vadd.f32 %v5922, %v6049
        %6051 = vmatmul.f32.gmra.mxu0 %v5940
        %v6052 = vpop.f32.mrf.mxu0
        %v6053 = vadd.f32 %v5922, %v6052
        %6054 = vmatmul.f32.gmra.mxu0 %v5943
        %v6055 = vpop.f32.mrf.mxu0
        %v6056 = vadd.f32 %v5922, %v6055
        %6057 = vmatmul.f32.gmra.mxu0 %v5946
        %v6058 = vpop.f32.mrf.mxu0
        %v6059 = vadd.f32 %v5922, %v6058
        %6060 = vmatmul.f32.gmra.mxu0 %v5949
        %v6061 = vpop.f32.mrf.mxu0
        %v6062 = vadd.f32 %v5922, %v6061
        %6063 = vmatmul.f32.gmra.mxu0 %v5952
        %v6064 = vpop.f32.mrf.mxu0
        %v6065 = vadd.f32 %v5922, %v6064
        %6066 = vmatmul.f32.gmra.mxu0 %v5955
        %v6067 = vpop.f32.mrf.mxu0
        %v6068 = vadd.f32 %v5922, %v6067
        %6069 = vmatmul.f32.gmra.mxu0 %v5958
        %v6070 = vpop.f32.mrf.mxu0
        %v6071 = vadd.f32 %v5922, %v6070
        %6072 = vmatmul.f32.gmra.mxu0 %v5961
        %v6073 = vpop.f32.mrf.mxu0
        %v6074 = vadd.f32 %v5922, %v6073
        %6075 = vmatmul.f32.gmra.mxu0 %v5964
        %v6076 = vpop.f32.mrf.mxu0
        %v6077 = vadd.f32 %v5922, %v6076
        %6078 = vmatmul.f32.gmra.mxu0 %v5967
        %v6079 = vpop.f32.mrf.mxu0
        %v6080 = vadd.f32 %v5922, %v6079
        %6081 = vmatmul.f32.gmra.mxu0 %v5970
        %v6082 = vpop.f32.mrf.mxu0
        %v6083 = vadd.f32 %v5922, %v6082
        %6084 = vmatmul.f32.gmra.mxu0 %v5973
        %v6085 = vpop.f32.mrf.mxu0
        %v6086 = vadd.f32 %v5922, %v6085
        %6087 = vmatmul.f32.gmra.mxu0 %v5976
        %v6088 = vpop.f32.mrf.mxu0
        %v6089 = vadd.f32 %v5922, %v6088
        %6090 = vmatmul.f32.gmra.mxu0 %v5979
        %v6091 = vpop.f32.mrf.mxu0
        %v6092 = vadd.f32 %v5922, %v6091
        %6093 = vmatmul.f32.gmra.mxu0 %v5982
        %v6094 = vpop.f32.mrf.mxu0
        %v6095 = vadd.f32 %v5922, %v6094
        %6096 = vmatmul.f32.gmra.mxu0 %v5985
        %v6097 = vpop.f32.mrf.mxu0
        %v6098 = vadd.f32 %v5922, %v6097
        %6099 = vmatmul.f32.gmra.mxu0 %v5988
        %v6100 = vpop.f32.mrf.mxu0
        %v6101 = vadd.f32 %v5922, %v6100
        %6102 = vmatmul.f32.gmra.mxu0 %v5991
        %v6103 = vpop.f32.mrf.mxu0
        %v6104 = vadd.f32 %v5922, %v6103
        %6105 = vmatmul.f32.gmra.mxu0 %v5994
        %v6106 = vpop.f32.mrf.mxu0
        %v6107 = vadd.f32 %v5922, %v6106
        %6108 = vmatmul.f32.gmra.mxu0 %v5997
        %v6109 = vpop.f32.mrf.mxu0
        %v6110 = vadd.f32 %v5922, %v6109
        %6111 = vmatmul.f32.gmra.mxu0 %v6000
        %v6112 = vpop.f32.mrf.mxu0
        %v6113 = vadd.f32 %v5922, %v6112
        %6114 = vmatmul.f32.gmra.mxu0 %v6003
        %v6115 = vpop.f32.mrf.mxu0
        %v6116 = vadd.f32 %v5922, %v6115
        %6117 = vmatmul.f32.gmra.mxu0 %v6006
        %v6118 = vpop.f32.mrf.mxu0
        %v6119 = vadd.f32 %v5922, %v6118
        %6120 = vmatmul.f32.gmra.mxu0 %v6009
        %v6121 = vpop.f32.mrf.mxu0
        %v6122 = vadd.f32 %v5922, %v6121
        %6123 = vmatmul.f32.gmra.mxu0 %v6012
        %v6124 = vpop.f32.mrf.mxu0
        %v6125 = vadd.f32 %v5922, %v6124
        %6126 = vmatmul.f32.gmra.mxu0 %v6015
        %v6127 = vpop.f32.mrf.mxu0
        %v6128 = vadd.f32 %v5922, %v6127
        %6129 = vmatmul.f32.gmra.mxu0 %v6018
        %v6130 = vpop.f32.mrf.mxu0
        %v6131 = vadd.f32 %v5922, %v6130
        %6132 = vdwg.mxu0
        %6133 = vst [vmem:[%s465] sm:$0xff] %v6038
        %6134 = vst [vmem:[%s465 + $0x8] sm:$0xff] %v6041
        %6135 = vst [vmem:[%s465 + $0x10] sm:$0xff] %v6044
        %6136 = vst [vmem:[%s465 + $0x18] sm:$0xff] %v6047
        %6137 = vst [vmem:[%s465 + $0x20] sm:$0xff] %v6050
        %6138 = vst [vmem:[%s465 + $0x28] sm:$0xff] %v6053
        %6139 = vst [vmem:[%s465 + $0x30] sm:$0xff] %v6056
        %6140 = vst [vmem:[%s465 + $0x38] sm:$0xff] %v6059
        %6141 = vst [vmem:[%s465 + $0x40] sm:$0xff] %v6062
        %6142 = vst [vmem:[%s465 + $0x48] sm:$0xff] %v6065
        %6143 = vst [vmem:[%s465 + $0x50] sm:$0xff] %v6068
        %6144 = vst [vmem:[%s465 + $0x58] sm:$0xff] %v6071
        %6145 = vst [vmem:[%s465 + $0x60] sm:$0xff] %v6074
        %6146 = vst [vmem:[%s465 + $0x68] sm:$0xff] %v6077
        %6147 = vst [vmem:[%s465 + $0x70] sm:$0xff] %v6080
        %6148 = vst [vmem:[%s465 + $0x78] sm:$0xff] %v6083
        %6149 = vst [vmem:[%s465 + $0x80] sm:$0xff] %v6086
        %6150 = vst [vmem:[%s465 + $0x88] sm:$0xff] %v6089
        %6151 = vst [vmem:[%s465 + $0x90] sm:$0xff] %v6092
        %6152 = vst [vmem:[%s465 + $0x98] sm:$0xff] %v6095
        %6153 = vst [vmem:[%s465 + $0xa0] sm:$0xff] %v6098
        %6154 = vst [vmem:[%s465 + $0xa8] sm:$0xff] %v6101
        %6155 = vst [vmem:[%s465 + $0xb0] sm:$0xff] %v6104
        %6156 = vst [vmem:[%s465 + $0xb8] sm:$0xff] %v6107
        %6157 = vst [vmem:[%s465 + $0xc0] sm:$0xff] %v6110
        %6158 = vst [vmem:[%s465 + $0xc8] sm:$0xff] %v6113
        %6159 = vst [vmem:[%s465 + $0xd0] sm:$0xff] %v6116
        %6160 = vst [vmem:[%s465 + $0xd8] sm:$0xff] %v6119
        %6161 = vst [vmem:[%s465 + $0xe0] sm:$0xff] %v6122
        %6162 = vst [vmem:[%s465 + $0xe8] sm:$0xff] %v6125
        %6163 = vst [vmem:[%s465 + $0xf0] sm:$0xff] %v6128
        %6164 = vst [vmem:[%s465 + $0xf8] sm:$0xff] %v6131
        %s6165 = sand.u32 %s294, 1
        %s6166 = scalar_lea.sflag [#allocation6], %s6165
        %s6167 = sand.u32 %s294, 1
        %s6168 = smul.addr %s6167, 256
        %s6169 = scalar_lea.vmem [#allocation12], %s6168
        // Predicated region
        $region85: #{tpu_custom_call.1} parent=67 // pred_check
          %p6170 = pneg %p304
        $region86: #{tpu_custom_call.1} parent=67 // pred_check_branch
          %6172 = sbr.rel (%p6170) target = $region88
        $region87: #{tpu_custom_call.1} parent=67 // pred_region
          %6174 = vsyncadd %s6166, 0
          %s6175 = smul.addr %s29, 32
          %s6176 = smul.addr %s6175, 8
          %s6177 = scalar_lea.hbm %s12, %s6176
          %s6178 = sshll.u32 %s6169, 4
          %s6179 = int_to_ptr.vmem [resolvable:$true] %s6178
          %s6180 = sshll.u32 %s6177, 4
          %s6181 = int_to_ptr.hbm [resolvable:$true] %s6180
          %6186 = dma.vmem_to_hbm [thread:$0]  %s6179, 4096, %s6181, %s6166, 128, 128, 8
        $region88: #{tpu_custom_call.1} parent=67 // pred_fallthru
          _
      $region68: #{tpu_custom_call.1} parent=5 // pred_fallthru
        _
      %p6187 = scmp.le.s32.totalorder 2, %s24
      // Predicated region
      $region89: #{tpu_custom_call.1} parent=5 // pred_check
        %p6188 = pneg %p6187
      $region90: #{tpu_custom_call.1} parent=5 // pred_check_branch
        %6190 = sbr.rel (%p6188) target = $region92
      $region91: #{tpu_custom_call.1} parent=5 // pred_region
        %s6191 = ssub.s32 %s24, 2
        // Predicated region
        $region93: #{tpu_custom_call.1} parent=91 // pred_check
          %p6192 = pneg %p310
        $region94: #{tpu_custom_call.1} parent=91 // pred_check_branch
          %6194 = sbr.rel (%p6192) target = $region96
        $region95: #{tpu_custom_call.1} parent=91 // pred_region
          %s6195 = sand.u32 %s295, 1
          %s6196 = scalar_lea.sflag [#allocation6], %s6195
          %s6197 = sand.u32 %s295, 1
          %s6198 = smul.addr %s6197, 256
          %s6199 = scalar_lea.vmem [#allocation12], %s6198
          %6201 = dma.done %s6196, 4096
        $region96: #{tpu_custom_call.1} parent=91 // pred_fallthru
          _
      $region92: #{tpu_custom_call.1} parent=5 // pred_fallthru
        _
    $region6: #{tpu_custom_call.1} parent=1 // loop_footer
      %s28 = sadd.s32 1, %s24
    $region7: #{tpu_custom_call.1} parent=1 // loop_footer_branch
      %23 = sbr.rel target = $region3
    $region8: #{tpu_custom_call.1} parent=1 // loop_exit
      _
    %6202 = vsyncpa [#allocation5], 1
    %s6203 = scalar_lea.sflag [#allocation5], 1
    %6204 = vsyncpa %s6203, 1
    %6205 = vsyncpa [#allocation8], 1
    %6206 = vsyncpa [#allocation11], 1
    %6207 = vsyncpa [#allocation6], 1
    %s6208 = scalar_lea.sflag [#allocation6], 1
    %6209 = vsyncpa %s6208, 1

</llo_original>
